<compile_context>
chip_gen: v5e
topology: v5e:2x2
jax: 0.10.0
libtpu: 0.0.40
codegen_flags: <defaults>
</compile_context>

<pallas_src>
import numpy as np
import jax
import jax.numpy as jnp
from jax.experimental import pallas as pl
from jax.experimental.pallas import tpu as pltpu

SUB = 8      # sublane multiple
LANE = 128   # lane multiple


def _ru(x, m):
    return ((x + m - 1) // m) * m


# ------------------------------ per-level fused kernel ------------------------------
def _make_level_kernel(c1, c2, H_a, with_pool):
    c1 = float(c1)
    c2 = float(c2)

    def _recip(x):
        # EUP approximate reciprocal + one Newton step -> ~f32 accuracy,
        # keeps the VALU free of multi-op divide sequences.
        r = pl.reciprocal(x, approx=True)
        return r * (2.0 - x * r)

    def _ssim_and_prods(x1_ref, x2_ref, kh_ref, kw_ref, bmap_ref, mask_ref,
                        ssim_ref, mcs_ref):
        a1 = x1_ref[0]                    # centered plane 1, (H_a, W_a)
        a2 = x2_ref[0]
        kh = kh_ref[...]                  # (Ho_a, H_a)  vertical Toeplitz
        kw = kw_ref[...]                  # (W_a, Wo_a)  horizontal Toeplitz
        bmap = bmap_ref[...]              # (Ho_a, Wo_a) exact blur of all-ones
        mask = mask_ref[...]              # (Ho_a, Wo_a) valid-output mask (load-bearing!)

        # Chroma planes are stored without their +128 offset; reconstruct it.
        # Plane order is (n, channel) with channel fastest -> channel = b % 3.
        chan = pl.program_id(0) % 3
        c = jnp.where(chan == 0, 0.0, 128.0).astype(jnp.float32)

        # Batched horizontal blur: 5 products stacked along the sublane (M)
        # axis -> one large-M matmul against the shared Toeplitz weight kw.
        prods = jnp.concatenate([a1, a2, a1 * a1, a2 * a2, a1 * a2], axis=0)
        t = jnp.dot(prods, kw, preferred_element_type=jnp.float32)   # (5*H_a, Wo_a)
        # Vertical blur (RHS is per-plane data, so no cross-product weight reuse).
        blur = [jnp.dot(kh, t[i * H_a:(i + 1) * H_a],
                        preferred_element_type=jnp.float32) for i in range(5)]
        t1, t2, q11, q22, q12 = blur

        # Exact reconstruction of the reference statistics of x = b + c under a
        # zero-padded convolution (bmap is the blur of an all-ones image):
        #   mu      = blur(b) + c*B
        #   sigma^2 = blur(b^2) - blur(b)^2 + 2c*blur(b)*(1-B) + c^2*B*(1-B)
        # Algebraically identical to E[x^2]-mu^2, but cancellation-free.
        omb = 1.0 - bmap
        ccb = (c * c) * bmap * omb
        mu1 = t1 + c * bmap
        mu2 = t2 + c * bmap
        mu1_sq = mu1 * mu1
        mu2_sq = mu2 * mu2
        mu12 = mu1 * mu2
        sigma1_sq = (q11 - t1 * t1) + (2.0 * c) * t1 * omb + ccb
        sigma2_sq = (q22 - t2 * t2) + (2.0 * c) * t2 * omb + ccb
        sigma12 = (q12 - t1 * t2) + c * (t1 + t2) * omb + ccb

        v1 = 2.0 * sigma12 + c2
        v2 = sigma1_sq + sigma2_sq + c2
        mcs_map = v1 * _recip(v2)
        ssim_map = (2.0 * mu12 + c1) * _recip(mu1_sq + mu2_sq + c1) * mcs_map

        ssim_ref[0] = jnp.sum(ssim_map * mask, keepdims=True)
        mcs_ref[0] = jnp.sum(mcs_map * mask, keepdims=True)
        return prods

    if with_pool:
        def kernel(x1_ref, x2_ref, kh_ref, kw_ref, bmap_ref, mask_ref,
                   dh_ref, dw_ref, ssim_ref, mcs_ref, p1_ref, p2_ref):
            prods = _ssim_and_prods(x1_ref, x2_ref, kh_ref, kw_ref, bmap_ref,
                                    mask_ref, ssim_ref, mcs_ref)
            # Fused avg_pool2d(k=2, s=2) for the next level, written directly in
            # the aligned/padded layout the next level's kernel consumes.
            dh = dh_ref[...]
            dw = dw_ref[...]
            pt = jnp.dot(prods[0:2 * H_a], dw, preferred_element_type=jnp.float32)
            p1_ref[0] = jnp.dot(dh, pt[0:H_a], preferred_element_type=jnp.float32)
            p2_ref[0] = jnp.dot(dh, pt[H_a:2 * H_a], preferred_element_type=jnp.float32)
        return kernel

    def kernel(x1_ref, x2_ref, kh_ref, kw_ref, bmap_ref, mask_ref,
               ssim_ref, mcs_ref):
        _ssim_and_prods(x1_ref, x2_ref, kh_ref, kw_ref, bmap_ref, mask_ref,
                        ssim_ref, mcs_ref)
    return kernel


# --------------------------------- per-level wrapper ---------------------------------
def _ssim_level(x1, x2, H, W, c1, c2, with_pool):
    """One MS-SSIM level over centered planes.

    x1, x2: (B, H_a, W_a) float32, valid image in [:H, :W] (padding content is
    ignored by the baked Toeplitz/pool matrices), U/V stored without +128.
    Returns (ssim_mean, mcs_mean, pooled_x1 | None, pooled_x2 | None).
    """
    B, H_a, W_a = x1.shape
    wsize = int(min(H, W, 11))
    sigma = 1.5 * wsize / 11.0
    xs = np.arange(wsize, dtype=np.float64)
    g = np.exp(-((xs - wsize // 2) ** 2) / (2.0 * sigma ** 2))
    g = g / g.sum()
    g32 = g.astype(np.float32)

    pad = wsize // 2
    Ho = H + 2 * pad - wsize + 1          # F.conv2d output size with zero padding
    Wo = W + 2 * pad - wsize + 1
    Ho_a, Wo_a = _ru(Ho, SUB), _ru(Wo, LANE)

    # Toeplitz blur matrices with the conv zero-padding baked in: taps falling
    # outside the image are simply dropped (== multiplying zero padding).
    kh = np.zeros((Ho_a, H_a), np.float32)
    rowsum = np.zeros((Ho,), np.float64)
    for o in range(Ho):
        for tap in range(wsize):
            j = o - pad + tap
            if 0 <= j < H:
                kh[o, j] = g32[tap]
                rowsum[o] += g[tap]
    kw = np.zeros((W_a, Wo_a), np.float32)
    colsum = np.zeros((Wo,), np.float64)
    for o in range(Wo):
        for tap in range(wsize):
            j = o - pad + tap
            if 0 <= j < W:
                kw[j, o] = g32[tap]
                colsum[o] += g[tap]
    # Exact blur of an all-ones image (separable -> outer product), used to
    # reconstruct the +128-offset statistics without cancellation.
    bmap = np.zeros((Ho_a, Wo_a), np.float32)
    bmap[:Ho, :Wo] = np.outer(rowsum, colsum).astype(np.float32)
    mask = np.zeros((Ho_a, Wo_a), np.float32)
    mask[:Ho, :Wo] = 1.0

    def plane_spec(h, w):
        return pl.BlockSpec((1, h, w), lambda b: (b, 0, 0))

    def const_spec(shape):
        return pl.BlockSpec(shape, lambda b: (0, 0))

    in_specs = [plane_spec(H_a, W_a), plane_spec(H_a, W_a),
                const_spec(kh.shape), const_spec(kw.shape),
                const_spec(bmap.shape), const_spec(mask.shape)]
    args = [x1, x2, jnp.asarray(kh), jnp.asarray(kw),
            jnp.asarray(bmap), jnp.asarray(mask)]

    scalar_shape = jax.ShapeDtypeStruct((B, 1, 1), jnp.float32)
    scalar_spec = pl.BlockSpec((1, 1, 1), lambda b: (b, 0, 0))
    out_shape = [scalar_shape, scalar_shape]
    out_specs = [scalar_spec, scalar_spec]

    if with_pool:
        H2, W2 = H // 2, W // 2
        H2_a, W2_a = _ru(H2, SUB), _ru(W2, LANE)
        dh = np.zeros((H2_a, H_a), np.float32)
        for i in range(H2):
            dh[i, 2 * i] = 0.5
            dh[i, 2 * i + 1] = 0.5
        dw = np.zeros((W_a, W2_a), np.float32)
        for j in range(W2):
            dw[2 * j, j] = 0.5
            dw[2 * j + 1, j] = 0.5
        in_specs += [const_spec(dh.shape), const_spec(dw.shape)]
        args += [jnp.asarray(dh), jnp.asarray(dw)]
        out_shape += [jax.ShapeDtypeStruct((B, H2_a, W2_a), jnp.float32)] * 2
        out_specs += [plane_spec(H2_a, W2_a), plane_spec(H2_a, W2_a)]

    outs = pl.pallas_call(
        _make_level_kernel(c1, c2, H_a, with_pool),
        out_shape=tuple(out_shape),
        grid_spec=pltpu.PrefetchScalarGridSpec(
            num_scalar_prefetch=0,
            grid=(B,),
            in_specs=in_specs,
            out_specs=tuple(out_specs),
        ),
        compiler_params=pltpu.CompilerParams(
            dimension_semantics=("parallel",),       # v7x: shard planes over 2 TCs
            vmem_limit_bytes=32 * 1024 * 1024,
        ),
    )(*args)

    inv_n = np.float32(1.0 / (B * Ho * Wo))
    ssim_mean = jnp.sum(outs[0]) * inv_n
    mcs_mean = jnp.sum(outs[1]) * inv_n
    if with_pool:
        return ssim_mean, mcs_mean, outs[2], outs[3]
    return ssim_mean, mcs_mean, None, None


# ------------------------------------- driver -------------------------------------
def _rgb_to_centered_yuv_planes(img, H_a, W_a):
    """(N,3,H,W) RGB -> (N*3, H_a, W_a) YUV planes, zero padded to the aligned
    size.  The +128 U/V offset is deliberately NOT added here (it is
    reconstructed exactly inside the SSIM kernel); trivially memory-bound, so
    it is left to XLA as one fused pass per the performance review."""
    img = img.astype(jnp.float32)
    r = img[:, 0]
    g = img[:, 1]
    b = img[:, 2]
    y = 0.299 * r + 0.587 * g + 0.114 * b
    u = -0.1687 * r - 0.3313 * g + 0.5 * b
    v = 0.5 * r - 0.4187 * g - 0.0813 * b
    yuv = jnp.stack([y, u, v], axis=1)                 # (N, 3, H, W)
    n, ch, h, w = yuv.shape
    planes = yuv.reshape(n * ch, h, w)
    return jnp.pad(planes, ((0, 0), (0, H_a - h), (0, W_a - w)))


def yuv_ms_ssim_loss(im0, im1, levels=5, max_val=1.0):
    """Forward of shiftlic YUV_MS_SSIM_Loss.  im0, im1: (N, 3, H, W) RGB."""
    N, C, H, W = im0.shape
    assert C == 3
    H_a, W_a = _ru(H, SUB), _ru(W, LANE)
    x1 = _rgb_to_centered_yuv_planes(im0, H_a, W_a)
    x2 = _rgb_to_centered_yuv_planes(im1, H_a, W_a)

    weight = jnp.asarray([0.0448, 0.2856, 0.3001, 0.2363, 0.1333], jnp.float32)
    c1 = (0.01 * max_val) ** 2
    c2 = (0.03 * max_val) ** 2

    ssim_l, mcs_l = [], []
    h, w = H, W
    for lvl in range(levels):
        with_pool = lvl < levels - 1      # last level's pool is unused in the reference
        s_mean, cs_mean, p1, p2 = _ssim_level(x1, x2, h, w, c1, c2, with_pool)
        ssim_l.append(s_mean)
        mcs_l.append(cs_mean)
        if with_pool:
            x1, x2 = p1, p2
            h, w = h // 2, w // 2

    mcs_v = jnp.stack(mcs_l)
    ms_v = jnp.stack(ssim_l)
    return jnp.prod(mcs_v[:levels - 1] ** weight[:levels - 1]) * (
        ms_v[levels - 1] ** weight[levels - 1])


if __name__ == "__main__":
    key = jax.random.PRNGKey(0)
    k0, k1 = jax.random.split(key)
    N, C, H, W = 2, 3, 32, 32   # >=32 so all 5 MS-SSIM levels are well defined
    im0 = jax.random.uniform(k0, (N, C, H, W), dtype=jnp.float32)
    im1 = jnp.clip(im0 + 0.02 * jax.random.normal(k1, (N, C, H, W), dtype=jnp.float32),
                   0.0, 1.0)

    loss_fn = jax.jit(yuv_ms_ssim_loss)
    val = jax.block_until_ready(loss_fn(im0, im1))
    assert val.shape == () and bool(jnp.isfinite(val)), val
    print("KERNEL_OK")
</pallas_src>

<mosaic_0001>
module attributes {stable_mosaic.version = 11 : i64} {
  func.func @kernel(%arg0: i32, %arg1: memref<1x32x128xf32, #tpu.memory_space<vmem>>, %arg2: memref<1x32x128xf32, #tpu.memory_space<vmem>>, %arg3: memref<32x32xf32, #tpu.memory_space<vmem>>, %arg4: memref<128x128xf32, #tpu.memory_space<vmem>>, %arg5: memref<32x128xf32, #tpu.memory_space<vmem>>, %arg6: memref<32x128xf32, #tpu.memory_space<vmem>>, %arg7: memref<16x32xf32, #tpu.memory_space<vmem>>, %arg8: memref<128x128xf32, #tpu.memory_space<vmem>>, %arg9: memref<1x1x1xf32, #tpu.memory_space<vmem>>, %arg10: memref<1x1x1xf32, #tpu.memory_space<vmem>>, %arg11: memref<1x16x128xf32, #tpu.memory_space<vmem>>, %arg12: memref<1x16x128xf32, #tpu.memory_space<vmem>>) attributes {dimension_semantics = [#tpu.dimension_semantics<parallel>], iteration_bounds = array<i64: 6>, scalar_prefetch = 0 : i64, scratch_operands = 0 : i64, tpu.core_type = #tpu.core_type<tc>, window_params = [{transform_indices = @transform_0, window_bounds = array<i64: 1, 32, 128>}, {transform_indices = @transform_1, window_bounds = array<i64: 1, 32, 128>}, {pipeline_mode = #tpu.pipeline_mode<synchronous>, transform_indices = @transform_2, window_bounds = array<i64: 32, 32>}, {pipeline_mode = #tpu.pipeline_mode<synchronous>, transform_indices = @transform_3, window_bounds = array<i64: 128, 128>}, {pipeline_mode = #tpu.pipeline_mode<synchronous>, transform_indices = @transform_4, window_bounds = array<i64: 32, 128>}, {pipeline_mode = #tpu.pipeline_mode<synchronous>, transform_indices = @transform_5, window_bounds = array<i64: 32, 128>}, {pipeline_mode = #tpu.pipeline_mode<synchronous>, transform_indices = @transform_6, window_bounds = array<i64: 16, 32>}, {pipeline_mode = #tpu.pipeline_mode<synchronous>, transform_indices = @transform_7, window_bounds = array<i64: 128, 128>}, {transform_indices = @transform_8, window_bounds = array<i64: 1, 1, 1>}, {transform_indices = @transform_9, window_bounds = array<i64: 1, 1, 1>}, {transform_indices = @transform_10, window_bounds = array<i64: 1, 16, 128>}, {transform_indices = @transform_11, window_bounds = array<i64: 1, 16, 128>}]} {
    %c0 = arith.constant 0 : index
    %c0_0 = arith.constant 0 : index
    %c0_1 = arith.constant 0 : index
    %0 = vector.load %arg1[%c0, %c0_0, %c0_1] : memref<1x32x128xf32, #tpu.memory_space<vmem>>, vector<1x32x128xf32>
    %1 = vector.shape_cast %0 : vector<1x32x128xf32> to vector<32x128xf32>
    %c0_2 = arith.constant 0 : index
    %c0_3 = arith.constant 0 : index
    %c0_4 = arith.constant 0 : index
    %2 = vector.load %arg2[%c0_2, %c0_3, %c0_4] : memref<1x32x128xf32, #tpu.memory_space<vmem>>, vector<1x32x128xf32>
    %3 = vector.shape_cast %2 : vector<1x32x128xf32> to vector<32x128xf32>
    %c0_5 = arith.constant 0 : index
    %c0_6 = arith.constant 0 : index
    %4 = vector.load %arg3[%c0_5, %c0_6] : memref<32x32xf32, #tpu.memory_space<vmem>>, vector<32x32xf32>
    %c0_7 = arith.constant 0 : index
    %c0_8 = arith.constant 0 : index
    %5 = vector.load %arg4[%c0_7, %c0_8] : memref<128x128xf32, #tpu.memory_space<vmem>>, vector<128x128xf32>
    %c0_9 = arith.constant 0 : index
    %c0_10 = arith.constant 0 : index
    %6 = vector.load %arg5[%c0_9, %c0_10] : memref<32x128xf32, #tpu.memory_space<vmem>>, vector<32x128xf32>
    %c0_11 = arith.constant 0 : index
    %c0_12 = arith.constant 0 : index
    %7 = vector.load %arg6[%c0_11, %c0_12] : memref<32x128xf32, #tpu.memory_space<vmem>>, vector<32x128xf32>
    %c3_i32 = arith.constant 3 : i32
    %c0_i32 = arith.constant 0 : i32
    %8 = arith.cmpi eq, %c3_i32, %c0_i32 : i32
    %c1_i32 = arith.constant 1 : i32
    %9 = arith.select %8, %c1_i32, %c3_i32 : i32
    %10 = arith.remsi %arg0, %9 : i32
    %c0_i32_13 = arith.constant 0 : i32
    %11 = arith.cmpi ne, %10, %c0_i32_13 : i32
    %c0_i32_14 = arith.constant 0 : i32
    %12 = arith.cmpi slt, %10, %c0_i32_14 : i32
    %c0_i32_15 = arith.constant 0 : i32
    %13 = arith.cmpi slt, %9, %c0_i32_15 : i32
    %14 = arith.xori %12, %13 : i1
    %15 = arith.andi %14, %11 : i1
    %16 = arith.addi %10, %9 : i32
    %17 = arith.select %15, %16, %10 : i32
    %c0_i32_16 = arith.constant 0 : i32
    %18 = arith.cmpi eq, %17, %c0_i32_16 : i32
    %cst = arith.constant 0.000000e+00 : f32
    %cst_17 = arith.constant 1.280000e+02 : f32
    %19 = arith.select %18, %cst, %cst_17 : f32
    %20 = arith.mulf %1, %1 : vector<32x128xf32>
    %21 = arith.mulf %3, %3 : vector<32x128xf32>
    %22 = arith.mulf %1, %3 : vector<32x128xf32>
    %23 = tpu.concatenate %1, %3, %20, %21, %22 in 0 : vector<32x128xf32>, vector<32x128xf32>, vector<32x128xf32>, vector<32x128xf32>, vector<32x128xf32> -> vector<160x128xf32>
    %cst_18 = arith.constant dense<0.000000e+00> : vector<160x128xf32>
    %24 = tpu.matmul %23, %5, %cst_18 {dimension_numbers = #tpu.dot_dimension_numbers<[1], [0], [0], [1], [0, 0, 1, 1], [], []>} : vector<160x128xf32>, vector<128x128xf32>, vector<160x128xf32> -> vector<160x128xf32>
    %25 = vector.extract_strided_slice %24 {offsets = [0, 0], sizes = [32, 128], strides = [1, 1]} : vector<160x128xf32> to vector<32x128xf32>
    %cst_19 = arith.constant dense<0.000000e+00> : vector<32x128xf32>
    %26 = tpu.matmul %4, %25, %cst_19 {dimension_numbers = #tpu.dot_dimension_numbers<[1], [0], [0], [1], [0, 0, 1, 1], [], []>} : vector<32x32xf32>, vector<32x128xf32>, vector<32x128xf32> -> vector<32x128xf32>
    %27 = vector.extract_strided_slice %24 {offsets = [32, 0], sizes = [32, 128], strides = [1, 1]} : vector<160x128xf32> to vector<32x128xf32>
    %cst_20 = arith.constant dense<0.000000e+00> : vector<32x128xf32>
    %28 = tpu.matmul %4, %27, %cst_20 {dimension_numbers = #tpu.dot_dimension_numbers<[1], [0], [0], [1], [0, 0, 1, 1], [], []>} : vector<32x32xf32>, vector<32x128xf32>, vector<32x128xf32> -> vector<32x128xf32>
    %29 = vector.extract_strided_slice %24 {offsets = [64, 0], sizes = [32, 128], strides = [1, 1]} : vector<160x128xf32> to vector<32x128xf32>
    %cst_21 = arith.constant dense<0.000000e+00> : vector<32x128xf32>
    %30 = tpu.matmul %4, %29, %cst_21 {dimension_numbers = #tpu.dot_dimension_numbers<[1], [0], [0], [1], [0, 0, 1, 1], [], []>} : vector<32x32xf32>, vector<32x128xf32>, vector<32x128xf32> -> vector<32x128xf32>
    %31 = vector.extract_strided_slice %24 {offsets = [96, 0], sizes = [32, 128], strides = [1, 1]} : vector<160x128xf32> to vector<32x128xf32>
    %cst_22 = arith.constant dense<0.000000e+00> : vector<32x128xf32>
    %32 = tpu.matmul %4, %31, %cst_22 {dimension_numbers = #tpu.dot_dimension_numbers<[1], [0], [0], [1], [0, 0, 1, 1], [], []>} : vector<32x32xf32>, vector<32x128xf32>, vector<32x128xf32> -> vector<32x128xf32>
    %33 = vector.extract_strided_slice %24 {offsets = [128, 0], sizes = [32, 128], strides = [1, 1]} : vector<160x128xf32> to vector<32x128xf32>
    %cst_23 = arith.constant dense<0.000000e+00> : vector<32x128xf32>
    %34 = tpu.matmul %4, %33, %cst_23 {dimension_numbers = #tpu.dot_dimension_numbers<[1], [0], [0], [1], [0, 0, 1, 1], [], []>} : vector<32x32xf32>, vector<32x128xf32>, vector<32x128xf32> -> vector<32x128xf32>
    %cst_24 = arith.constant 1.000000e+00 : f32
    %35 = vector.broadcast %cst_24 : f32 to vector<32x128xf32>
    %36 = arith.subf %35, %6 : vector<32x128xf32>
    %37 = arith.mulf %19, %19 : f32
    %38 = vector.broadcast %37 : f32 to vector<32x128xf32>
    %39 = arith.mulf %38, %6 : vector<32x128xf32>
    %40 = arith.mulf %39, %36 : vector<32x128xf32>
    %41 = vector.broadcast %19 : f32 to vector<32x128xf32>
    %42 = arith.mulf %41, %6 : vector<32x128xf32>
    %43 = arith.addf %26, %42 : vector<32x128xf32>
    %44 = vector.broadcast %19 : f32 to vector<32x128xf32>
    %45 = arith.mulf %44, %6 : vector<32x128xf32>
    %46 = arith.addf %28, %45 : vector<32x128xf32>
    %47 = arith.mulf %43, %43 : vector<32x128xf32>
    %48 = arith.mulf %46, %46 : vector<32x128xf32>
    %49 = arith.mulf %43, %46 : vector<32x128xf32>
    %50 = arith.mulf %26, %26 : vector<32x128xf32>
    %51 = arith.subf %30, %50 : vector<32x128xf32>
    %cst_25 = arith.constant 2.000000e+00 : f32
    %52 = arith.mulf %cst_25, %19 : f32
    %53 = vector.broadcast %52 : f32 to vector<32x128xf32>
    %54 = arith.mulf %53, %26 : vector<32x128xf32>
    %55 = arith.mulf %54, %36 : vector<32x128xf32>
    %56 = arith.addf %51, %55 : vector<32x128xf32>
    %57 = arith.addf %56, %40 : vector<32x128xf32>
    %58 = arith.mulf %28, %28 : vector<32x128xf32>
    %59 = arith.subf %32, %58 : vector<32x128xf32>
    %cst_26 = arith.constant 2.000000e+00 : f32
    %60 = arith.mulf %cst_26, %19 : f32
    %61 = vector.broadcast %60 : f32 to vector<32x128xf32>
    %62 = arith.mulf %61, %28 : vector<32x128xf32>
    %63 = arith.mulf %62, %36 : vector<32x128xf32>
    %64 = arith.addf %59, %63 : vector<32x128xf32>
    %65 = arith.addf %64, %40 : vector<32x128xf32>
    %66 = arith.mulf %26, %28 : vector<32x128xf32>
    %67 = arith.subf %34, %66 : vector<32x128xf32>
    %68 = arith.addf %26, %28 : vector<32x128xf32>
    %69 = vector.broadcast %19 : f32 to vector<32x128xf32>
    %70 = arith.mulf %69, %68 : vector<32x128xf32>
    %71 = arith.mulf %70, %36 : vector<32x128xf32>
    %72 = arith.addf %67, %71 : vector<32x128xf32>
    %73 = arith.addf %72, %40 : vector<32x128xf32>
    %cst_27 = arith.constant 2.000000e+00 : f32
    %74 = vector.broadcast %cst_27 : f32 to vector<32x128xf32>
    %75 = arith.mulf %74, %73 : vector<32x128xf32>
    %cst_28 = arith.constant 8.99999984E-4 : f32
    %76 = vector.broadcast %cst_28 : f32 to vector<32x128xf32>
    %77 = arith.addf %75, %76 : vector<32x128xf32>
    %78 = arith.addf %57, %65 : vector<32x128xf32>
    %cst_29 = arith.constant 8.99999984E-4 : f32
    %79 = vector.broadcast %cst_29 : f32 to vector<32x128xf32>
    %80 = arith.addf %78, %79 : vector<32x128xf32>
    %81 = tpu.reciprocal %80 {approx = true} : vector<32x128xf32> -> vector<32x128xf32>
    %82 = arith.mulf %80, %81 : vector<32x128xf32>
    %cst_30 = arith.constant 2.000000e+00 : f32
    %83 = vector.broadcast %cst_30 : f32 to vector<32x128xf32>
    %84 = arith.subf %83, %82 : vector<32x128xf32>
    %85 = arith.mulf %81, %84 : vector<32x128xf32>
    %86 = arith.mulf %77, %85 : vector<32x128xf32>
    %cst_31 = arith.constant 2.000000e+00 : f32
    %87 = vector.broadcast %cst_31 : f32 to vector<32x128xf32>
    %88 = arith.mulf %87, %49 : vector<32x128xf32>
    %cst_32 = arith.constant 9.99999974E-5 : f32
    %89 = vector.broadcast %cst_32 : f32 to vector<32x128xf32>
    %90 = arith.addf %88, %89 : vector<32x128xf32>
    %91 = arith.addf %47, %48 : vector<32x128xf32>
    %cst_33 = arith.constant 9.99999974E-5 : f32
    %92 = vector.broadcast %cst_33 : f32 to vector<32x128xf32>
    %93 = arith.addf %91, %92 : vector<32x128xf32>
    %94 = tpu.reciprocal %93 {approx = true} : vector<32x128xf32> -> vector<32x128xf32>
    %95 = arith.mulf %93, %94 : vector<32x128xf32>
    %cst_34 = arith.constant 2.000000e+00 : f32
    %96 = vector.broadcast %cst_34 : f32 to vector<32x128xf32>
    %97 = arith.subf %96, %95 : vector<32x128xf32>
    %98 = arith.mulf %94, %97 : vector<32x128xf32>
    %99 = arith.mulf %90, %98 : vector<32x128xf32>
    %100 = arith.mulf %99, %86 : vector<32x128xf32>
    %101 = arith.mulf %100, %7 : vector<32x128xf32>
    %102 = vector.shape_cast %101 : vector<32x128xf32> to vector<1x32x128xf32>
    %cst_35 = arith.constant dense<0.000000e+00> : vector<1xf32>
    %103 = vector.multi_reduction <add>, %102, %cst_35 [1, 2] : vector<1x32x128xf32> to vector<1xf32>
    %104 = vector.shape_cast %103 : vector<1xf32> to vector<1x1x1xf32>
    %105 = vector.extract %104[0, 0, 0] : f32 from vector<1x1x1xf32>
    %106 = vector.broadcast %105 : f32 to vector<1x1xf32>
    %c0_36 = arith.constant 0 : index
    %c0_37 = arith.constant 0 : index
    %c0_38 = arith.constant 0 : index
    %107 = vector.load %arg9[%c0_36, %c0_37, %c0_38] : memref<1x1x1xf32, #tpu.memory_space<vmem>>, vector<1x1x1xf32>
    %108 = vector.shape_cast %107 : vector<1x1x1xf32> to vector<1x1xf32>
    %109 = vector.shape_cast %106 : vector<1x1xf32> to vector<1x1x1xf32>
    tpu.vector_store %arg9[%c0_36, %c0_37, %c0_38], %109 {strides = array<i32>} : memref<1x1x1xf32, #tpu.memory_space<vmem>>, vector<1x1x1xf32>,
    %110 = arith.mulf %86, %7 : vector<32x128xf32>
    %111 = vector.shape_cast %110 : vector<32x128xf32> to vector<1x32x128xf32>
    %cst_39 = arith.constant dense<0.000000e+00> : vector<1xf32>
    %112 = vector.multi_reduction <add>, %111, %cst_39 [1, 2] : vector<1x32x128xf32> to vector<1xf32>
    %113 = vector.shape_cast %112 : vector<1xf32> to vector<1x1x1xf32>
    %114 = vector.extract %113[0, 0, 0] : f32 from vector<1x1x1xf32>
    %115 = vector.broadcast %114 : f32 to vector<1x1xf32>
    %c0_40 = arith.constant 0 : index
    %c0_41 = arith.constant 0 : index
    %c0_42 = arith.constant 0 : index
    %116 = vector.load %arg10[%c0_40, %c0_41, %c0_42] : memref<1x1x1xf32, #tpu.memory_space<vmem>>, vector<1x1x1xf32>
    %117 = vector.shape_cast %116 : vector<1x1x1xf32> to vector<1x1xf32>
    %118 = vector.shape_cast %115 : vector<1x1xf32> to vector<1x1x1xf32>
    tpu.vector_store %arg10[%c0_40, %c0_41, %c0_42], %118 {strides = array<i32>} : memref<1x1x1xf32, #tpu.memory_space<vmem>>, vector<1x1x1xf32>,
    %c0_43 = arith.constant 0 : index
    %c0_44 = arith.constant 0 : index
    %119 = vector.load %arg7[%c0_43, %c0_44] : memref<16x32xf32, #tpu.memory_space<vmem>>, vector<16x32xf32>
    %c0_45 = arith.constant 0 : index
    %c0_46 = arith.constant 0 : index
    %120 = vector.load %arg8[%c0_45, %c0_46] : memref<128x128xf32, #tpu.memory_space<vmem>>, vector<128x128xf32>
    %121 = vector.extract_strided_slice %23 {offsets = [0, 0], sizes = [64, 128], strides = [1, 1]} : vector<160x128xf32> to vector<64x128xf32>
    %cst_47 = arith.constant dense<0.000000e+00> : vector<64x128xf32>
    %122 = tpu.matmul %121, %120, %cst_47 {dimension_numbers = #tpu.dot_dimension_numbers<[1], [0], [0], [1], [0, 0, 1, 1], [], []>} : vector<64x128xf32>, vector<128x128xf32>, vector<64x128xf32> -> vector<64x128xf32>
    %123 = vector.extract_strided_slice %122 {offsets = [0, 0], sizes = [32, 128], strides = [1, 1]} : vector<64x128xf32> to vector<32x128xf32>
    %cst_48 = arith.constant dense<0.000000e+00> : vector<16x128xf32>
    %124 = tpu.matmul %119, %123, %cst_48 {dimension_numbers = #tpu.dot_dimension_numbers<[1], [0], [0], [1], [0, 0, 1, 1], [], []>} : vector<16x32xf32>, vector<32x128xf32>, vector<16x128xf32> -> vector<16x128xf32>
    %c0_49 = arith.constant 0 : index
    %c0_50 = arith.constant 0 : index
    %c0_51 = arith.constant 0 : index
    %125 = vector.load %arg11[%c0_49, %c0_50, %c0_51] : memref<1x16x128xf32, #tpu.memory_space<vmem>>, vector<1x16x128xf32>
    %126 = vector.shape_cast %125 : vector<1x16x128xf32> to vector<16x128xf32>
    %127 = vector.shape_cast %124 : vector<16x128xf32> to vector<1x16x128xf32>
    tpu.vector_store %arg11[%c0_49, %c0_50, %c0_51], %127 {strides = array<i32>} : memref<1x16x128xf32, #tpu.memory_space<vmem>>, vector<1x16x128xf32>,
    %128 = vector.extract_strided_slice %122 {offsets = [32, 0], sizes = [32, 128], strides = [1, 1]} : vector<64x128xf32> to vector<32x128xf32>
    %cst_52 = arith.constant dense<0.000000e+00> : vector<16x128xf32>
    %129 = tpu.matmul %119, %128, %cst_52 {dimension_numbers = #tpu.dot_dimension_numbers<[1], [0], [0], [1], [0, 0, 1, 1], [], []>} : vector<16x32xf32>, vector<32x128xf32>, vector<16x128xf32> -> vector<16x128xf32>
    %c0_53 = arith.constant 0 : index
    %c0_54 = arith.constant 0 : index
    %c0_55 = arith.constant 0 : index
    %130 = vector.load %arg12[%c0_53, %c0_54, %c0_55] : memref<1x16x128xf32, #tpu.memory_space<vmem>>, vector<1x16x128xf32>
    %131 = vector.shape_cast %130 : vector<1x16x128xf32> to vector<16x128xf32>
    %132 = vector.shape_cast %129 : vector<16x128xf32> to vector<1x16x128xf32>
    tpu.vector_store %arg12[%c0_53, %c0_54, %c0_55], %132 {strides = array<i32>} : memref<1x16x128xf32, #tpu.memory_space<vmem>>, vector<1x16x128xf32>,
    return
  }
  func.func @transform_0(%arg0: i32) -> (i32, i32, i32) {
    %c0_i32 = arith.constant 0 : i32
    %c0_i32_0 = arith.constant 0 : i32
    %c0_i32_1 = arith.constant 0 : i32
    return %arg0, %c0_i32, %c0_i32_0 : i32, i32, i32
  }
  func.func @transform_1(%arg0: i32) -> (i32, i32, i32) {
    %c0_i32 = arith.constant 0 : i32
    %c0_i32_0 = arith.constant 0 : i32
    %c0_i32_1 = arith.constant 0 : i32
    return %arg0, %c0_i32, %c0_i32_0 : i32, i32, i32
  }
  func.func @transform_2(%arg0: i32) -> (i32, i32) {
    %c0_i32 = arith.constant 0 : i32
    %c0_i32_0 = arith.constant 0 : i32
    %c0_i32_1 = arith.constant 0 : i32
    return %c0_i32, %c0_i32_0 : i32, i32
  }
  func.func @transform_3(%arg0: i32) -> (i32, i32) {
    %c0_i32 = arith.constant 0 : i32
    %c0_i32_0 = arith.constant 0 : i32
    %c0_i32_1 = arith.constant 0 : i32
    return %c0_i32, %c0_i32_0 : i32, i32
  }
  func.func @transform_4(%arg0: i32) -> (i32, i32) {
    %c0_i32 = arith.constant 0 : i32
    %c0_i32_0 = arith.constant 0 : i32
    %c0_i32_1 = arith.constant 0 : i32
    return %c0_i32, %c0_i32_0 : i32, i32
  }
  func.func @transform_5(%arg0: i32) -> (i32, i32) {
    %c0_i32 = arith.constant 0 : i32
    %c0_i32_0 = arith.constant 0 : i32
    %c0_i32_1 = arith.constant 0 : i32
    return %c0_i32, %c0_i32_0 : i32, i32
  }
  func.func @transform_6(%arg0: i32) -> (i32, i32) {
    %c0_i32 = arith.constant 0 : i32
    %c0_i32_0 = arith.constant 0 : i32
    %c0_i32_1 = arith.constant 0 : i32
    return %c0_i32, %c0_i32_0 : i32, i32
  }
  func.func @transform_7(%arg0: i32) -> (i32, i32) {
    %c0_i32 = arith.constant 0 : i32
    %c0_i32_0 = arith.constant 0 : i32
    %c0_i32_1 = arith.constant 0 : i32
    return %c0_i32, %c0_i32_0 : i32, i32
  }
  func.func @transform_8(%arg0: i32) -> (i32, i32, i32) {
    %c0_i32 = arith.constant 0 : i32
    %c0_i32_0 = arith.constant 0 : i32
    %c0_i32_1 = arith.constant 0 : i32
    return %arg0, %c0_i32, %c0_i32_0 : i32, i32, i32
  }
  func.func @transform_9(%arg0: i32) -> (i32, i32, i32) {
    %c0_i32 = arith.constant 0 : i32
    %c0_i32_0 = arith.constant 0 : i32
    %c0_i32_1 = arith.constant 0 : i32
    return %arg0, %c0_i32, %c0_i32_0 : i32, i32, i32
  }
  func.func @transform_10(%arg0: i32) -> (i32, i32, i32) {
    %c0_i32 = arith.constant 0 : i32
    %c0_i32_0 = arith.constant 0 : i32
    %c0_i32_1 = arith.constant 0 : i32
    return %arg0, %c0_i32, %c0_i32_0 : i32, i32, i32
  }
  func.func @transform_11(%arg0: i32) -> (i32, i32, i32) {
    %c0_i32 = arith.constant 0 : i32
    %c0_i32_0 = arith.constant 0 : i32
    %c0_i32_1 = arith.constant 0 : i32
    return %arg0, %c0_i32, %c0_i32_0 : i32, i32, i32
  }
}

module attributes {stable_mosaic.version = 11 : i64} {
  func.func @kernel(%arg0: i32, %arg1: memref<1x8x128xf32, #tpu.memory_space<vmem>>, %arg2: memref<1x8x128xf32, #tpu.memory_space<vmem>>, %arg3: memref<16x8xf32, #tpu.memory_space<vmem>>, %arg4: memref<128x128xf32, #tpu.memory_space<vmem>>, %arg5: memref<16x128xf32, #tpu.memory_space<vmem>>, %arg6: memref<16x128xf32, #tpu.memory_space<vmem>>, %arg7: memref<8x8xf32, #tpu.memory_space<vmem>>, %arg8: memref<128x128xf32, #tpu.memory_space<vmem>>, %arg9: memref<1x1x1xf32, #tpu.memory_space<vmem>>, %arg10: memref<1x1x1xf32, #tpu.memory_space<vmem>>, %arg11: memref<1x8x128xf32, #tpu.memory_space<vmem>>, %arg12: memref<1x8x128xf32, #tpu.memory_space<vmem>>) attributes {dimension_semantics = [#tpu.dimension_semantics<parallel>], iteration_bounds = array<i64: 6>, scalar_prefetch = 0 : i64, scratch_operands = 0 : i64, tpu.core_type = #tpu.core_type<tc>, window_params = [{transform_indices = @transform_0, window_bounds = array<i64: 1, 8, 128>}, {transform_indices = @transform_1, window_bounds = array<i64: 1, 8, 128>}, {pipeline_mode = #tpu.pipeline_mode<synchronous>, transform_indices = @transform_2, window_bounds = array<i64: 16, 8>}, {pipeline_mode = #tpu.pipeline_mode<synchronous>, transform_indices = @transform_3, window_bounds = array<i64: 128, 128>}, {pipeline_mode = #tpu.pipeline_mode<synchronous>, transform_indices = @transform_4, window_bounds = array<i64: 16, 128>}, {pipeline_mode = #tpu.pipeline_mode<synchronous>, transform_indices = @transform_5, window_bounds = array<i64: 16, 128>}, {pipeline_mode = #tpu.pipeline_mode<synchronous>, transform_indices = @transform_6, window_bounds = array<i64: 8, 8>}, {pipeline_mode = #tpu.pipeline_mode<synchronous>, transform_indices = @transform_7, window_bounds = array<i64: 128, 128>}, {transform_indices = @transform_8, window_bounds = array<i64: 1, 1, 1>}, {transform_indices = @transform_9, window_bounds = array<i64: 1, 1, 1>}, {transform_indices = @transform_10, window_bounds = array<i64: 1, 8, 128>}, {transform_indices = @transform_11, window_bounds = array<i64: 1, 8, 128>}]} {
    %c0 = arith.constant 0 : index
    %c0_0 = arith.constant 0 : index
    %c0_1 = arith.constant 0 : index
    %0 = vector.load %arg1[%c0, %c0_0, %c0_1] : memref<1x8x128xf32, #tpu.memory_space<vmem>>, vector<1x8x128xf32>
    %1 = vector.shape_cast %0 : vector<1x8x128xf32> to vector<8x128xf32>
    %c0_2 = arith.constant 0 : index
    %c0_3 = arith.constant 0 : index
    %c0_4 = arith.constant 0 : index
    %2 = vector.load %arg2[%c0_2, %c0_3, %c0_4] : memref<1x8x128xf32, #tpu.memory_space<vmem>>, vector<1x8x128xf32>
    %3 = vector.shape_cast %2 : vector<1x8x128xf32> to vector<8x128xf32>
    %c0_5 = arith.constant 0 : index
    %c0_6 = arith.constant 0 : index
    %4 = vector.load %arg3[%c0_5, %c0_6] : memref<16x8xf32, #tpu.memory_space<vmem>>, vector<16x8xf32>
    %c0_7 = arith.constant 0 : index
    %c0_8 = arith.constant 0 : index
    %5 = vector.load %arg4[%c0_7, %c0_8] : memref<128x128xf32, #tpu.memory_space<vmem>>, vector<128x128xf32>
    %c0_9 = arith.constant 0 : index
    %c0_10 = arith.constant 0 : index
    %6 = vector.load %arg5[%c0_9, %c0_10] : memref<16x128xf32, #tpu.memory_space<vmem>>, vector<16x128xf32>
    %c0_11 = arith.constant 0 : index
    %c0_12 = arith.constant 0 : index
    %7 = vector.load %arg6[%c0_11, %c0_12] : memref<16x128xf32, #tpu.memory_space<vmem>>, vector<16x128xf32>
    %c3_i32 = arith.constant 3 : i32
    %c0_i32 = arith.constant 0 : i32
    %8 = arith.cmpi eq, %c3_i32, %c0_i32 : i32
    %c1_i32 = arith.constant 1 : i32
    %9 = arith.select %8, %c1_i32, %c3_i32 : i32
    %10 = arith.remsi %arg0, %9 : i32
    %c0_i32_13 = arith.constant 0 : i32
    %11 = arith.cmpi ne, %10, %c0_i32_13 : i32
    %c0_i32_14 = arith.constant 0 : i32
    %12 = arith.cmpi slt, %10, %c0_i32_14 : i32
    %c0_i32_15 = arith.constant 0 : i32
    %13 = arith.cmpi slt, %9, %c0_i32_15 : i32
    %14 = arith.xori %12, %13 : i1
    %15 = arith.andi %14, %11 : i1
    %16 = arith.addi %10, %9 : i32
    %17 = arith.select %15, %16, %10 : i32
    %c0_i32_16 = arith.constant 0 : i32
    %18 = arith.cmpi eq, %17, %c0_i32_16 : i32
    %cst = arith.constant 0.000000e+00 : f32
    %cst_17 = arith.constant 1.280000e+02 : f32
    %19 = arith.select %18, %cst, %cst_17 : f32
    %20 = arith.mulf %1, %1 : vector<8x128xf32>
    %21 = arith.mulf %3, %3 : vector<8x128xf32>
    %22 = arith.mulf %1, %3 : vector<8x128xf32>
    %23 = tpu.concatenate %1, %3, %20, %21, %22 in 0 : vector<8x128xf32>, vector<8x128xf32>, vector<8x128xf32>, vector<8x128xf32>, vector<8x128xf32> -> vector<40x128xf32>
    %cst_18 = arith.constant dense<0.000000e+00> : vector<40x128xf32>
    %24 = tpu.matmul %23, %5, %cst_18 {dimension_numbers = #tpu.dot_dimension_numbers<[1], [0], [0], [1], [0, 0, 1, 1], [], []>} : vector<40x128xf32>, vector<128x128xf32>, vector<40x128xf32> -> vector<40x128xf32>
    %25 = vector.extract_strided_slice %24 {offsets = [0, 0], sizes = [8, 128], strides = [1, 1]} : vector<40x128xf32> to vector<8x128xf32>
    %cst_19 = arith.constant dense<0.000000e+00> : vector<16x128xf32>
    %26 = tpu.matmul %4, %25, %cst_19 {dimension_numbers = #tpu.dot_dimension_numbers<[1], [0], [0], [1], [0, 0, 1, 1], [], []>} : vector<16x8xf32>, vector<8x128xf32>, vector<16x128xf32> -> vector<16x128xf32>
    %27 = vector.extract_strided_slice %24 {offsets = [8, 0], sizes = [8, 128], strides = [1, 1]} : vector<40x128xf32> to vector<8x128xf32>
    %cst_20 = arith.constant dense<0.000000e+00> : vector<16x128xf32>
    %28 = tpu.matmul %4, %27, %cst_20 {dimension_numbers = #tpu.dot_dimension_numbers<[1], [0], [0], [1], [0, 0, 1, 1], [], []>} : vector<16x8xf32>, vector<8x128xf32>, vector<16x128xf32> -> vector<16x128xf32>
    %29 = vector.extract_strided_slice %24 {offsets = [16, 0], sizes = [8, 128], strides = [1, 1]} : vector<40x128xf32> to vector<8x128xf32>
    %cst_21 = arith.constant dense<0.000000e+00> : vector<16x128xf32>
    %30 = tpu.matmul %4, %29, %cst_21 {dimension_numbers = #tpu.dot_dimension_numbers<[1], [0], [0], [1], [0, 0, 1, 1], [], []>} : vector<16x8xf32>, vector<8x128xf32>, vector<16x128xf32> -> vector<16x128xf32>
    %31 = vector.extract_strided_slice %24 {offsets = [24, 0], sizes = [8, 128], strides = [1, 1]} : vector<40x128xf32> to vector<8x128xf32>
    %cst_22 = arith.constant dense<0.000000e+00> : vector<16x128xf32>
    %32 = tpu.matmul %4, %31, %cst_22 {dimension_numbers = #tpu.dot_dimension_numbers<[1], [0], [0], [1], [0, 0, 1, 1], [], []>} : vector<16x8xf32>, vector<8x128xf32>, vector<16x128xf32> -> vector<16x128xf32>
    %33 = vector.extract_strided_slice %24 {offsets = [32, 0], sizes = [8, 128], strides = [1, 1]} : vector<40x128xf32> to vector<8x128xf32>
    %cst_23 = arith.constant dense<0.000000e+00> : vector<16x128xf32>
    %34 = tpu.matmul %4, %33, %cst_23 {dimension_numbers = #tpu.dot_dimension_numbers<[1], [0], [0], [1], [0, 0, 1, 1], [], []>} : vector<16x8xf32>, vector<8x128xf32>, vector<16x128xf32> -> vector<16x128xf32>
    %cst_24 = arith.constant 1.000000e+00 : f32
    %35 = vector.broadcast %cst_24 : f32 to vector<16x128xf32>
    %36 = arith.subf %35, %6 : vector<16x128xf32>
    %37 = arith.mulf %19, %19 : f32
    %38 = vector.broadcast %37 : f32 to vector<16x128xf32>
    %39 = arith.mulf %38, %6 : vector<16x128xf32>
    %40 = arith.mulf %39, %36 : vector<16x128xf32>
    %41 = vector.broadcast %19 : f32 to vector<16x128xf32>
    %42 = arith.mulf %41, %6 : vector<16x128xf32>
    %43 = arith.addf %26, %42 : vector<16x128xf32>
    %44 = vector.broadcast %19 : f32 to vector<16x128xf32>
    %45 = arith.mulf %44, %6 : vector<16x128xf32>
    %46 = arith.addf %28, %45 : vector<16x128xf32>
    %47 = arith.mulf %43, %43 : vector<16x128xf32>
    %48 = arith.mulf %46, %46 : vector<16x128xf32>
    %49 = arith.mulf %43, %46 : vector<16x128xf32>
    %50 = arith.mulf %26, %26 : vector<16x128xf32>
    %51 = arith.subf %30, %50 : vector<16x128xf32>
    %cst_25 = arith.constant 2.000000e+00 : f32
    %52 = arith.mulf %cst_25, %19 : f32
    %53 = vector.broadcast %52 : f32 to vector<16x128xf32>
    %54 = arith.mulf %53, %26 : vector<16x128xf32>
    %55 = arith.mulf %54, %36 : vector<16x128xf32>
    %56 = arith.addf %51, %55 : vector<16x128xf32>
    %57 = arith.addf %56, %40 : vector<16x128xf32>
    %58 = arith.mulf %28, %28 : vector<16x128xf32>
    %59 = arith.subf %32, %58 : vector<16x128xf32>
    %cst_26 = arith.constant 2.000000e+00 : f32
    %60 = arith.mulf %cst_26, %19 : f32
    %61 = vector.broadcast %60 : f32 to vector<16x128xf32>
    %62 = arith.mulf %61, %28 : vector<16x128xf32>
    %63 = arith.mulf %62, %36 : vector<16x128xf32>
    %64 = arith.addf %59, %63 : vector<16x128xf32>
    %65 = arith.addf %64, %40 : vector<16x128xf32>
    %66 = arith.mulf %26, %28 : vector<16x128xf32>
    %67 = arith.subf %34, %66 : vector<16x128xf32>
    %68 = arith.addf %26, %28 : vector<16x128xf32>
    %69 = vector.broadcast %19 : f32 to vector<16x128xf32>
    %70 = arith.mulf %69, %68 : vector<16x128xf32>
    %71 = arith.mulf %70, %36 : vector<16x128xf32>
    %72 = arith.addf %67, %71 : vector<16x128xf32>
    %73 = arith.addf %72, %40 : vector<16x128xf32>
    %cst_27 = arith.constant 2.000000e+00 : f32
    %74 = vector.broadcast %cst_27 : f32 to vector<16x128xf32>
    %75 = arith.mulf %74, %73 : vector<16x128xf32>
    %cst_28 = arith.constant 8.99999984E-4 : f32
    %76 = vector.broadcast %cst_28 : f32 to vector<16x128xf32>
    %77 = arith.addf %75, %76 : vector<16x128xf32>
    %78 = arith.addf %57, %65 : vector<16x128xf32>
    %cst_29 = arith.constant 8.99999984E-4 : f32
    %79 = vector.broadcast %cst_29 : f32 to vector<16x128xf32>
    %80 = arith.addf %78, %79 : vector<16x128xf32>
    %81 = tpu.reciprocal %80 {approx = true} : vector<16x128xf32> -> vector<16x128xf32>
    %82 = arith.mulf %80, %81 : vector<16x128xf32>
    %cst_30 = arith.constant 2.000000e+00 : f32
    %83 = vector.broadcast %cst_30 : f32 to vector<16x128xf32>
    %84 = arith.subf %83, %82 : vector<16x128xf32>
    %85 = arith.mulf %81, %84 : vector<16x128xf32>
    %86 = arith.mulf %77, %85 : vector<16x128xf32>
    %cst_31 = arith.constant 2.000000e+00 : f32
    %87 = vector.broadcast %cst_31 : f32 to vector<16x128xf32>
    %88 = arith.mulf %87, %49 : vector<16x128xf32>
    %cst_32 = arith.constant 9.99999974E-5 : f32
    %89 = vector.broadcast %cst_32 : f32 to vector<16x128xf32>
    %90 = arith.addf %88, %89 : vector<16x128xf32>
    %91 = arith.addf %47, %48 : vector<16x128xf32>
    %cst_33 = arith.constant 9.99999974E-5 : f32
    %92 = vector.broadcast %cst_33 : f32 to vector<16x128xf32>
    %93 = arith.addf %91, %92 : vector<16x128xf32>
    %94 = tpu.reciprocal %93 {approx = true} : vector<16x128xf32> -> vector<16x128xf32>
    %95 = arith.mulf %93, %94 : vector<16x128xf32>
    %cst_34 = arith.constant 2.000000e+00 : f32
    %96 = vector.broadcast %cst_34 : f32 to vector<16x128xf32>
    %97 = arith.subf %96, %95 : vector<16x128xf32>
    %98 = arith.mulf %94, %97 : vector<16x128xf32>
    %99 = arith.mulf %90, %98 : vector<16x128xf32>
    %100 = arith.mulf %99, %86 : vector<16x128xf32>
    %101 = arith.mulf %100, %7 : vector<16x128xf32>
    %102 = vector.shape_cast %101 : vector<16x128xf32> to vector<1x16x128xf32>
    %cst_35 = arith.constant dense<0.000000e+00> : vector<1xf32>
    %103 = vector.multi_reduction <add>, %102, %cst_35 [1, 2] : vector<1x16x128xf32> to vector<1xf32>
    %104 = vector.shape_cast %103 : vector<1xf32> to vector<1x1x1xf32>
    %105 = vector.extract %104[0, 0, 0] : f32 from vector<1x1x1xf32>
    %106 = vector.broadcast %105 : f32 to vector<1x1xf32>
    %c0_36 = arith.constant 0 : index
    %c0_37 = arith.constant 0 : index
    %c0_38 = arith.constant 0 : index
    %107 = vector.load %arg9[%c0_36, %c0_37, %c0_38] : memref<1x1x1xf32, #tpu.memory_space<vmem>>, vector<1x1x1xf32>
    %108 = vector.shape_cast %107 : vector<1x1x1xf32> to vector<1x1xf32>
    %109 = vector.shape_cast %106 : vector<1x1xf32> to vector<1x1x1xf32>
    tpu.vector_store %arg9[%c0_36, %c0_37, %c0_38], %109 {strides = array<i32>} : memref<1x1x1xf32, #tpu.memory_space<vmem>>, vector<1x1x1xf32>,
    %110 = arith.mulf %86, %7 : vector<16x128xf32>
    %111 = vector.shape_cast %110 : vector<16x128xf32> to vector<1x16x128xf32>
    %cst_39 = arith.constant dense<0.000000e+00> : vector<1xf32>
    %112 = vector.multi_reduction <add>, %111, %cst_39 [1, 2] : vector<1x16x128xf32> to vector<1xf32>
    %113 = vector.shape_cast %112 : vector<1xf32> to vector<1x1x1xf32>
    %114 = vector.extract %113[0, 0, 0] : f32 from vector<1x1x1xf32>
    %115 = vector.broadcast %114 : f32 to vector<1x1xf32>
    %c0_40 = arith.constant 0 : index
    %c0_41 = arith.constant 0 : index
    %c0_42 = arith.constant 0 : index
    %116 = vector.load %arg10[%c0_40, %c0_41, %c0_42] : memref<1x1x1xf32, #tpu.memory_space<vmem>>, vector<1x1x1xf32>
    %117 = vector.shape_cast %116 : vector<1x1x1xf32> to vector<1x1xf32>
    %118 = vector.shape_cast %115 : vector<1x1xf32> to vector<1x1x1xf32>
    tpu.vector_store %arg10[%c0_40, %c0_41, %c0_42], %118 {strides = array<i32>} : memref<1x1x1xf32, #tpu.memory_space<vmem>>, vector<1x1x1xf32>,
    %c0_43 = arith.constant 0 : index
    %c0_44 = arith.constant 0 : index
    %119 = vector.load %arg7[%c0_43, %c0_44] : memref<8x8xf32, #tpu.memory_space<vmem>>, vector<8x8xf32>
    %c0_45 = arith.constant 0 : index
    %c0_46 = arith.constant 0 : index
    %120 = vector.load %arg8[%c0_45, %c0_46] : memref<128x128xf32, #tpu.memory_space<vmem>>, vector<128x128xf32>
    %121 = vector.extract_strided_slice %23 {offsets = [0, 0], sizes = [16, 128], strides = [1, 1]} : vector<40x128xf32> to vector<16x128xf32>
    %cst_47 = arith.constant dense<0.000000e+00> : vector<16x128xf32>
    %122 = tpu.matmul %121, %120, %cst_47 {dimension_numbers = #tpu.dot_dimension_numbers<[1], [0], [0], [1], [0, 0, 1, 1], [], []>} : vector<16x128xf32>, vector<128x128xf32>, vector<16x128xf32> -> vector<16x128xf32>
    %123 = vector.extract_strided_slice %122 {offsets = [0, 0], sizes = [8, 128], strides = [1, 1]} : vector<16x128xf32> to vector<8x128xf32>
    %cst_48 = arith.constant dense<0.000000e+00> : vector<8x128xf32>
    %124 = tpu.matmul %119, %123, %cst_48 {dimension_numbers = #tpu.dot_dimension_numbers<[1], [0], [0], [1], [0, 0, 1, 1], [], []>} : vector<8x8xf32>, vector<8x128xf32>, vector<8x128xf32> -> vector<8x128xf32>
    %c0_49 = arith.constant 0 : index
    %c0_50 = arith.constant 0 : index
    %c0_51 = arith.constant 0 : index
    %125 = vector.load %arg11[%c0_49, %c0_50, %c0_51] : memref<1x8x128xf32, #tpu.memory_space<vmem>>, vector<1x8x128xf32>
    %126 = vector.shape_cast %125 : vector<1x8x128xf32> to vector<8x128xf32>
    %127 = vector.shape_cast %124 : vector<8x128xf32> to vector<1x8x128xf32>
    tpu.vector_store %arg11[%c0_49, %c0_50, %c0_51], %127 {strides = array<i32>} : memref<1x8x128xf32, #tpu.memory_space<vmem>>, vector<1x8x128xf32>,
    %128 = vector.extract_strided_slice %122 {offsets = [8, 0], sizes = [8, 128], strides = [1, 1]} : vector<16x128xf32> to vector<8x128xf32>
    %cst_52 = arith.constant dense<0.000000e+00> : vector<8x128xf32>
    %129 = tpu.matmul %119, %128, %cst_52 {dimension_numbers = #tpu.dot_dimension_numbers<[1], [0], [0], [1], [0, 0, 1, 1], [], []>} : vector<8x8xf32>, vector<8x128xf32>, vector<8x128xf32> -> vector<8x128xf32>
    %c0_53 = arith.constant 0 : index
    %c0_54 = arith.constant 0 : index
    %c0_55 = arith.constant 0 : index
    %130 = vector.load %arg12[%c0_53, %c0_54, %c0_55] : memref<1x8x128xf32, #tpu.memory_space<vmem>>, vector<1x8x128xf32>
    %131 = vector.shape_cast %130 : vector<1x8x128xf32> to vector<8x128xf32>
    %132 = vector.shape_cast %129 : vector<8x128xf32> to vector<1x8x128xf32>
    tpu.vector_store %arg12[%c0_53, %c0_54, %c0_55], %132 {strides = array<i32>} : memref<1x8x128xf32, #tpu.memory_space<vmem>>, vector<1x8x128xf32>,
    return
  }
  func.func @transform_0(%arg0: i32) -> (i32, i32, i32) {
    %c0_i32 = arith.constant 0 : i32
    %c0_i32_0 = arith.constant 0 : i32
    %c0_i32_1 = arith.constant 0 : i32
    return %arg0, %c0_i32, %c0_i32_0 : i32, i32, i32
  }
  func.func @transform_1(%arg0: i32) -> (i32, i32, i32) {
    %c0_i32 = arith.constant 0 : i32
    %c0_i32_0 = arith.constant 0 : i32
    %c0_i32_1 = arith.constant 0 : i32
    return %arg0, %c0_i32, %c0_i32_0 : i32, i32, i32
  }
  func.func @transform_2(%arg0: i32) -> (i32, i32) {
    %c0_i32 = arith.constant 0 : i32
    %c0_i32_0 = arith.constant 0 : i32
    %c0_i32_1 = arith.constant 0 : i32
    return %c0_i32, %c0_i32_0 : i32, i32
  }
  func.func @transform_3(%arg0: i32) -> (i32, i32) {
    %c0_i32 = arith.constant 0 : i32
    %c0_i32_0 = arith.constant 0 : i32
    %c0_i32_1 = arith.constant 0 : i32
    return %c0_i32, %c0_i32_0 : i32, i32
  }
  func.func @transform_4(%arg0: i32) -> (i32, i32) {
    %c0_i32 = arith.constant 0 : i32
    %c0_i32_0 = arith.constant 0 : i32
    %c0_i32_1 = arith.constant 0 : i32
    return %c0_i32, %c0_i32_0 : i32, i32
  }
  func.func @transform_5(%arg0: i32) -> (i32, i32) {
    %c0_i32 = arith.constant 0 : i32
    %c0_i32_0 = arith.constant 0 : i32
    %c0_i32_1 = arith.constant 0 : i32
    return %c0_i32, %c0_i32_0 : i32, i32
  }
  func.func @transform_6(%arg0: i32) -> (i32, i32) {
    %c0_i32 = arith.constant 0 : i32
    %c0_i32_0 = arith.constant 0 : i32
    %c0_i32_1 = arith.constant 0 : i32
    return %c0_i32, %c0_i32_0 : i32, i32
  }
  func.func @transform_7(%arg0: i32) -> (i32, i32) {
    %c0_i32 = arith.constant 0 : i32
    %c0_i32_0 = arith.constant 0 : i32
    %c0_i32_1 = arith.constant 0 : i32
    return %c0_i32, %c0_i32_0 : i32, i32
  }
  func.func @transform_8(%arg0: i32) -> (i32, i32, i32) {
    %c0_i32 = arith.constant 0 : i32
    %c0_i32_0 = arith.constant 0 : i32
    %c0_i32_1 = arith.constant 0 : i32
    return %arg0, %c0_i32, %c0_i32_0 : i32, i32, i32
  }
  func.func @transform_9(%arg0: i32) -> (i32, i32, i32) {
    %c0_i32 = arith.constant 0 : i32
    %c0_i32_0 = arith.constant 0 : i32
    %c0_i32_1 = arith.constant 0 : i32
    return %arg0, %c0_i32, %c0_i32_0 : i32, i32, i32
  }
  func.func @transform_10(%arg0: i32) -> (i32, i32, i32) {
    %c0_i32 = arith.constant 0 : i32
    %c0_i32_0 = arith.constant 0 : i32
    %c0_i32_1 = arith.constant 0 : i32
    return %arg0, %c0_i32, %c0_i32_0 : i32, i32, i32
  }
  func.func @transform_11(%arg0: i32) -> (i32, i32, i32) {
    %c0_i32 = arith.constant 0 : i32
    %c0_i32_0 = arith.constant 0 : i32
    %c0_i32_1 = arith.constant 0 : i32
    return %arg0, %c0_i32, %c0_i32_0 : i32, i32, i32
  }
}

module attributes {stable_mosaic.version = 11 : i64} {
  func.func @kernel(%arg0: i32, %arg1: memref<1x16x128xf32, #tpu.memory_space<vmem>>, %arg2: memref<1x16x128xf32, #tpu.memory_space<vmem>>, %arg3: memref<16x16xf32, #tpu.memory_space<vmem>>, %arg4: memref<128x128xf32, #tpu.memory_space<vmem>>, %arg5: memref<16x128xf32, #tpu.memory_space<vmem>>, %arg6: memref<16x128xf32, #tpu.memory_space<vmem>>, %arg7: memref<8x16xf32, #tpu.memory_space<vmem>>, %arg8: memref<128x128xf32, #tpu.memory_space<vmem>>, %arg9: memref<1x1x1xf32, #tpu.memory_space<vmem>>, %arg10: memref<1x1x1xf32, #tpu.memory_space<vmem>>, %arg11: memref<1x8x128xf32, #tpu.memory_space<vmem>>, %arg12: memref<1x8x128xf32, #tpu.memory_space<vmem>>) attributes {dimension_semantics = [#tpu.dimension_semantics<parallel>], iteration_bounds = array<i64: 6>, scalar_prefetch = 0 : i64, scratch_operands = 0 : i64, tpu.core_type = #tpu.core_type<tc>, window_params = [{transform_indices = @transform_0, window_bounds = array<i64: 1, 16, 128>}, {transform_indices = @transform_1, window_bounds = array<i64: 1, 16, 128>}, {pipeline_mode = #tpu.pipeline_mode<synchronous>, transform_indices = @transform_2, window_bounds = array<i64: 16, 16>}, {pipeline_mode = #tpu.pipeline_mode<synchronous>, transform_indices = @transform_3, window_bounds = array<i64: 128, 128>}, {pipeline_mode = #tpu.pipeline_mode<synchronous>, transform_indices = @transform_4, window_bounds = array<i64: 16, 128>}, {pipeline_mode = #tpu.pipeline_mode<synchronous>, transform_indices = @transform_5, window_bounds = array<i64: 16, 128>}, {pipeline_mode = #tpu.pipeline_mode<synchronous>, transform_indices = @transform_6, window_bounds = array<i64: 8, 16>}, {pipeline_mode = #tpu.pipeline_mode<synchronous>, transform_indices = @transform_7, window_bounds = array<i64: 128, 128>}, {transform_indices = @transform_8, window_bounds = array<i64: 1, 1, 1>}, {transform_indices = @transform_9, window_bounds = array<i64: 1, 1, 1>}, {transform_indices = @transform_10, window_bounds = array<i64: 1, 8, 128>}, {transform_indices = @transform_11, window_bounds = array<i64: 1, 8, 128>}]} {
    %c0 = arith.constant 0 : index
    %c0_0 = arith.constant 0 : index
    %c0_1 = arith.constant 0 : index
    %0 = vector.load %arg1[%c0, %c0_0, %c0_1] : memref<1x16x128xf32, #tpu.memory_space<vmem>>, vector<1x16x128xf32>
    %1 = vector.shape_cast %0 : vector<1x16x128xf32> to vector<16x128xf32>
    %c0_2 = arith.constant 0 : index
    %c0_3 = arith.constant 0 : index
    %c0_4 = arith.constant 0 : index
    %2 = vector.load %arg2[%c0_2, %c0_3, %c0_4] : memref<1x16x128xf32, #tpu.memory_space<vmem>>, vector<1x16x128xf32>
    %3 = vector.shape_cast %2 : vector<1x16x128xf32> to vector<16x128xf32>
    %c0_5 = arith.constant 0 : index
    %c0_6 = arith.constant 0 : index
    %4 = vector.load %arg3[%c0_5, %c0_6] : memref<16x16xf32, #tpu.memory_space<vmem>>, vector<16x16xf32>
    %c0_7 = arith.constant 0 : index
    %c0_8 = arith.constant 0 : index
    %5 = vector.load %arg4[%c0_7, %c0_8] : memref<128x128xf32, #tpu.memory_space<vmem>>, vector<128x128xf32>
    %c0_9 = arith.constant 0 : index
    %c0_10 = arith.constant 0 : index
    %6 = vector.load %arg5[%c0_9, %c0_10] : memref<16x128xf32, #tpu.memory_space<vmem>>, vector<16x128xf32>
    %c0_11 = arith.constant 0 : index
    %c0_12 = arith.constant 0 : index
    %7 = vector.load %arg6[%c0_11, %c0_12] : memref<16x128xf32, #tpu.memory_space<vmem>>, vector<16x128xf32>
    %c3_i32 = arith.constant 3 : i32
    %c0_i32 = arith.constant 0 : i32
    %8 = arith.cmpi eq, %c3_i32, %c0_i32 : i32
    %c1_i32 = arith.constant 1 : i32
    %9 = arith.select %8, %c1_i32, %c3_i32 : i32
    %10 = arith.remsi %arg0, %9 : i32
    %c0_i32_13 = arith.constant 0 : i32
    %11 = arith.cmpi ne, %10, %c0_i32_13 : i32
    %c0_i32_14 = arith.constant 0 : i32
    %12 = arith.cmpi slt, %10, %c0_i32_14 : i32
    %c0_i32_15 = arith.constant 0 : i32
    %13 = arith.cmpi slt, %9, %c0_i32_15 : i32
    %14 = arith.xori %12, %13 : i1
    %15 = arith.andi %14, %11 : i1
    %16 = arith.addi %10, %9 : i32
    %17 = arith.select %15, %16, %10 : i32
    %c0_i32_16 = arith.constant 0 : i32
    %18 = arith.cmpi eq, %17, %c0_i32_16 : i32
    %cst = arith.constant 0.000000e+00 : f32
    %cst_17 = arith.constant 1.280000e+02 : f32
    %19 = arith.select %18, %cst, %cst_17 : f32
    %20 = arith.mulf %1, %1 : vector<16x128xf32>
    %21 = arith.mulf %3, %3 : vector<16x128xf32>
    %22 = arith.mulf %1, %3 : vector<16x128xf32>
    %23 = tpu.concatenate %1, %3, %20, %21, %22 in 0 : vector<16x128xf32>, vector<16x128xf32>, vector<16x128xf32>, vector<16x128xf32>, vector<16x128xf32> -> vector<80x128xf32>
    %cst_18 = arith.constant dense<0.000000e+00> : vector<80x128xf32>
    %24 = tpu.matmul %23, %5, %cst_18 {dimension_numbers = #tpu.dot_dimension_numbers<[1], [0], [0], [1], [0, 0, 1, 1], [], []>} : vector<80x128xf32>, vector<128x128xf32>, vector<80x128xf32> -> vector<80x128xf32>
    %25 = vector.extract_strided_slice %24 {offsets = [0, 0], sizes = [16, 128], strides = [1, 1]} : vector<80x128xf32> to vector<16x128xf32>
    %cst_19 = arith.constant dense<0.000000e+00> : vector<16x128xf32>
    %26 = tpu.matmul %4, %25, %cst_19 {dimension_numbers = #tpu.dot_dimension_numbers<[1], [0], [0], [1], [0, 0, 1, 1], [], []>} : vector<16x16xf32>, vector<16x128xf32>, vector<16x128xf32> -> vector<16x128xf32>
    %27 = vector.extract_strided_slice %24 {offsets = [16, 0], sizes = [16, 128], strides = [1, 1]} : vector<80x128xf32> to vector<16x128xf32>
    %cst_20 = arith.constant dense<0.000000e+00> : vector<16x128xf32>
    %28 = tpu.matmul %4, %27, %cst_20 {dimension_numbers = #tpu.dot_dimension_numbers<[1], [0], [0], [1], [0, 0, 1, 1], [], []>} : vector<16x16xf32>, vector<16x128xf32>, vector<16x128xf32> -> vector<16x128xf32>
    %29 = vector.extract_strided_slice %24 {offsets = [32, 0], sizes = [16, 128], strides = [1, 1]} : vector<80x128xf32> to vector<16x128xf32>
    %cst_21 = arith.constant dense<0.000000e+00> : vector<16x128xf32>
    %30 = tpu.matmul %4, %29, %cst_21 {dimension_numbers = #tpu.dot_dimension_numbers<[1], [0], [0], [1], [0, 0, 1, 1], [], []>} : vector<16x16xf32>, vector<16x128xf32>, vector<16x128xf32> -> vector<16x128xf32>
    %31 = vector.extract_strided_slice %24 {offsets = [48, 0], sizes = [16, 128], strides = [1, 1]} : vector<80x128xf32> to vector<16x128xf32>
    %cst_22 = arith.constant dense<0.000000e+00> : vector<16x128xf32>
    %32 = tpu.matmul %4, %31, %cst_22 {dimension_numbers = #tpu.dot_dimension_numbers<[1], [0], [0], [1], [0, 0, 1, 1], [], []>} : vector<16x16xf32>, vector<16x128xf32>, vector<16x128xf32> -> vector<16x128xf32>
    %33 = vector.extract_strided_slice %24 {offsets = [64, 0], sizes = [16, 128], strides = [1, 1]} : vector<80x128xf32> to vector<16x128xf32>
    %cst_23 = arith.constant dense<0.000000e+00> : vector<16x128xf32>
    %34 = tpu.matmul %4, %33, %cst_23 {dimension_numbers = #tpu.dot_dimension_numbers<[1], [0], [0], [1], [0, 0, 1, 1], [], []>} : vector<16x16xf32>, vector<16x128xf32>, vector<16x128xf32> -> vector<16x128xf32>
    %cst_24 = arith.constant 1.000000e+00 : f32
    %35 = vector.broadcast %cst_24 : f32 to vector<16x128xf32>
    %36 = arith.subf %35, %6 : vector<16x128xf32>
    %37 = arith.mulf %19, %19 : f32
    %38 = vector.broadcast %37 : f32 to vector<16x128xf32>
    %39 = arith.mulf %38, %6 : vector<16x128xf32>
    %40 = arith.mulf %39, %36 : vector<16x128xf32>
    %41 = vector.broadcast %19 : f32 to vector<16x128xf32>
    %42 = arith.mulf %41, %6 : vector<16x128xf32>
    %43 = arith.addf %26, %42 : vector<16x128xf32>
    %44 = vector.broadcast %19 : f32 to vector<16x128xf32>
    %45 = arith.mulf %44, %6 : vector<16x128xf32>
    %46 = arith.addf %28, %45 : vector<16x128xf32>
    %47 = arith.mulf %43, %43 : vector<16x128xf32>
    %48 = arith.mulf %46, %46 : vector<16x128xf32>
    %49 = arith.mulf %43, %46 : vector<16x128xf32>
    %50 = arith.mulf %26, %26 : vector<16x128xf32>
    %51 = arith.subf %30, %50 : vector<16x128xf32>
    %cst_25 = arith.constant 2.000000e+00 : f32
    %52 = arith.mulf %cst_25, %19 : f32
    %53 = vector.broadcast %52 : f32 to vector<16x128xf32>
    %54 = arith.mulf %53, %26 : vector<16x128xf32>
    %55 = arith.mulf %54, %36 : vector<16x128xf32>
    %56 = arith.addf %51, %55 : vector<16x128xf32>
    %57 = arith.addf %56, %40 : vector<16x128xf32>
    %58 = arith.mulf %28, %28 : vector<16x128xf32>
    %59 = arith.subf %32, %58 : vector<16x128xf32>
    %cst_26 = arith.constant 2.000000e+00 : f32
    %60 = arith.mulf %cst_26, %19 : f32
    %61 = vector.broadcast %60 : f32 to vector<16x128xf32>
    %62 = arith.mulf %61, %28 : vector<16x128xf32>
    %63 = arith.mulf %62, %36 : vector<16x128xf32>
    %64 = arith.addf %59, %63 : vector<16x128xf32>
    %65 = arith.addf %64, %40 : vector<16x128xf32>
    %66 = arith.mulf %26, %28 : vector<16x128xf32>
    %67 = arith.subf %34, %66 : vector<16x128xf32>
    %68 = arith.addf %26, %28 : vector<16x128xf32>
    %69 = vector.broadcast %19 : f32 to vector<16x128xf32>
    %70 = arith.mulf %69, %68 : vector<16x128xf32>
    %71 = arith.mulf %70, %36 : vector<16x128xf32>
    %72 = arith.addf %67, %71 : vector<16x128xf32>
    %73 = arith.addf %72, %40 : vector<16x128xf32>
    %cst_27 = arith.constant 2.000000e+00 : f32
    %74 = vector.broadcast %cst_27 : f32 to vector<16x128xf32>
    %75 = arith.mulf %74, %73 : vector<16x128xf32>
    %cst_28 = arith.constant 8.99999984E-4 : f32
    %76 = vector.broadcast %cst_28 : f32 to vector<16x128xf32>
    %77 = arith.addf %75, %76 : vector<16x128xf32>
    %78 = arith.addf %57, %65 : vector<16x128xf32>
    %cst_29 = arith.constant 8.99999984E-4 : f32
    %79 = vector.broadcast %cst_29 : f32 to vector<16x128xf32>
    %80 = arith.addf %78, %79 : vector<16x128xf32>
    %81 = tpu.reciprocal %80 {approx = true} : vector<16x128xf32> -> vector<16x128xf32>
    %82 = arith.mulf %80, %81 : vector<16x128xf32>
    %cst_30 = arith.constant 2.000000e+00 : f32
    %83 = vector.broadcast %cst_30 : f32 to vector<16x128xf32>
    %84 = arith.subf %83, %82 : vector<16x128xf32>
    %85 = arith.mulf %81, %84 : vector<16x128xf32>
    %86 = arith.mulf %77, %85 : vector<16x128xf32>
    %cst_31 = arith.constant 2.000000e+00 : f32
    %87 = vector.broadcast %cst_31 : f32 to vector<16x128xf32>
    %88 = arith.mulf %87, %49 : vector<16x128xf32>
    %cst_32 = arith.constant 9.99999974E-5 : f32
    %89 = vector.broadcast %cst_32 : f32 to vector<16x128xf32>
    %90 = arith.addf %88, %89 : vector<16x128xf32>
    %91 = arith.addf %47, %48 : vector<16x128xf32>
    %cst_33 = arith.constant 9.99999974E-5 : f32
    %92 = vector.broadcast %cst_33 : f32 to vector<16x128xf32>
    %93 = arith.addf %91, %92 : vector<16x128xf32>
    %94 = tpu.reciprocal %93 {approx = true} : vector<16x128xf32> -> vector<16x128xf32>
    %95 = arith.mulf %93, %94 : vector<16x128xf32>
    %cst_34 = arith.constant 2.000000e+00 : f32
    %96 = vector.broadcast %cst_34 : f32 to vector<16x128xf32>
    %97 = arith.subf %96, %95 : vector<16x128xf32>
    %98 = arith.mulf %94, %97 : vector<16x128xf32>
    %99 = arith.mulf %90, %98 : vector<16x128xf32>
    %100 = arith.mulf %99, %86 : vector<16x128xf32>
    %101 = arith.mulf %100, %7 : vector<16x128xf32>
    %102 = vector.shape_cast %101 : vector<16x128xf32> to vector<1x16x128xf32>
    %cst_35 = arith.constant dense<0.000000e+00> : vector<1xf32>
    %103 = vector.multi_reduction <add>, %102, %cst_35 [1, 2] : vector<1x16x128xf32> to vector<1xf32>
    %104 = vector.shape_cast %103 : vector<1xf32> to vector<1x1x1xf32>
    %105 = vector.extract %104[0, 0, 0] : f32 from vector<1x1x1xf32>
    %106 = vector.broadcast %105 : f32 to vector<1x1xf32>
    %c0_36 = arith.constant 0 : index
    %c0_37 = arith.constant 0 : index
    %c0_38 = arith.constant 0 : index
    %107 = vector.load %arg9[%c0_36, %c0_37, %c0_38] : memref<1x1x1xf32, #tpu.memory_space<vmem>>, vector<1x1x1xf32>
    %108 = vector.shape_cast %107 : vector<1x1x1xf32> to vector<1x1xf32>
    %109 = vector.shape_cast %106 : vector<1x1xf32> to vector<1x1x1xf32>
    tpu.vector_store %arg9[%c0_36, %c0_37, %c0_38], %109 {strides = array<i32>} : memref<1x1x1xf32, #tpu.memory_space<vmem>>, vector<1x1x1xf32>,
    %110 = arith.mulf %86, %7 : vector<16x128xf32>
    %111 = vector.shape_cast %110 : vector<16x128xf32> to vector<1x16x128xf32>
    %cst_39 = arith.constant dense<0.000000e+00> : vector<1xf32>
    %112 = vector.multi_reduction <add>, %111, %cst_39 [1, 2] : vector<1x16x128xf32> to vector<1xf32>
    %113 = vector.shape_cast %112 : vector<1xf32> to vector<1x1x1xf32>
    %114 = vector.extract %113[0, 0, 0] : f32 from vector<1x1x1xf32>
    %115 = vector.broadcast %114 : f32 to vector<1x1xf32>
    %c0_40 = arith.constant 0 : index
    %c0_41 = arith.constant 0 : index
    %c0_42 = arith.constant 0 : index
    %116 = vector.load %arg10[%c0_40, %c0_41, %c0_42] : memref<1x1x1xf32, #tpu.memory_space<vmem>>, vector<1x1x1xf32>
    %117 = vector.shape_cast %116 : vector<1x1x1xf32> to vector<1x1xf32>
    %118 = vector.shape_cast %115 : vector<1x1xf32> to vector<1x1x1xf32>
    tpu.vector_store %arg10[%c0_40, %c0_41, %c0_42], %118 {strides = array<i32>} : memref<1x1x1xf32, #tpu.memory_space<vmem>>, vector<1x1x1xf32>,
    %c0_43 = arith.constant 0 : index
    %c0_44 = arith.constant 0 : index
    %119 = vector.load %arg7[%c0_43, %c0_44] : memref<8x16xf32, #tpu.memory_space<vmem>>, vector<8x16xf32>
    %c0_45 = arith.constant 0 : index
    %c0_46 = arith.constant 0 : index
    %120 = vector.load %arg8[%c0_45, %c0_46] : memref<128x128xf32, #tpu.memory_space<vmem>>, vector<128x128xf32>
    %121 = vector.extract_strided_slice %23 {offsets = [0, 0], sizes = [32, 128], strides = [1, 1]} : vector<80x128xf32> to vector<32x128xf32>
    %cst_47 = arith.constant dense<0.000000e+00> : vector<32x128xf32>
    %122 = tpu.matmul %121, %120, %cst_47 {dimension_numbers = #tpu.dot_dimension_numbers<[1], [0], [0], [1], [0, 0, 1, 1], [], []>} : vector<32x128xf32>, vector<128x128xf32>, vector<32x128xf32> -> vector<32x128xf32>
    %123 = vector.extract_strided_slice %122 {offsets = [0, 0], sizes = [16, 128], strides = [1, 1]} : vector<32x128xf32> to vector<16x128xf32>
    %cst_48 = arith.constant dense<0.000000e+00> : vector<8x128xf32>
    %124 = tpu.matmul %119, %123, %cst_48 {dimension_numbers = #tpu.dot_dimension_numbers<[1], [0], [0], [1], [0, 0, 1, 1], [], []>} : vector<8x16xf32>, vector<16x128xf32>, vector<8x128xf32> -> vector<8x128xf32>
    %c0_49 = arith.constant 0 : index
    %c0_50 = arith.constant 0 : index
    %c0_51 = arith.constant 0 : index
    %125 = vector.load %arg11[%c0_49, %c0_50, %c0_51] : memref<1x8x128xf32, #tpu.memory_space<vmem>>, vector<1x8x128xf32>
    %126 = vector.shape_cast %125 : vector<1x8x128xf32> to vector<8x128xf32>
    %127 = vector.shape_cast %124 : vector<8x128xf32> to vector<1x8x128xf32>
    tpu.vector_store %arg11[%c0_49, %c0_50, %c0_51], %127 {strides = array<i32>} : memref<1x8x128xf32, #tpu.memory_space<vmem>>, vector<1x8x128xf32>,
    %128 = vector.extract_strided_slice %122 {offsets = [16, 0], sizes = [16, 128], strides = [1, 1]} : vector<32x128xf32> to vector<16x128xf32>
    %cst_52 = arith.constant dense<0.000000e+00> : vector<8x128xf32>
    %129 = tpu.matmul %119, %128, %cst_52 {dimension_numbers = #tpu.dot_dimension_numbers<[1], [0], [0], [1], [0, 0, 1, 1], [], []>} : vector<8x16xf32>, vector<16x128xf32>, vector<8x128xf32> -> vector<8x128xf32>
    %c0_53 = arith.constant 0 : index
    %c0_54 = arith.constant 0 : index
    %c0_55 = arith.constant 0 : index
    %130 = vector.load %arg12[%c0_53, %c0_54, %c0_55] : memref<1x8x128xf32, #tpu.memory_space<vmem>>, vector<1x8x128xf32>
    %131 = vector.shape_cast %130 : vector<1x8x128xf32> to vector<8x128xf32>
    %132 = vector.shape_cast %129 : vector<8x128xf32> to vector<1x8x128xf32>
    tpu.vector_store %arg12[%c0_53, %c0_54, %c0_55], %132 {strides = array<i32>} : memref<1x8x128xf32, #tpu.memory_space<vmem>>, vector<1x8x128xf32>,
    return
  }
  func.func @transform_0(%arg0: i32) -> (i32, i32, i32) {
    %c0_i32 = arith.constant 0 : i32
    %c0_i32_0 = arith.constant 0 : i32
    %c0_i32_1 = arith.constant 0 : i32
    return %arg0, %c0_i32, %c0_i32_0 : i32, i32, i32
  }
  func.func @transform_1(%arg0: i32) -> (i32, i32, i32) {
    %c0_i32 = arith.constant 0 : i32
    %c0_i32_0 = arith.constant 0 : i32
    %c0_i32_1 = arith.constant 0 : i32
    return %arg0, %c0_i32, %c0_i32_0 : i32, i32, i32
  }
  func.func @transform_2(%arg0: i32) -> (i32, i32) {
    %c0_i32 = arith.constant 0 : i32
    %c0_i32_0 = arith.constant 0 : i32
    %c0_i32_1 = arith.constant 0 : i32
    return %c0_i32, %c0_i32_0 : i32, i32
  }
  func.func @transform_3(%arg0: i32) -> (i32, i32) {
    %c0_i32 = arith.constant 0 : i32
    %c0_i32_0 = arith.constant 0 : i32
    %c0_i32_1 = arith.constant 0 : i32
    return %c0_i32, %c0_i32_0 : i32, i32
  }
  func.func @transform_4(%arg0: i32) -> (i32, i32) {
    %c0_i32 = arith.constant 0 : i32
    %c0_i32_0 = arith.constant 0 : i32
    %c0_i32_1 = arith.constant 0 : i32
    return %c0_i32, %c0_i32_0 : i32, i32
  }
  func.func @transform_5(%arg0: i32) -> (i32, i32) {
    %c0_i32 = arith.constant 0 : i32
    %c0_i32_0 = arith.constant 0 : i32
    %c0_i32_1 = arith.constant 0 : i32
    return %c0_i32, %c0_i32_0 : i32, i32
  }
  func.func @transform_6(%arg0: i32) -> (i32, i32) {
    %c0_i32 = arith.constant 0 : i32
    %c0_i32_0 = arith.constant 0 : i32
    %c0_i32_1 = arith.constant 0 : i32
    return %c0_i32, %c0_i32_0 : i32, i32
  }
  func.func @transform_7(%arg0: i32) -> (i32, i32) {
    %c0_i32 = arith.constant 0 : i32
    %c0_i32_0 = arith.constant 0 : i32
    %c0_i32_1 = arith.constant 0 : i32
    return %c0_i32, %c0_i32_0 : i32, i32
  }
  func.func @transform_8(%arg0: i32) -> (i32, i32, i32) {
    %c0_i32 = arith.constant 0 : i32
    %c0_i32_0 = arith.constant 0 : i32
    %c0_i32_1 = arith.constant 0 : i32
    return %arg0, %c0_i32, %c0_i32_0 : i32, i32, i32
  }
  func.func @transform_9(%arg0: i32) -> (i32, i32, i32) {
    %c0_i32 = arith.constant 0 : i32
    %c0_i32_0 = arith.constant 0 : i32
    %c0_i32_1 = arith.constant 0 : i32
    return %arg0, %c0_i32, %c0_i32_0 : i32, i32, i32
  }
  func.func @transform_10(%arg0: i32) -> (i32, i32, i32) {
    %c0_i32 = arith.constant 0 : i32
    %c0_i32_0 = arith.constant 0 : i32
    %c0_i32_1 = arith.constant 0 : i32
    return %arg0, %c0_i32, %c0_i32_0 : i32, i32, i32
  }
  func.func @transform_11(%arg0: i32) -> (i32, i32, i32) {
    %c0_i32 = arith.constant 0 : i32
    %c0_i32_0 = arith.constant 0 : i32
    %c0_i32_1 = arith.constant 0 : i32
    return %arg0, %c0_i32, %c0_i32_0 : i32, i32, i32
  }
}

module attributes {stable_mosaic.version = 11 : i64} {
  func.func @kernel(%arg0: i32, %arg1: memref<1x8x128xf32, #tpu.memory_space<vmem>>, %arg2: memref<1x8x128xf32, #tpu.memory_space<vmem>>, %arg3: memref<8x8xf32, #tpu.memory_space<vmem>>, %arg4: memref<128x128xf32, #tpu.memory_space<vmem>>, %arg5: memref<8x128xf32, #tpu.memory_space<vmem>>, %arg6: memref<8x128xf32, #tpu.memory_space<vmem>>, %arg7: memref<8x8xf32, #tpu.memory_space<vmem>>, %arg8: memref<128x128xf32, #tpu.memory_space<vmem>>, %arg9: memref<1x1x1xf32, #tpu.memory_space<vmem>>, %arg10: memref<1x1x1xf32, #tpu.memory_space<vmem>>, %arg11: memref<1x8x128xf32, #tpu.memory_space<vmem>>, %arg12: memref<1x8x128xf32, #tpu.memory_space<vmem>>) attributes {dimension_semantics = [#tpu.dimension_semantics<parallel>], iteration_bounds = array<i64: 6>, scalar_prefetch = 0 : i64, scratch_operands = 0 : i64, tpu.core_type = #tpu.core_type<tc>, window_params = [{transform_indices = @transform_0, window_bounds = array<i64: 1, 8, 128>}, {transform_indices = @transform_1, window_bounds = array<i64: 1, 8, 128>}, {pipeline_mode = #tpu.pipeline_mode<synchronous>, transform_indices = @transform_2, window_bounds = array<i64: 8, 8>}, {pipeline_mode = #tpu.pipeline_mode<synchronous>, transform_indices = @transform_3, window_bounds = array<i64: 128, 128>}, {pipeline_mode = #tpu.pipeline_mode<synchronous>, transform_indices = @transform_4, window_bounds = array<i64: 8, 128>}, {pipeline_mode = #tpu.pipeline_mode<synchronous>, transform_indices = @transform_5, window_bounds = array<i64: 8, 128>}, {pipeline_mode = #tpu.pipeline_mode<synchronous>, transform_indices = @transform_6, window_bounds = array<i64: 8, 8>}, {pipeline_mode = #tpu.pipeline_mode<synchronous>, transform_indices = @transform_7, window_bounds = array<i64: 128, 128>}, {transform_indices = @transform_8, window_bounds = array<i64: 1, 1, 1>}, {transform_indices = @transform_9, window_bounds = array<i64: 1, 1, 1>}, {transform_indices = @transform_10, window_bounds = array<i64: 1, 8, 128>}, {transform_indices = @transform_11, window_bounds = array<i64: 1, 8, 128>}]} {
    %c0 = arith.constant 0 : index
    %c0_0 = arith.constant 0 : index
    %c0_1 = arith.constant 0 : index
    %0 = vector.load %arg1[%c0, %c0_0, %c0_1] : memref<1x8x128xf32, #tpu.memory_space<vmem>>, vector<1x8x128xf32>
    %1 = vector.shape_cast %0 : vector<1x8x128xf32> to vector<8x128xf32>
    %c0_2 = arith.constant 0 : index
    %c0_3 = arith.constant 0 : index
    %c0_4 = arith.constant 0 : index
    %2 = vector.load %arg2[%c0_2, %c0_3, %c0_4] : memref<1x8x128xf32, #tpu.memory_space<vmem>>, vector<1x8x128xf32>
    %3 = vector.shape_cast %2 : vector<1x8x128xf32> to vector<8x128xf32>
    %c0_5 = arith.constant 0 : index
    %c0_6 = arith.constant 0 : index
    %4 = vector.load %arg3[%c0_5, %c0_6] : memref<8x8xf32, #tpu.memory_space<vmem>>, vector<8x8xf32>
    %c0_7 = arith.constant 0 : index
    %c0_8 = arith.constant 0 : index
    %5 = vector.load %arg4[%c0_7, %c0_8] : memref<128x128xf32, #tpu.memory_space<vmem>>, vector<128x128xf32>
    %c0_9 = arith.constant 0 : index
    %c0_10 = arith.constant 0 : index
    %6 = vector.load %arg5[%c0_9, %c0_10] : memref<8x128xf32, #tpu.memory_space<vmem>>, vector<8x128xf32>
    %c0_11 = arith.constant 0 : index
    %c0_12 = arith.constant 0 : index
    %7 = vector.load %arg6[%c0_11, %c0_12] : memref<8x128xf32, #tpu.memory_space<vmem>>, vector<8x128xf32>
    %c3_i32 = arith.constant 3 : i32
    %c0_i32 = arith.constant 0 : i32
    %8 = arith.cmpi eq, %c3_i32, %c0_i32 : i32
    %c1_i32 = arith.constant 1 : i32
    %9 = arith.select %8, %c1_i32, %c3_i32 : i32
    %10 = arith.remsi %arg0, %9 : i32
    %c0_i32_13 = arith.constant 0 : i32
    %11 = arith.cmpi ne, %10, %c0_i32_13 : i32
    %c0_i32_14 = arith.constant 0 : i32
    %12 = arith.cmpi slt, %10, %c0_i32_14 : i32
    %c0_i32_15 = arith.constant 0 : i32
    %13 = arith.cmpi slt, %9, %c0_i32_15 : i32
    %14 = arith.xori %12, %13 : i1
    %15 = arith.andi %14, %11 : i1
    %16 = arith.addi %10, %9 : i32
    %17 = arith.select %15, %16, %10 : i32
    %c0_i32_16 = arith.constant 0 : i32
    %18 = arith.cmpi eq, %17, %c0_i32_16 : i32
    %cst = arith.constant 0.000000e+00 : f32
    %cst_17 = arith.constant 1.280000e+02 : f32
    %19 = arith.select %18, %cst, %cst_17 : f32
    %20 = arith.mulf %1, %1 : vector<8x128xf32>
    %21 = arith.mulf %3, %3 : vector<8x128xf32>
    %22 = arith.mulf %1, %3 : vector<8x128xf32>
    %23 = tpu.concatenate %1, %3, %20, %21, %22 in 0 : vector<8x128xf32>, vector<8x128xf32>, vector<8x128xf32>, vector<8x128xf32>, vector<8x128xf32> -> vector<40x128xf32>
    %cst_18 = arith.constant dense<0.000000e+00> : vector<40x128xf32>
    %24 = tpu.matmul %23, %5, %cst_18 {dimension_numbers = #tpu.dot_dimension_numbers<[1], [0], [0], [1], [0, 0, 1, 1], [], []>} : vector<40x128xf32>, vector<128x128xf32>, vector<40x128xf32> -> vector<40x128xf32>
    %25 = vector.extract_strided_slice %24 {offsets = [0, 0], sizes = [8, 128], strides = [1, 1]} : vector<40x128xf32> to vector<8x128xf32>
    %cst_19 = arith.constant dense<0.000000e+00> : vector<8x128xf32>
    %26 = tpu.matmul %4, %25, %cst_19 {dimension_numbers = #tpu.dot_dimension_numbers<[1], [0], [0], [1], [0, 0, 1, 1], [], []>} : vector<8x8xf32>, vector<8x128xf32>, vector<8x128xf32> -> vector<8x128xf32>
    %27 = vector.extract_strided_slice %24 {offsets = [8, 0], sizes = [8, 128], strides = [1, 1]} : vector<40x128xf32> to vector<8x128xf32>
    %cst_20 = arith.constant dense<0.000000e+00> : vector<8x128xf32>
    %28 = tpu.matmul %4, %27, %cst_20 {dimension_numbers = #tpu.dot_dimension_numbers<[1], [0], [0], [1], [0, 0, 1, 1], [], []>} : vector<8x8xf32>, vector<8x128xf32>, vector<8x128xf32> -> vector<8x128xf32>
    %29 = vector.extract_strided_slice %24 {offsets = [16, 0], sizes = [8, 128], strides = [1, 1]} : vector<40x128xf32> to vector<8x128xf32>
    %cst_21 = arith.constant dense<0.000000e+00> : vector<8x128xf32>
    %30 = tpu.matmul %4, %29, %cst_21 {dimension_numbers = #tpu.dot_dimension_numbers<[1], [0], [0], [1], [0, 0, 1, 1], [], []>} : vector<8x8xf32>, vector<8x128xf32>, vector<8x128xf32> -> vector<8x128xf32>
    %31 = vector.extract_strided_slice %24 {offsets = [24, 0], sizes = [8, 128], strides = [1, 1]} : vector<40x128xf32> to vector<8x128xf32>
    %cst_22 = arith.constant dense<0.000000e+00> : vector<8x128xf32>
    %32 = tpu.matmul %4, %31, %cst_22 {dimension_numbers = #tpu.dot_dimension_numbers<[1], [0], [0], [1], [0, 0, 1, 1], [], []>} : vector<8x8xf32>, vector<8x128xf32>, vector<8x128xf32> -> vector<8x128xf32>
    %33 = vector.extract_strided_slice %24 {offsets = [32, 0], sizes = [8, 128], strides = [1, 1]} : vector<40x128xf32> to vector<8x128xf32>
    %cst_23 = arith.constant dense<0.000000e+00> : vector<8x128xf32>
    %34 = tpu.matmul %4, %33, %cst_23 {dimension_numbers = #tpu.dot_dimension_numbers<[1], [0], [0], [1], [0, 0, 1, 1], [], []>} : vector<8x8xf32>, vector<8x128xf32>, vector<8x128xf32> -> vector<8x128xf32>
    %cst_24 = arith.constant 1.000000e+00 : f32
    %35 = vector.broadcast %cst_24 : f32 to vector<8x128xf32>
    %36 = arith.subf %35, %6 : vector<8x128xf32>
    %37 = arith.mulf %19, %19 : f32
    %38 = vector.broadcast %37 : f32 to vector<8x128xf32>
    %39 = arith.mulf %38, %6 : vector<8x128xf32>
    %40 = arith.mulf %39, %36 : vector<8x128xf32>
    %41 = vector.broadcast %19 : f32 to vector<8x128xf32>
    %42 = arith.mulf %41, %6 : vector<8x128xf32>
    %43 = arith.addf %26, %42 : vector<8x128xf32>
    %44 = vector.broadcast %19 : f32 to vector<8x128xf32>
    %45 = arith.mulf %44, %6 : vector<8x128xf32>
    %46 = arith.addf %28, %45 : vector<8x128xf32>
    %47 = arith.mulf %43, %43 : vector<8x128xf32>
    %48 = arith.mulf %46, %46 : vector<8x128xf32>
    %49 = arith.mulf %43, %46 : vector<8x128xf32>
    %50 = arith.mulf %26, %26 : vector<8x128xf32>
    %51 = arith.subf %30, %50 : vector<8x128xf32>
    %cst_25 = arith.constant 2.000000e+00 : f32
    %52 = arith.mulf %cst_25, %19 : f32
    %53 = vector.broadcast %52 : f32 to vector<8x128xf32>
    %54 = arith.mulf %53, %26 : vector<8x128xf32>
    %55 = arith.mulf %54, %36 : vector<8x128xf32>
    %56 = arith.addf %51, %55 : vector<8x128xf32>
    %57 = arith.addf %56, %40 : vector<8x128xf32>
    %58 = arith.mulf %28, %28 : vector<8x128xf32>
    %59 = arith.subf %32, %58 : vector<8x128xf32>
    %cst_26 = arith.constant 2.000000e+00 : f32
    %60 = arith.mulf %cst_26, %19 : f32
    %61 = vector.broadcast %60 : f32 to vector<8x128xf32>
    %62 = arith.mulf %61, %28 : vector<8x128xf32>
    %63 = arith.mulf %62, %36 : vector<8x128xf32>
    %64 = arith.addf %59, %63 : vector<8x128xf32>
    %65 = arith.addf %64, %40 : vector<8x128xf32>
    %66 = arith.mulf %26, %28 : vector<8x128xf32>
    %67 = arith.subf %34, %66 : vector<8x128xf32>
    %68 = arith.addf %26, %28 : vector<8x128xf32>
    %69 = vector.broadcast %19 : f32 to vector<8x128xf32>
    %70 = arith.mulf %69, %68 : vector<8x128xf32>
    %71 = arith.mulf %70, %36 : vector<8x128xf32>
    %72 = arith.addf %67, %71 : vector<8x128xf32>
    %73 = arith.addf %72, %40 : vector<8x128xf32>
    %cst_27 = arith.constant 2.000000e+00 : f32
    %74 = vector.broadcast %cst_27 : f32 to vector<8x128xf32>
    %75 = arith.mulf %74, %73 : vector<8x128xf32>
    %cst_28 = arith.constant 8.99999984E-4 : f32
    %76 = vector.broadcast %cst_28 : f32 to vector<8x128xf32>
    %77 = arith.addf %75, %76 : vector<8x128xf32>
    %78 = arith.addf %57, %65 : vector<8x128xf32>
    %cst_29 = arith.constant 8.99999984E-4 : f32
    %79 = vector.broadcast %cst_29 : f32 to vector<8x128xf32>
    %80 = arith.addf %78, %79 : vector<8x128xf32>
    %81 = tpu.reciprocal %80 {approx = true} : vector<8x128xf32> -> vector<8x128xf32>
    %82 = arith.mulf %80, %81 : vector<8x128xf32>
    %cst_30 = arith.constant 2.000000e+00 : f32
    %83 = vector.broadcast %cst_30 : f32 to vector<8x128xf32>
    %84 = arith.subf %83, %82 : vector<8x128xf32>
    %85 = arith.mulf %81, %84 : vector<8x128xf32>
    %86 = arith.mulf %77, %85 : vector<8x128xf32>
    %cst_31 = arith.constant 2.000000e+00 : f32
    %87 = vector.broadcast %cst_31 : f32 to vector<8x128xf32>
    %88 = arith.mulf %87, %49 : vector<8x128xf32>
    %cst_32 = arith.constant 9.99999974E-5 : f32
    %89 = vector.broadcast %cst_32 : f32 to vector<8x128xf32>
    %90 = arith.addf %88, %89 : vector<8x128xf32>
    %91 = arith.addf %47, %48 : vector<8x128xf32>
    %cst_33 = arith.constant 9.99999974E-5 : f32
    %92 = vector.broadcast %cst_33 : f32 to vector<8x128xf32>
    %93 = arith.addf %91, %92 : vector<8x128xf32>
    %94 = tpu.reciprocal %93 {approx = true} : vector<8x128xf32> -> vector<8x128xf32>
    %95 = arith.mulf %93, %94 : vector<8x128xf32>
    %cst_34 = arith.constant 2.000000e+00 : f32
    %96 = vector.broadcast %cst_34 : f32 to vector<8x128xf32>
    %97 = arith.subf %96, %95 : vector<8x128xf32>
    %98 = arith.mulf %94, %97 : vector<8x128xf32>
    %99 = arith.mulf %90, %98 : vector<8x128xf32>
    %100 = arith.mulf %99, %86 : vector<8x128xf32>
    %101 = arith.mulf %100, %7 : vector<8x128xf32>
    %102 = vector.shape_cast %101 : vector<8x128xf32> to vector<1x8x128xf32>
    %cst_35 = arith.constant dense<0.000000e+00> : vector<1xf32>
    %103 = vector.multi_reduction <add>, %102, %cst_35 [1, 2] : vector<1x8x128xf32> to vector<1xf32>
    %104 = vector.shape_cast %103 : vector<1xf32> to vector<1x1x1xf32>
    %105 = vector.extract %104[0, 0, 0] : f32 from vector<1x1x1xf32>
    %106 = vector.broadcast %105 : f32 to vector<1x1xf32>
    %c0_36 = arith.constant 0 : index
    %c0_37 = arith.constant 0 : index
    %c0_38 = arith.constant 0 : index
    %107 = vector.load %arg9[%c0_36, %c0_37, %c0_38] : memref<1x1x1xf32, #tpu.memory_space<vmem>>, vector<1x1x1xf32>
    %108 = vector.shape_cast %107 : vector<1x1x1xf32> to vector<1x1xf32>
    %109 = vector.shape_cast %106 : vector<1x1xf32> to vector<1x1x1xf32>
    tpu.vector_store %arg9[%c0_36, %c0_37, %c0_38], %109 {strides = array<i32>} : memref<1x1x1xf32, #tpu.memory_space<vmem>>, vector<1x1x1xf32>,
    %110 = arith.mulf %86, %7 : vector<8x128xf32>
    %111 = vector.shape_cast %110 : vector<8x128xf32> to vector<1x8x128xf32>
    %cst_39 = arith.constant dense<0.000000e+00> : vector<1xf32>
    %112 = vector.multi_reduction <add>, %111, %cst_39 [1, 2] : vector<1x8x128xf32> to vector<1xf32>
    %113 = vector.shape_cast %112 : vector<1xf32> to vector<1x1x1xf32>
    %114 = vector.extract %113[0, 0, 0] : f32 from vector<1x1x1xf32>
    %115 = vector.broadcast %114 : f32 to vector<1x1xf32>
    %c0_40 = arith.constant 0 : index
    %c0_41 = arith.constant 0 : index
    %c0_42 = arith.constant 0 : index
    %116 = vector.load %arg10[%c0_40, %c0_41, %c0_42] : memref<1x1x1xf32, #tpu.memory_space<vmem>>, vector<1x1x1xf32>
    %117 = vector.shape_cast %116 : vector<1x1x1xf32> to vector<1x1xf32>
    %118 = vector.shape_cast %115 : vector<1x1xf32> to vector<1x1x1xf32>
    tpu.vector_store %arg10[%c0_40, %c0_41, %c0_42], %118 {strides = array<i32>} : memref<1x1x1xf32, #tpu.memory_space<vmem>>, vector<1x1x1xf32>,
    %c0_43 = arith.constant 0 : index
    %c0_44 = arith.constant 0 : index
    %119 = vector.load %arg7[%c0_43, %c0_44] : memref<8x8xf32, #tpu.memory_space<vmem>>, vector<8x8xf32>
    %c0_45 = arith.constant 0 : index
    %c0_46 = arith.constant 0 : index
    %120 = vector.load %arg8[%c0_45, %c0_46] : memref<128x128xf32, #tpu.memory_space<vmem>>, vector<128x128xf32>
    %121 = vector.extract_strided_slice %23 {offsets = [0, 0], sizes = [16, 128], strides = [1, 1]} : vector<40x128xf32> to vector<16x128xf32>
    %cst_47 = arith.constant dense<0.000000e+00> : vector<16x128xf32>
    %122 = tpu.matmul %121, %120, %cst_47 {dimension_numbers = #tpu.dot_dimension_numbers<[1], [0], [0], [1], [0, 0, 1, 1], [], []>} : vector<16x128xf32>, vector<128x128xf32>, vector<16x128xf32> -> vector<16x128xf32>
    %123 = vector.extract_strided_slice %122 {offsets = [0, 0], sizes = [8, 128], strides = [1, 1]} : vector<16x128xf32> to vector<8x128xf32>
    %cst_48 = arith.constant dense<0.000000e+00> : vector<8x128xf32>
    %124 = tpu.matmul %119, %123, %cst_48 {dimension_numbers = #tpu.dot_dimension_numbers<[1], [0], [0], [1], [0, 0, 1, 1], [], []>} : vector<8x8xf32>, vector<8x128xf32>, vector<8x128xf32> -> vector<8x128xf32>
    %c0_49 = arith.constant 0 : index
    %c0_50 = arith.constant 0 : index
    %c0_51 = arith.constant 0 : index
    %125 = vector.load %arg11[%c0_49, %c0_50, %c0_51] : memref<1x8x128xf32, #tpu.memory_space<vmem>>, vector<1x8x128xf32>
    %126 = vector.shape_cast %125 : vector<1x8x128xf32> to vector<8x128xf32>
    %127 = vector.shape_cast %124 : vector<8x128xf32> to vector<1x8x128xf32>
    tpu.vector_store %arg11[%c0_49, %c0_50, %c0_51], %127 {strides = array<i32>} : memref<1x8x128xf32, #tpu.memory_space<vmem>>, vector<1x8x128xf32>,
    %128 = vector.extract_strided_slice %122 {offsets = [8, 0], sizes = [8, 128], strides = [1, 1]} : vector<16x128xf32> to vector<8x128xf32>
    %cst_52 = arith.constant dense<0.000000e+00> : vector<8x128xf32>
    %129 = tpu.matmul %119, %128, %cst_52 {dimension_numbers = #tpu.dot_dimension_numbers<[1], [0], [0], [1], [0, 0, 1, 1], [], []>} : vector<8x8xf32>, vector<8x128xf32>, vector<8x128xf32> -> vector<8x128xf32>
    %c0_53 = arith.constant 0 : index
    %c0_54 = arith.constant 0 : index
    %c0_55 = arith.constant 0 : index
    %130 = vector.load %arg12[%c0_53, %c0_54, %c0_55] : memref<1x8x128xf32, #tpu.memory_space<vmem>>, vector<1x8x128xf32>
    %131 = vector.shape_cast %130 : vector<1x8x128xf32> to vector<8x128xf32>
    %132 = vector.shape_cast %129 : vector<8x128xf32> to vector<1x8x128xf32>
    tpu.vector_store %arg12[%c0_53, %c0_54, %c0_55], %132 {strides = array<i32>} : memref<1x8x128xf32, #tpu.memory_space<vmem>>, vector<1x8x128xf32>,
    return
  }
  func.func @transform_0(%arg0: i32) -> (i32, i32, i32) {
    %c0_i32 = arith.constant 0 : i32
    %c0_i32_0 = arith.constant 0 : i32
    %c0_i32_1 = arith.constant 0 : i32
    return %arg0, %c0_i32, %c0_i32_0 : i32, i32, i32
  }
  func.func @transform_1(%arg0: i32) -> (i32, i32, i32) {
    %c0_i32 = arith.constant 0 : i32
    %c0_i32_0 = arith.constant 0 : i32
    %c0_i32_1 = arith.constant 0 : i32
    return %arg0, %c0_i32, %c0_i32_0 : i32, i32, i32
  }
  func.func @transform_2(%arg0: i32) -> (i32, i32) {
    %c0_i32 = arith.constant 0 : i32
    %c0_i32_0 = arith.constant 0 : i32
    %c0_i32_1 = arith.constant 0 : i32
    return %c0_i32, %c0_i32_0 : i32, i32
  }
  func.func @transform_3(%arg0: i32) -> (i32, i32) {
    %c0_i32 = arith.constant 0 : i32
    %c0_i32_0 = arith.constant 0 : i32
    %c0_i32_1 = arith.constant 0 : i32
    return %c0_i32, %c0_i32_0 : i32, i32
  }
  func.func @transform_4(%arg0: i32) -> (i32, i32) {
    %c0_i32 = arith.constant 0 : i32
    %c0_i32_0 = arith.constant 0 : i32
    %c0_i32_1 = arith.constant 0 : i32
    return %c0_i32, %c0_i32_0 : i32, i32
  }
  func.func @transform_5(%arg0: i32) -> (i32, i32) {
    %c0_i32 = arith.constant 0 : i32
    %c0_i32_0 = arith.constant 0 : i32
    %c0_i32_1 = arith.constant 0 : i32
    return %c0_i32, %c0_i32_0 : i32, i32
  }
  func.func @transform_6(%arg0: i32) -> (i32, i32) {
    %c0_i32 = arith.constant 0 : i32
    %c0_i32_0 = arith.constant 0 : i32
    %c0_i32_1 = arith.constant 0 : i32
    return %c0_i32, %c0_i32_0 : i32, i32
  }
  func.func @transform_7(%arg0: i32) -> (i32, i32) {
    %c0_i32 = arith.constant 0 : i32
    %c0_i32_0 = arith.constant 0 : i32
    %c0_i32_1 = arith.constant 0 : i32
    return %c0_i32, %c0_i32_0 : i32, i32
  }
  func.func @transform_8(%arg0: i32) -> (i32, i32, i32) {
    %c0_i32 = arith.constant 0 : i32
    %c0_i32_0 = arith.constant 0 : i32
    %c0_i32_1 = arith.constant 0 : i32
    return %arg0, %c0_i32, %c0_i32_0 : i32, i32, i32
  }
  func.func @transform_9(%arg0: i32) -> (i32, i32, i32) {
    %c0_i32 = arith.constant 0 : i32
    %c0_i32_0 = arith.constant 0 : i32
    %c0_i32_1 = arith.constant 0 : i32
    return %arg0, %c0_i32, %c0_i32_0 : i32, i32, i32
  }
  func.func @transform_10(%arg0: i32) -> (i32, i32, i32) {
    %c0_i32 = arith.constant 0 : i32
    %c0_i32_0 = arith.constant 0 : i32
    %c0_i32_1 = arith.constant 0 : i32
    return %arg0, %c0_i32, %c0_i32_0 : i32, i32, i32
  }
  func.func @transform_11(%arg0: i32) -> (i32, i32, i32) {
    %c0_i32 = arith.constant 0 : i32
    %c0_i32_0 = arith.constant 0 : i32
    %c0_i32_1 = arith.constant 0 : i32
    return %arg0, %c0_i32, %c0_i32_0 : i32, i32, i32
  }
}

module attributes {stable_mosaic.version = 11 : i64} {
  func.func @kernel(%arg0: i32, %arg1: memref<1x8x128xf32, #tpu.memory_space<vmem>>, %arg2: memref<1x8x128xf32, #tpu.memory_space<vmem>>, %arg3: memref<8x8xf32, #tpu.memory_space<vmem>>, %arg4: memref<128x128xf32, #tpu.memory_space<vmem>>, %arg5: memref<8x128xf32, #tpu.memory_space<vmem>>, %arg6: memref<8x128xf32, #tpu.memory_space<vmem>>, %arg7: memref<1x1x1xf32, #tpu.memory_space<vmem>>, %arg8: memref<1x1x1xf32, #tpu.memory_space<vmem>>) attributes {dimension_semantics = [#tpu.dimension_semantics<parallel>], iteration_bounds = array<i64: 6>, scalar_prefetch = 0 : i64, scratch_operands = 0 : i64, tpu.core_type = #tpu.core_type<tc>, window_params = [{transform_indices = @transform_0, window_bounds = array<i64: 1, 8, 128>}, {transform_indices = @transform_1, window_bounds = array<i64: 1, 8, 128>}, {pipeline_mode = #tpu.pipeline_mode<synchronous>, transform_indices = @transform_2, window_bounds = array<i64: 8, 8>}, {pipeline_mode = #tpu.pipeline_mode<synchronous>, transform_indices = @transform_3, window_bounds = array<i64: 128, 128>}, {pipeline_mode = #tpu.pipeline_mode<synchronous>, transform_indices = @transform_4, window_bounds = array<i64: 8, 128>}, {pipeline_mode = #tpu.pipeline_mode<synchronous>, transform_indices = @transform_5, window_bounds = array<i64: 8, 128>}, {transform_indices = @transform_6, window_bounds = array<i64: 1, 1, 1>}, {transform_indices = @transform_7, window_bounds = array<i64: 1, 1, 1>}]} {
    %c0 = arith.constant 0 : index
    %c0_0 = arith.constant 0 : index
    %c0_1 = arith.constant 0 : index
    %0 = vector.load %arg1[%c0, %c0_0, %c0_1] : memref<1x8x128xf32, #tpu.memory_space<vmem>>, vector<1x8x128xf32>
    %1 = vector.shape_cast %0 : vector<1x8x128xf32> to vector<8x128xf32>
    %c0_2 = arith.constant 0 : index
    %c0_3 = arith.constant 0 : index
    %c0_4 = arith.constant 0 : index
    %2 = vector.load %arg2[%c0_2, %c0_3, %c0_4] : memref<1x8x128xf32, #tpu.memory_space<vmem>>, vector<1x8x128xf32>
    %3 = vector.shape_cast %2 : vector<1x8x128xf32> to vector<8x128xf32>
    %c0_5 = arith.constant 0 : index
    %c0_6 = arith.constant 0 : index
    %4 = vector.load %arg3[%c0_5, %c0_6] : memref<8x8xf32, #tpu.memory_space<vmem>>, vector<8x8xf32>
    %c0_7 = arith.constant 0 : index
    %c0_8 = arith.constant 0 : index
    %5 = vector.load %arg4[%c0_7, %c0_8] : memref<128x128xf32, #tpu.memory_space<vmem>>, vector<128x128xf32>
    %c0_9 = arith.constant 0 : index
    %c0_10 = arith.constant 0 : index
    %6 = vector.load %arg5[%c0_9, %c0_10] : memref<8x128xf32, #tpu.memory_space<vmem>>, vector<8x128xf32>
    %c0_11 = arith.constant 0 : index
    %c0_12 = arith.constant 0 : index
    %7 = vector.load %arg6[%c0_11, %c0_12] : memref<8x128xf32, #tpu.memory_space<vmem>>, vector<8x128xf32>
    %c3_i32 = arith.constant 3 : i32
    %c0_i32 = arith.constant 0 : i32
    %8 = arith.cmpi eq, %c3_i32, %c0_i32 : i32
    %c1_i32 = arith.constant 1 : i32
    %9 = arith.select %8, %c1_i32, %c3_i32 : i32
    %10 = arith.remsi %arg0, %9 : i32
    %c0_i32_13 = arith.constant 0 : i32
    %11 = arith.cmpi ne, %10, %c0_i32_13 : i32
    %c0_i32_14 = arith.constant 0 : i32
    %12 = arith.cmpi slt, %10, %c0_i32_14 : i32
    %c0_i32_15 = arith.constant 0 : i32
    %13 = arith.cmpi slt, %9, %c0_i32_15 : i32
    %14 = arith.xori %12, %13 : i1
    %15 = arith.andi %14, %11 : i1
    %16 = arith.addi %10, %9 : i32
    %17 = arith.select %15, %16, %10 : i32
    %c0_i32_16 = arith.constant 0 : i32
    %18 = arith.cmpi eq, %17, %c0_i32_16 : i32
    %cst = arith.constant 0.000000e+00 : f32
    %cst_17 = arith.constant 1.280000e+02 : f32
    %19 = arith.select %18, %cst, %cst_17 : f32
    %20 = arith.mulf %1, %1 : vector<8x128xf32>
    %21 = arith.mulf %3, %3 : vector<8x128xf32>
    %22 = arith.mulf %1, %3 : vector<8x128xf32>
    %23 = tpu.concatenate %1, %3, %20, %21, %22 in 0 : vector<8x128xf32>, vector<8x128xf32>, vector<8x128xf32>, vector<8x128xf32>, vector<8x128xf32> -> vector<40x128xf32>
    %cst_18 = arith.constant dense<0.000000e+00> : vector<40x128xf32>
    %24 = tpu.matmul %23, %5, %cst_18 {dimension_numbers = #tpu.dot_dimension_numbers<[1], [0], [0], [1], [0, 0, 1, 1], [], []>} : vector<40x128xf32>, vector<128x128xf32>, vector<40x128xf32> -> vector<40x128xf32>
    %25 = vector.extract_strided_slice %24 {offsets = [0, 0], sizes = [8, 128], strides = [1, 1]} : vector<40x128xf32> to vector<8x128xf32>
    %cst_19 = arith.constant dense<0.000000e+00> : vector<8x128xf32>
    %26 = tpu.matmul %4, %25, %cst_19 {dimension_numbers = #tpu.dot_dimension_numbers<[1], [0], [0], [1], [0, 0, 1, 1], [], []>} : vector<8x8xf32>, vector<8x128xf32>, vector<8x128xf32> -> vector<8x128xf32>
    %27 = vector.extract_strided_slice %24 {offsets = [8, 0], sizes = [8, 128], strides = [1, 1]} : vector<40x128xf32> to vector<8x128xf32>
    %cst_20 = arith.constant dense<0.000000e+00> : vector<8x128xf32>
    %28 = tpu.matmul %4, %27, %cst_20 {dimension_numbers = #tpu.dot_dimension_numbers<[1], [0], [0], [1], [0, 0, 1, 1], [], []>} : vector<8x8xf32>, vector<8x128xf32>, vector<8x128xf32> -> vector<8x128xf32>
    %29 = vector.extract_strided_slice %24 {offsets = [16, 0], sizes = [8, 128], strides = [1, 1]} : vector<40x128xf32> to vector<8x128xf32>
    %cst_21 = arith.constant dense<0.000000e+00> : vector<8x128xf32>
    %30 = tpu.matmul %4, %29, %cst_21 {dimension_numbers = #tpu.dot_dimension_numbers<[1], [0], [0], [1], [0, 0, 1, 1], [], []>} : vector<8x8xf32>, vector<8x128xf32>, vector<8x128xf32> -> vector<8x128xf32>
    %31 = vector.extract_strided_slice %24 {offsets = [24, 0], sizes = [8, 128], strides = [1, 1]} : vector<40x128xf32> to vector<8x128xf32>
    %cst_22 = arith.constant dense<0.000000e+00> : vector<8x128xf32>
    %32 = tpu.matmul %4, %31, %cst_22 {dimension_numbers = #tpu.dot_dimension_numbers<[1], [0], [0], [1], [0, 0, 1, 1], [], []>} : vector<8x8xf32>, vector<8x128xf32>, vector<8x128xf32> -> vector<8x128xf32>
    %33 = vector.extract_strided_slice %24 {offsets = [32, 0], sizes = [8, 128], strides = [1, 1]} : vector<40x128xf32> to vector<8x128xf32>
    %cst_23 = arith.constant dense<0.000000e+00> : vector<8x128xf32>
    %34 = tpu.matmul %4, %33, %cst_23 {dimension_numbers = #tpu.dot_dimension_numbers<[1], [0], [0], [1], [0, 0, 1, 1], [], []>} : vector<8x8xf32>, vector<8x128xf32>, vector<8x128xf32> -> vector<8x128xf32>
    %cst_24 = arith.constant 1.000000e+00 : f32
    %35 = vector.broadcast %cst_24 : f32 to vector<8x128xf32>
    %36 = arith.subf %35, %6 : vector<8x128xf32>
    %37 = arith.mulf %19, %19 : f32
    %38 = vector.broadcast %37 : f32 to vector<8x128xf32>
    %39 = arith.mulf %38, %6 : vector<8x128xf32>
    %40 = arith.mulf %39, %36 : vector<8x128xf32>
    %41 = vector.broadcast %19 : f32 to vector<8x128xf32>
    %42 = arith.mulf %41, %6 : vector<8x128xf32>
    %43 = arith.addf %26, %42 : vector<8x128xf32>
    %44 = vector.broadcast %19 : f32 to vector<8x128xf32>
    %45 = arith.mulf %44, %6 : vector<8x128xf32>
    %46 = arith.addf %28, %45 : vector<8x128xf32>
    %47 = arith.mulf %43, %43 : vector<8x128xf32>
    %48 = arith.mulf %46, %46 : vector<8x128xf32>
    %49 = arith.mulf %43, %46 : vector<8x128xf32>
    %50 = arith.mulf %26, %26 : vector<8x128xf32>
    %51 = arith.subf %30, %50 : vector<8x128xf32>
    %cst_25 = arith.constant 2.000000e+00 : f32
    %52 = arith.mulf %cst_25, %19 : f32
    %53 = vector.broadcast %52 : f32 to vector<8x128xf32>
    %54 = arith.mulf %53, %26 : vector<8x128xf32>
    %55 = arith.mulf %54, %36 : vector<8x128xf32>
    %56 = arith.addf %51, %55 : vector<8x128xf32>
    %57 = arith.addf %56, %40 : vector<8x128xf32>
    %58 = arith.mulf %28, %28 : vector<8x128xf32>
    %59 = arith.subf %32, %58 : vector<8x128xf32>
    %cst_26 = arith.constant 2.000000e+00 : f32
    %60 = arith.mulf %cst_26, %19 : f32
    %61 = vector.broadcast %60 : f32 to vector<8x128xf32>
    %62 = arith.mulf %61, %28 : vector<8x128xf32>
    %63 = arith.mulf %62, %36 : vector<8x128xf32>
    %64 = arith.addf %59, %63 : vector<8x128xf32>
    %65 = arith.addf %64, %40 : vector<8x128xf32>
    %66 = arith.mulf %26, %28 : vector<8x128xf32>
    %67 = arith.subf %34, %66 : vector<8x128xf32>
    %68 = arith.addf %26, %28 : vector<8x128xf32>
    %69 = vector.broadcast %19 : f32 to vector<8x128xf32>
    %70 = arith.mulf %69, %68 : vector<8x128xf32>
    %71 = arith.mulf %70, %36 : vector<8x128xf32>
    %72 = arith.addf %67, %71 : vector<8x128xf32>
    %73 = arith.addf %72, %40 : vector<8x128xf32>
    %cst_27 = arith.constant 2.000000e+00 : f32
    %74 = vector.broadcast %cst_27 : f32 to vector<8x128xf32>
    %75 = arith.mulf %74, %73 : vector<8x128xf32>
    %cst_28 = arith.constant 8.99999984E-4 : f32
    %76 = vector.broadcast %cst_28 : f32 to vector<8x128xf32>
    %77 = arith.addf %75, %76 : vector<8x128xf32>
    %78 = arith.addf %57, %65 : vector<8x128xf32>
    %cst_29 = arith.constant 8.99999984E-4 : f32
    %79 = vector.broadcast %cst_29 : f32 to vector<8x128xf32>
    %80 = arith.addf %78, %79 : vector<8x128xf32>
    %81 = tpu.reciprocal %80 {approx = true} : vector<8x128xf32> -> vector<8x128xf32>
    %82 = arith.mulf %80, %81 : vector<8x128xf32>
    %cst_30 = arith.constant 2.000000e+00 : f32
    %83 = vector.broadcast %cst_30 : f32 to vector<8x128xf32>
    %84 = arith.subf %83, %82 : vector<8x128xf32>
    %85 = arith.mulf %81, %84 : vector<8x128xf32>
    %86 = arith.mulf %77, %85 : vector<8x128xf32>
    %cst_31 = arith.constant 2.000000e+00 : f32
    %87 = vector.broadcast %cst_31 : f32 to vector<8x128xf32>
    %88 = arith.mulf %87, %49 : vector<8x128xf32>
    %cst_32 = arith.constant 9.99999974E-5 : f32
    %89 = vector.broadcast %cst_32 : f32 to vector<8x128xf32>
    %90 = arith.addf %88, %89 : vector<8x128xf32>
    %91 = arith.addf %47, %48 : vector<8x128xf32>
    %cst_33 = arith.constant 9.99999974E-5 : f32
    %92 = vector.broadcast %cst_33 : f32 to vector<8x128xf32>
    %93 = arith.addf %91, %92 : vector<8x128xf32>
    %94 = tpu.reciprocal %93 {approx = true} : vector<8x128xf32> -> vector<8x128xf32>
    %95 = arith.mulf %93, %94 : vector<8x128xf32>
    %cst_34 = arith.constant 2.000000e+00 : f32
    %96 = vector.broadcast %cst_34 : f32 to vector<8x128xf32>
    %97 = arith.subf %96, %95 : vector<8x128xf32>
    %98 = arith.mulf %94, %97 : vector<8x128xf32>
    %99 = arith.mulf %90, %98 : vector<8x128xf32>
    %100 = arith.mulf %99, %86 : vector<8x128xf32>
    %101 = arith.mulf %100, %7 : vector<8x128xf32>
    %102 = vector.shape_cast %101 : vector<8x128xf32> to vector<1x8x128xf32>
    %cst_35 = arith.constant dense<0.000000e+00> : vector<1xf32>
    %103 = vector.multi_reduction <add>, %102, %cst_35 [1, 2] : vector<1x8x128xf32> to vector<1xf32>
    %104 = vector.shape_cast %103 : vector<1xf32> to vector<1x1x1xf32>
    %105 = vector.extract %104[0, 0, 0] : f32 from vector<1x1x1xf32>
    %106 = vector.broadcast %105 : f32 to vector<1x1xf32>
    %c0_36 = arith.constant 0 : index
    %c0_37 = arith.constant 0 : index
    %c0_38 = arith.constant 0 : index
    %107 = vector.load %arg7[%c0_36, %c0_37, %c0_38] : memref<1x1x1xf32, #tpu.memory_space<vmem>>, vector<1x1x1xf32>
    %108 = vector.shape_cast %107 : vector<1x1x1xf32> to vector<1x1xf32>
    %109 = vector.shape_cast %106 : vector<1x1xf32> to vector<1x1x1xf32>
    tpu.vector_store %arg7[%c0_36, %c0_37, %c0_38], %109 {strides = array<i32>} : memref<1x1x1xf32, #tpu.memory_space<vmem>>, vector<1x1x1xf32>,
    %110 = arith.mulf %86, %7 : vector<8x128xf32>
    %111 = vector.shape_cast %110 : vector<8x128xf32> to vector<1x8x128xf32>
    %cst_39 = arith.constant dense<0.000000e+00> : vector<1xf32>
    %112 = vector.multi_reduction <add>, %111, %cst_39 [1, 2] : vector<1x8x128xf32> to vector<1xf32>
    %113 = vector.shape_cast %112 : vector<1xf32> to vector<1x1x1xf32>
    %114 = vector.extract %113[0, 0, 0] : f32 from vector<1x1x1xf32>
    %115 = vector.broadcast %114 : f32 to vector<1x1xf32>
    %c0_40 = arith.constant 0 : index
    %c0_41 = arith.constant 0 : index
    %c0_42 = arith.constant 0 : index
    %116 = vector.load %arg8[%c0_40, %c0_41, %c0_42] : memref<1x1x1xf32, #tpu.memory_space<vmem>>, vector<1x1x1xf32>
    %117 = vector.shape_cast %116 : vector<1x1x1xf32> to vector<1x1xf32>
    %118 = vector.shape_cast %115 : vector<1x1xf32> to vector<1x1x1xf32>
    tpu.vector_store %arg8[%c0_40, %c0_41, %c0_42], %118 {strides = array<i32>} : memref<1x1x1xf32, #tpu.memory_space<vmem>>, vector<1x1x1xf32>,
    return
  }
  func.func @transform_0(%arg0: i32) -> (i32, i32, i32) {
    %c0_i32 = arith.constant 0 : i32
    %c0_i32_0 = arith.constant 0 : i32
    %c0_i32_1 = arith.constant 0 : i32
    return %arg0, %c0_i32, %c0_i32_0 : i32, i32, i32
  }
  func.func @transform_1(%arg0: i32) -> (i32, i32, i32) {
    %c0_i32 = arith.constant 0 : i32
    %c0_i32_0 = arith.constant 0 : i32
    %c0_i32_1 = arith.constant 0 : i32
    return %arg0, %c0_i32, %c0_i32_0 : i32, i32, i32
  }
  func.func @transform_2(%arg0: i32) -> (i32, i32) {
    %c0_i32 = arith.constant 0 : i32
    %c0_i32_0 = arith.constant 0 : i32
    %c0_i32_1 = arith.constant 0 : i32
    return %c0_i32, %c0_i32_0 : i32, i32
  }
  func.func @transform_3(%arg0: i32) -> (i32, i32) {
    %c0_i32 = arith.constant 0 : i32
    %c0_i32_0 = arith.constant 0 : i32
    %c0_i32_1 = arith.constant 0 : i32
    return %c0_i32, %c0_i32_0 : i32, i32
  }
  func.func @transform_4(%arg0: i32) -> (i32, i32) {
    %c0_i32 = arith.constant 0 : i32
    %c0_i32_0 = arith.constant 0 : i32
    %c0_i32_1 = arith.constant 0 : i32
    return %c0_i32, %c0_i32_0 : i32, i32
  }
  func.func @transform_5(%arg0: i32) -> (i32, i32) {
    %c0_i32 = arith.constant 0 : i32
    %c0_i32_0 = arith.constant 0 : i32
    %c0_i32_1 = arith.constant 0 : i32
    return %c0_i32, %c0_i32_0 : i32, i32
  }
  func.func @transform_6(%arg0: i32) -> (i32, i32, i32) {
    %c0_i32 = arith.constant 0 : i32
    %c0_i32_0 = arith.constant 0 : i32
    %c0_i32_1 = arith.constant 0 : i32
    return %arg0, %c0_i32, %c0_i32_0 : i32, i32, i32
  }
  func.func @transform_7(%arg0: i32) -> (i32, i32, i32) {
    %c0_i32 = arith.constant 0 : i32
    %c0_i32_0 = arith.constant 0 : i32
    %c0_i32_1 = arith.constant 0 : i32
    return %arg0, %c0_i32, %c0_i32_0 : i32, i32, i32
  }
}

</mosaic_0001>

<llo_original>
// kernel: yuv_ms_ssim_loss.8
$region0: #{yuv_ms_ssim_loss.8}
  #allocation0 [shape = 'u32[]', space=smem, size = 0x4, offset = 0x4, fixed_abs, tag = 'smem constant byte address 0x4 - core index']
  #allocation1 [shape = 'u32[72,128]{1,0:T(1,128)}', space=vmem, size = 0x9000, scoped, tag = 'internal scratch']
  %s0 = inlined_call_operand.vmem [shape: f32[6,8,128], index: 0, kind: input, shape index: {}]
  %s1 = inlined_call_operand.vmem [shape: f32[6,8,128], index: 1, kind: input, shape index: {}]
  %s2 = inlined_call_operand.vmem [shape: f32[8,8], index: 2, kind: input, shape index: {}]
  %s3 = inlined_call_operand.vmem [shape: f32[128,128], index: 3, kind: input, shape index: {}]
  %s4 = inlined_call_operand.vmem [shape: f32[8,128], index: 4, kind: input, shape index: {}]
  %s5 = inlined_call_operand.vmem [shape: f32[8,128], index: 5, kind: input, shape index: {}]
  %s6 = inlined_call_operand.vmem [shape: f32[8,8], index: 6, kind: input, shape index: {}]
  %s7 = inlined_call_operand.vmem [shape: f32[128,128], index: 7, kind: input, shape index: {}]
  %s8 = inlined_call_operand.hbm [shape: f32[6,1,1], index: 8, kind: output, shape index: {0}]
  %s9 = inlined_call_operand.vmem [shape: f32[6,1,1], index: 9, kind: output, shape index: {1}]
  %s10 = inlined_call_operand.vmem [shape: f32[6,8,128], index: 10, kind: output, shape index: {2}]
  %s11 = inlined_call_operand.vmem [shape: f32[6,8,128], index: 11, kind: output, shape index: {3}]
  %12 = xla_tuple %s8, %s9, %s10, %s11
  %s13 = sld [smem:[#allocation0]]
  $region89: #{yuv_ms_ssim_loss.8} parent=0
    _
  %s15 = ssub.s32 1, %s13
  %s16 = scalar_select 0, %s15, %s13
  $region1: #{yuv_ms_ssim_loss.8} parent=0
    #allocation2 [shape = 'u8[1024]{0}', space=vmem, size = 0x400, scoped, tag = 'output window, operand 0']
    #allocation3 [shape = 's32[2]{0}', space=sflag, size = 0x8, scoped, tag = 'scoped memory for yuv_ms_ssim_loss.8']
    %17 = vsyncpa [#allocation3], 0
    %s18 = scalar_lea.sflag [#allocation3], 1
    %19 = vsyncpa %s18, 0
    loop: start=0, step=1, limit=8
    $region2: #{yuv_ms_ssim_loss.8} parent=1 // loop_pre_header
      _
    $region3: #{yuv_ms_ssim_loss.8} parent=1 // loop_header
      %s21 = sphi 0, %s25
      %p22 = scmp.ge.s32.totalorder %s21, 8
      %s31 = sphi 0, %s33
      %s34 = sphi 0, %s31
      %s35 = sphi 0, %s34
      %s51 = sphi 0, %s35
      %s57 = sphi 0, %s59
      %s60 = sphi 0, %s57
      %s61 = sphi 0, %s60
      %s77 = sphi 0, %s61
      %s81 = sphi 0, %s81
      %s83 = sphi 0, %s81
      %s84 = sphi 0, %s83
      %s98 = sphi 0, %s84
      %s102 = sphi 0, %s102
      %s104 = sphi 0, %s102
      %s105 = sphi 0, %s104
      %s119 = sphi 0, %s105
      %s123 = sphi 0, %s123
      %s125 = sphi 0, %s123
      %s126 = sphi 0, %s125
      %s140 = sphi 0, %s126
      %s144 = sphi 0, %s144
      %s146 = sphi 0, %s144
      %s147 = sphi 0, %s146
      %s161 = sphi 0, %s147
      %s165 = sphi 0, %s165
      %s167 = sphi 0, %s165
      %s168 = sphi 0, %s167
      %s182 = sphi 0, %s168
      %s186 = sphi 0, %s186
      %s188 = sphi 0, %s186
      %s189 = sphi 0, %s188
      %s203 = sphi 0, %s189
      %s209 = sphi 0, %s211
      %s212 = sphi 0, %s209
      %s213 = sphi 0, %s212
      %s229 = sphi 0, %s213
      %s235 = sphi 0, %s237
      %s238 = sphi 0, %s235
      %s239 = sphi 0, %s238
      %s255 = sphi 0, %s239
      %s261 = sphi 0, %s263
      %s264 = sphi 0, %s261
      %s265 = sphi 0, %s264
      %s281 = sphi 0, %s265
      %s287 = sphi 0, %s289
      %s290 = sphi 0, %s287
      %s291 = sphi 0, %s290
      %s307 = sphi 0, %s291
    $region4: #{yuv_ms_ssim_loss.8} parent=1 // loop_header_branch
      %24 = sbr.rel (%p22) target = $region8
    $region5: #{yuv_ms_ssim_loss.8} parent=1 // loop_body
      %s26 = ssub.s32 %s21, 1
      %s27 = ssub.s32 %s21, 2
      %s28 = sadd.s32 %s21, 1
      %s29 = ssub.s32 %s21, %s28
      %p30 = scmp.eq.s32.totalorder %s29, 0
      %s32 = sadd.s32 %s31, 1
      %s33 = scalar_select %p30, %s31, %s32
      %p36 = pneg %p30
      %p37 = scmp.eq.s32.totalorder %s21, 5
      %p38 = por %p36, %p37
      %p39 = scmp.ne.s32.totalorder %s31, %s34
      %p40 = scmp.eq.s32.totalorder %s21, 0
      %p41 = por %p39, %p40
      %p42 = scmp.ne.s32.totalorder %s31, %s34
      %p43 = scmp.eq.s32.totalorder %s26, 5
      %p44 = por %p42, %p43
      %p45 = scmp.ne.s32.totalorder %s34, %s35
      %p46 = scmp.eq.s32.totalorder %s26, 0
      %p47 = por %p45, %p46
      %p48 = scmp.ne.s32.totalorder %s34, %s35
      %p49 = scmp.eq.s32.totalorder %s27, 5
      %p50 = por %p48, %p49
      %p52 = scmp.ne.s32.totalorder %s35, %s51
      %p53 = scmp.eq.s32.totalorder %s27, 0
      %p54 = por %p52, %p53
      %s55 = ssub.s32 %s21, %s28
      %p56 = scmp.eq.s32.totalorder %s55, 0
      %s58 = sadd.s32 %s57, 1
      %s59 = scalar_select %p56, %s57, %s58
      %p62 = pneg %p56
      %p63 = scmp.eq.s32.totalorder %s21, 5
      %p64 = por %p62, %p63
      %p65 = scmp.ne.s32.totalorder %s57, %s60
      %p66 = scmp.eq.s32.totalorder %s21, 0
      %p67 = por %p65, %p66
      %p68 = scmp.ne.s32.totalorder %s57, %s60
      %p69 = scmp.eq.s32.totalorder %s26, 5
      %p70 = por %p68, %p69
      %p71 = scmp.ne.s32.totalorder %s60, %s61
      %p72 = scmp.eq.s32.totalorder %s26, 0
      %p73 = por %p71, %p72
      %p74 = scmp.ne.s32.totalorder %s60, %s61
      %p75 = scmp.eq.s32.totalorder %s27, 5
      %p76 = por %p74, %p75
      %p78 = scmp.ne.s32.totalorder %s61, %s77
      %p79 = scmp.eq.s32.totalorder %s27, 0
      %p80 = por %p78, %p79
      %s82 = sadd.s32 %s81, 1
      %p85 = scmp.eq.s32.totalorder %s21, 5
      %p86 = scmp.ne.s32.totalorder %s81, %s83
      %p87 = scmp.eq.s32.totalorder %s21, 0
      %p88 = por %p86, %p87
      %p89 = scmp.ne.s32.totalorder %s81, %s83
      %p90 = scmp.eq.s32.totalorder %s26, 5
      %p91 = por %p89, %p90
      %p92 = scmp.ne.s32.totalorder %s83, %s84
      %p93 = scmp.eq.s32.totalorder %s26, 0
      %p94 = por %p92, %p93
      %p95 = scmp.ne.s32.totalorder %s83, %s84
      %p96 = scmp.eq.s32.totalorder %s27, 5
      %p97 = por %p95, %p96
      %p99 = scmp.ne.s32.totalorder %s84, %s98
      %p100 = scmp.eq.s32.totalorder %s27, 0
      %p101 = por %p99, %p100
      %s103 = sadd.s32 %s102, 1
      %p106 = scmp.eq.s32.totalorder %s21, 5
      %p107 = scmp.ne.s32.totalorder %s102, %s104
      %p108 = scmp.eq.s32.totalorder %s21, 0
      %p109 = por %p107, %p108
      %p110 = scmp.ne.s32.totalorder %s102, %s104
      %p111 = scmp.eq.s32.totalorder %s26, 5
      %p112 = por %p110, %p111
      %p113 = scmp.ne.s32.totalorder %s104, %s105
      %p114 = scmp.eq.s32.totalorder %s26, 0
      %p115 = por %p113, %p114
      %p116 = scmp.ne.s32.totalorder %s104, %s105
      %p117 = scmp.eq.s32.totalorder %s27, 5
      %p118 = por %p116, %p117
      %p120 = scmp.ne.s32.totalorder %s105, %s119
      %p121 = scmp.eq.s32.totalorder %s27, 0
      %p122 = por %p120, %p121
      %s124 = sadd.s32 %s123, 1
      %p127 = scmp.eq.s32.totalorder %s21, 5
      %p128 = scmp.ne.s32.totalorder %s123, %s125
      %p129 = scmp.eq.s32.totalorder %s21, 0
      %p130 = por %p128, %p129
      %p131 = scmp.ne.s32.totalorder %s123, %s125
      %p132 = scmp.eq.s32.totalorder %s26, 5
      %p133 = por %p131, %p132
      %p134 = scmp.ne.s32.totalorder %s125, %s126
      %p135 = scmp.eq.s32.totalorder %s26, 0
      %p136 = por %p134, %p135
      %p137 = scmp.ne.s32.totalorder %s125, %s126
      %p138 = scmp.eq.s32.totalorder %s27, 5
      %p139 = por %p137, %p138
      %p141 = scmp.ne.s32.totalorder %s126, %s140
      %p142 = scmp.eq.s32.totalorder %s27, 0
      %p143 = por %p141, %p142
      %s145 = sadd.s32 %s144, 1
      %p148 = scmp.eq.s32.totalorder %s21, 5
      %p149 = scmp.ne.s32.totalorder %s144, %s146
      %p150 = scmp.eq.s32.totalorder %s21, 0
      %p151 = por %p149, %p150
      %p152 = scmp.ne.s32.totalorder %s144, %s146
      %p153 = scmp.eq.s32.totalorder %s26, 5
      %p154 = por %p152, %p153
      %p155 = scmp.ne.s32.totalorder %s146, %s147
      %p156 = scmp.eq.s32.totalorder %s26, 0
      %p157 = por %p155, %p156
      %p158 = scmp.ne.s32.totalorder %s146, %s147
      %p159 = scmp.eq.s32.totalorder %s27, 5
      %p160 = por %p158, %p159
      %p162 = scmp.ne.s32.totalorder %s147, %s161
      %p163 = scmp.eq.s32.totalorder %s27, 0
      %p164 = por %p162, %p163
      %s166 = sadd.s32 %s165, 1
      %p169 = scmp.eq.s32.totalorder %s21, 5
      %p170 = scmp.ne.s32.totalorder %s165, %s167
      %p171 = scmp.eq.s32.totalorder %s21, 0
      %p172 = por %p170, %p171
      %p173 = scmp.ne.s32.totalorder %s165, %s167
      %p174 = scmp.eq.s32.totalorder %s26, 5
      %p175 = por %p173, %p174
      %p176 = scmp.ne.s32.totalorder %s167, %s168
      %p177 = scmp.eq.s32.totalorder %s26, 0
      %p178 = por %p176, %p177
      %p179 = scmp.ne.s32.totalorder %s167, %s168
      %p180 = scmp.eq.s32.totalorder %s27, 5
      %p181 = por %p179, %p180
      %p183 = scmp.ne.s32.totalorder %s168, %s182
      %p184 = scmp.eq.s32.totalorder %s27, 0
      %p185 = por %p183, %p184
      %s187 = sadd.s32 %s186, 1
      %p190 = scmp.eq.s32.totalorder %s21, 5
      %p191 = scmp.ne.s32.totalorder %s186, %s188
      %p192 = scmp.eq.s32.totalorder %s21, 0
      %p193 = por %p191, %p192
      %p194 = scmp.ne.s32.totalorder %s186, %s188
      %p195 = scmp.eq.s32.totalorder %s26, 5
      %p196 = por %p194, %p195
      %p197 = scmp.ne.s32.totalorder %s188, %s189
      %p198 = scmp.eq.s32.totalorder %s26, 0
      %p199 = por %p197, %p198
      %p200 = scmp.ne.s32.totalorder %s188, %s189
      %p201 = scmp.eq.s32.totalorder %s27, 5
      %p202 = por %p200, %p201
      %p204 = scmp.ne.s32.totalorder %s189, %s203
      %p205 = scmp.eq.s32.totalorder %s27, 0
      %p206 = por %p204, %p205
      %s207 = ssub.s32 %s21, %s28
      %p208 = scmp.eq.s32.totalorder %s207, 0
      %s210 = sadd.s32 %s209, 1
      %s211 = scalar_select %p208, %s209, %s210
      %p214 = pneg %p208
      %p215 = scmp.eq.s32.totalorder %s21, 5
      %p216 = por %p214, %p215
      %p217 = scmp.ne.s32.totalorder %s209, %s212
      %p218 = scmp.eq.s32.totalorder %s21, 0
      %p219 = por %p217, %p218
      %p220 = scmp.ne.s32.totalorder %s209, %s212
      %p221 = scmp.eq.s32.totalorder %s26, 5
      %p222 = por %p220, %p221
      %p223 = scmp.ne.s32.totalorder %s212, %s213
      %p224 = scmp.eq.s32.totalorder %s26, 0
      %p225 = por %p223, %p224
      %p226 = scmp.ne.s32.totalorder %s212, %s213
      %p227 = scmp.eq.s32.totalorder %s27, 5
      %p228 = por %p226, %p227
      %p230 = scmp.ne.s32.totalorder %s213, %s229
      %p231 = scmp.eq.s32.totalorder %s27, 0
      %p232 = por %p230, %p231
      %s233 = ssub.s32 %s21, %s28
      %p234 = scmp.eq.s32.totalorder %s233, 0
      %s236 = sadd.s32 %s235, 1
      %s237 = scalar_select %p234, %s235, %s236
      %p240 = pneg %p234
      %p241 = scmp.eq.s32.totalorder %s21, 5
      %p242 = por %p240, %p241
      %p243 = scmp.ne.s32.totalorder %s235, %s238
      %p244 = scmp.eq.s32.totalorder %s21, 0
      %p245 = por %p243, %p244
      %p246 = scmp.ne.s32.totalorder %s235, %s238
      %p247 = scmp.eq.s32.totalorder %s26, 5
      %p248 = por %p246, %p247
      %p249 = scmp.ne.s32.totalorder %s238, %s239
      %p250 = scmp.eq.s32.totalorder %s26, 0
      %p251 = por %p249, %p250
      %p252 = scmp.ne.s32.totalorder %s238, %s239
      %p253 = scmp.eq.s32.totalorder %s27, 5
      %p254 = por %p252, %p253
      %p256 = scmp.ne.s32.totalorder %s239, %s255
      %p257 = scmp.eq.s32.totalorder %s27, 0
      %p258 = por %p256, %p257
      %s259 = ssub.s32 %s21, %s28
      %p260 = scmp.eq.s32.totalorder %s259, 0
      %s262 = sadd.s32 %s261, 1
      %s263 = scalar_select %p260, %s261, %s262
      %p266 = pneg %p260
      %p267 = scmp.eq.s32.totalorder %s21, 5
      %p268 = por %p266, %p267
      %p269 = scmp.ne.s32.totalorder %s261, %s264
      %p270 = scmp.eq.s32.totalorder %s21, 0
      %p271 = por %p269, %p270
      %p272 = scmp.ne.s32.totalorder %s261, %s264
      %p273 = scmp.eq.s32.totalorder %s26, 5
      %p274 = por %p272, %p273
      %p275 = scmp.ne.s32.totalorder %s264, %s265
      %p276 = scmp.eq.s32.totalorder %s26, 0
      %p277 = por %p275, %p276
      %p278 = scmp.ne.s32.totalorder %s264, %s265
      %p279 = scmp.eq.s32.totalorder %s27, 5
      %p280 = por %p278, %p279
      %p282 = scmp.ne.s32.totalorder %s265, %s281
      %p283 = scmp.eq.s32.totalorder %s27, 0
      %p284 = por %p282, %p283
      %s285 = ssub.s32 %s21, %s28
      %p286 = scmp.eq.s32.totalorder %s285, 0
      %s288 = sadd.s32 %s287, 1
      %s289 = scalar_select %p286, %s287, %s288
      %p292 = pneg %p286
      %p293 = scmp.eq.s32.totalorder %s21, 5
      %p294 = por %p292, %p293
      %p295 = scmp.ne.s32.totalorder %s287, %s290
      %p296 = scmp.eq.s32.totalorder %s21, 0
      %p297 = por %p295, %p296
      %p298 = scmp.ne.s32.totalorder %s287, %s290
      %p299 = scmp.eq.s32.totalorder %s26, 5
      %p300 = por %p298, %p299
      %p301 = scmp.ne.s32.totalorder %s290, %s291
      %p302 = scmp.eq.s32.totalorder %s26, 0
      %p303 = por %p301, %p302
      %p304 = scmp.ne.s32.totalorder %s290, %s291
      %p305 = scmp.eq.s32.totalorder %s27, 5
      %p306 = por %p304, %p305
      %p308 = scmp.ne.s32.totalorder %s291, %s307
      %p309 = scmp.eq.s32.totalorder %s27, 0
      %p310 = por %p308, %p309
      %p311 = scmp.le.s32.totalorder 1, %s21
      %p312 = scmp.lt.s32.totalorder %s21, 7
      %p313 = pnand %p311, %p312
      %p314 = pneg %p313
      // Predicated region
      $region9: #{yuv_ms_ssim_loss.8} parent=5 // pred_check
        _
      $region10: #{yuv_ms_ssim_loss.8} parent=5 // pred_check_branch
        %316 = sbr.rel (%p313) target = $region12
      $region11: #{yuv_ms_ssim_loss.8} parent=5 // pred_region
        %s317 = ssub.s32 %s21, 1
        // Predicated region
        $region13: #{yuv_ms_ssim_loss.8} parent=11 // pred_check
          %p318 = pneg %p94
        $region14: #{yuv_ms_ssim_loss.8} parent=11 // pred_check_branch
          %320 = sbr.rel (%p318) target = $region16
        $region15: #{yuv_ms_ssim_loss.8} parent=11 // pred_region
          _
        $region16: #{yuv_ms_ssim_loss.8} parent=11 // pred_fallthru
          _
        // Predicated region
        $region17: #{yuv_ms_ssim_loss.8} parent=11 // pred_check
          %p321 = pneg %p115
        $region18: #{yuv_ms_ssim_loss.8} parent=11 // pred_check_branch
          %323 = sbr.rel (%p321) target = $region20
        $region19: #{yuv_ms_ssim_loss.8} parent=11 // pred_region
          _
        $region20: #{yuv_ms_ssim_loss.8} parent=11 // pred_fallthru
          _
        // Predicated region
        $region21: #{yuv_ms_ssim_loss.8} parent=11 // pred_check
          %p324 = pneg %p136
        $region22: #{yuv_ms_ssim_loss.8} parent=11 // pred_check_branch
          %326 = sbr.rel (%p324) target = $region24
        $region23: #{yuv_ms_ssim_loss.8} parent=11 // pred_region
          _
        $region24: #{yuv_ms_ssim_loss.8} parent=11 // pred_fallthru
          _
        // Predicated region
        $region25: #{yuv_ms_ssim_loss.8} parent=11 // pred_check
          %p327 = pneg %p157
        $region26: #{yuv_ms_ssim_loss.8} parent=11 // pred_check_branch
          %329 = sbr.rel (%p327) target = $region28
        $region27: #{yuv_ms_ssim_loss.8} parent=11 // pred_region
          _
        $region28: #{yuv_ms_ssim_loss.8} parent=11 // pred_fallthru
          _
        // Predicated region
        $region29: #{yuv_ms_ssim_loss.8} parent=11 // pred_check
          %p330 = pneg %p178
        $region30: #{yuv_ms_ssim_loss.8} parent=11 // pred_check_branch
          %332 = sbr.rel (%p330) target = $region32
        $region31: #{yuv_ms_ssim_loss.8} parent=11 // pred_region
          _
        $region32: #{yuv_ms_ssim_loss.8} parent=11 // pred_fallthru
          _
        // Predicated region
        $region33: #{yuv_ms_ssim_loss.8} parent=11 // pred_check
          %p333 = pneg %p199
        $region34: #{yuv_ms_ssim_loss.8} parent=11 // pred_check_branch
          %335 = sbr.rel (%p333) target = $region36
        $region35: #{yuv_ms_ssim_loss.8} parent=11 // pred_region
          _
        $region36: #{yuv_ms_ssim_loss.8} parent=11 // pred_fallthru
          _
      $region12: #{yuv_ms_ssim_loss.8} parent=5 // pred_fallthru
        _
      %p336 = scmp.lt.s32.totalorder %s21, 6
      // Predicated region
      $region37: #{yuv_ms_ssim_loss.8} parent=5 // pred_check
        %p337 = pneg %p336
      $region38: #{yuv_ms_ssim_loss.8} parent=5 // pred_check_branch
        %339 = sbr.rel (%p337) target = $region40
      $region39: #{yuv_ms_ssim_loss.8} parent=5 // pred_region
        // Predicated region
        $region41: #{yuv_ms_ssim_loss.8} parent=39 // pred_check
          %p340 = pneg %p41
        $region42: #{yuv_ms_ssim_loss.8} parent=39 // pred_check_branch
          %342 = sbr.rel (%p340) target = $region44
        $region43: #{yuv_ms_ssim_loss.8} parent=39 // pred_region
          %p343 = scmp.lt.s32.totalorder %s21, 5
          %s344 = scalar_select %p343, %s21, 5
          %s345 = smul.addr %s344, 8
          %s346 = scalar_lea.vmem %s0, %s345
        $region44: #{yuv_ms_ssim_loss.8} parent=39 // pred_fallthru
          _
        // Predicated region
        $region45: #{yuv_ms_ssim_loss.8} parent=39 // pred_check
          %p347 = pneg %p67
        $region46: #{yuv_ms_ssim_loss.8} parent=39 // pred_check_branch
          %349 = sbr.rel (%p347) target = $region48
        $region47: #{yuv_ms_ssim_loss.8} parent=39 // pred_region
          %p350 = scmp.lt.s32.totalorder %s21, 5
          %s351 = scalar_select %p350, %s21, 5
          %s352 = smul.addr %s351, 8
          %s353 = scalar_lea.vmem %s1, %s352
        $region48: #{yuv_ms_ssim_loss.8} parent=39 // pred_fallthru
          _
      $region40: #{yuv_ms_ssim_loss.8} parent=5 // pred_fallthru
        _
      %p354 = scmp.le.s32.totalorder 1, %s21
      %p355 = scmp.lt.s32.totalorder %s21, 7
      %p356 = pnand %p354, %p355
      %p357 = pneg %p356
      // Predicated region
      $region49: #{yuv_ms_ssim_loss.8} parent=5 // pred_check
        _
      $region50: #{yuv_ms_ssim_loss.8} parent=5 // pred_check_branch
        %359 = sbr.rel (%p356) target = $region52
      $region51: #{yuv_ms_ssim_loss.8} parent=5 // pred_region
        %s360 = ssub.s32 %s21, 1
        %p361 = scmp.lt.s32.totalorder %s26, 5
        %s362 = scalar_select %p361, %s26, 5
        %s363 = smul.addr %s362, 8
        %s364 = scalar_lea.vmem %s0, %s363
        %p365 = pneg %p47
        %p366 = pneg %p44
        %p367 = scmp.lt.s32.totalorder %s26, 5
        %s368 = scalar_select %p367, %s26, 5
        %s369 = smul.addr %s368, 8
        %s370 = scalar_lea.vmem %s1, %s369
        %p371 = pneg %p73
        %p372 = pneg %p70
        %p373 = pneg %p94
        %p374 = pneg %p91
        %p375 = pneg %p115
        %p376 = pneg %p112
        %p377 = pneg %p136
        %p378 = pneg %p133
        %p379 = pneg %p157
        %p380 = pneg %p154
        %p381 = pneg %p178
        %p382 = pneg %p175
        %p383 = pneg %p199
        %p384 = pneg %p196
        %p385 = pneg %p225
        %p386 = pneg %p222
        %s387 = sand.u32 %s212, 1
        %s388 = scalar_lea.sflag [#allocation3], %s387
        %s389 = sand.u32 %s212, 1
        %s390 = scalar_lea.vmem [#allocation2], %s389
        %p391 = pneg %p251
        %p392 = pneg %p248
        %p393 = scmp.lt.s32.totalorder %s26, 5
        %s394 = scalar_select %p393, %s26, 5
        %s395 = scalar_lea.vmem %s9, %s394
        %p396 = pneg %p277
        %p397 = pneg %p274
        %p398 = scmp.lt.s32.totalorder %s26, 5
        %s399 = scalar_select %p398, %s26, 5
        %s400 = smul.addr %s399, 8
        %s401 = scalar_lea.vmem %s10, %s400
        %p402 = pneg %p303
        %p403 = pneg %p300
        %p404 = scmp.lt.s32.totalorder %s26, 5
        %s405 = scalar_select %p404, %s26, 5
        %s406 = smul.addr %s405, 8
        %s407 = scalar_lea.vmem %s11, %s406
        %p408 = scmp.lt.s32.totalorder %s26, 5
        %s409 = scalar_select %p408, %s26, 5
        %s410 = smul.addr %s409, 8
        %s411 = scalar_lea.vmem %s0, %s410
        %p412 = scmp.lt.s32.totalorder %s26, 5
        %s413 = scalar_select %p412, %s26, 5
        %s414 = smul.addr %s413, 8
        %s415 = scalar_lea.vmem %s1, %s414
        %p416 = scmp.lt.s32.totalorder %s26, 5
        %s417 = scalar_select %p416, %s26, 5
        %s418 = scalar_lea.vmem %s9, %s417
        %p419 = scmp.lt.s32.totalorder %s26, 5
        %s420 = scalar_select %p419, %s26, 5
        %s421 = smul.addr %s420, 8
        %s422 = scalar_lea.vmem %s10, %s421
        %p423 = scmp.lt.s32.totalorder %s26, 5
        %s424 = scalar_select %p423, %s26, 5
        %s425 = smul.addr %s424, 8
        %s426 = scalar_lea.vmem %s11, %s425
        %v427 = vld [vmem:[%s411] sm:$0xff]
        %v428 = vld [vmem:[%s415] sm:$0xff]
        %v429 = vld [vmem:[%s2] sm:$0xff]
        %v430 = vld [vmem:[%s3] sm:$0xff]
        %v431 = vld [vmem:[%s3 + $0x8] sm:$0xff]
        %v432 = vld [vmem:[%s3 + $0x10] sm:$0xff]
        %v433 = vld [vmem:[%s3 + $0x18] sm:$0xff]
        %v434 = vld [vmem:[%s3 + $0x20] sm:$0xff]
        %v435 = vld [vmem:[%s3 + $0x28] sm:$0xff]
        %v436 = vld [vmem:[%s3 + $0x30] sm:$0xff]
        %v437 = vld [vmem:[%s3 + $0x38] sm:$0xff]
        %v438 = vld [vmem:[%s3 + $0x40] sm:$0xff]
        %v439 = vld [vmem:[%s3 + $0x48] sm:$0xff]
        %v440 = vld [vmem:[%s3 + $0x50] sm:$0xff]
        %v441 = vld [vmem:[%s3 + $0x58] sm:$0xff]
        %v442 = vld [vmem:[%s3 + $0x60] sm:$0xff]
        %v443 = vld [vmem:[%s3 + $0x68] sm:$0xff]
        %v444 = vld [vmem:[%s3 + $0x70] sm:$0xff]
        %v445 = vld [vmem:[%s3 + $0x78] sm:$0xff]
        %v446 = vld [vmem:[%s4] sm:$0xff]
        %v447 = vld [vmem:[%s5] sm:$0xff]
        %p448 = scmp.lt.s32.totalorder %s26, 0
        %s449 = ssub.s32 0, %s26
        %s450 = scalar_select %p448, %s449, %s26
        %s451 = sdiv.u32.pop %s450, 3
        %s452 = srem.u32.pop %s450, 3
        %s453 = ssub.s32 0, %s452
        %s454 = scalar_select %p448, %s453, %s452
        %p455 = scmp.ne.s32.totalorder %s454, 0
        %p456 = scmp.lt.s32.totalorder %s454, 0
        %p457 = pnand %p456, %p455
        %p458 = pneg %p457
        %s459 = sadd.s32 %s454, 3
        %s460 = scalar_select %p458, %s459, %s454
        %p461 = scmp.eq.s32.totalorder %s460, 0
        %s462 = scalar_select %p461, 0.0, 128.0
        %v463 = vmul.f32 %v427, %v427
        %v464 = vmul.f32 %v428, %v428
        %v465 = vmul.f32 %v427, %v428
        %466 = vmatpush.msra.mxu0 %v445
        %467 = vmatpush.msra.mxu0 %v444
        %468 = vmatpush.msra.mxu0 %v443
        %469 = vmatpush.msra.mxu0 %v442
        %470 = vmatpush.msra.mxu0 %v441
        %471 = vmatpush.msra.mxu0 %v440
        %472 = vmatpush.msra.mxu0 %v439
        %473 = vmatpush.msra.mxu0 %v438
        %474 = vmatpush.msra.mxu0 %v437
        %475 = vmatpush.msra.mxu0 %v436
        %476 = vmatpush.msra.mxu0 %v435
        %477 = vmatpush.msra.mxu0 %v434
        %478 = vmatpush.msra.mxu0 %v433
        %479 = vmatpush.msra.mxu0 %v432
        %480 = vmatpush.msra.mxu0 %v431
        %481 = vmatpush.msra.mxu0 %v430
        %482 = vmatmul.f32.gmra.mxu0 %v427
        %v483 = vpop.f32.mrf.mxu0
        %v484 = vadd.f32 0.0, %v483
        %485 = vmatmul.f32.gmra.mxu0 %v428
        %v486 = vpop.f32.mrf.mxu0
        %v487 = vadd.f32 0.0, %v486
        %488 = vmatmul.f32.gmra.mxu0 %v463
        %v489 = vpop.f32.mrf.mxu0
        %v490 = vadd.f32 0.0, %v489
        %491 = vmatmul.f32.gmra.mxu0 %v464
        %v492 = vpop.f32.mrf.mxu0
        %v493 = vadd.f32 0.0, %v492
        %494 = vmatmul.f32.gmra.mxu0 %v465
        %v495 = vpop.f32.mrf.mxu0
        %v496 = vadd.f32 0.0, %v495
        %497 = vdwg.mxu0
        %vm498 = vcmask 64512
        %v500 = vsel %vm498, %v429, 0
        %502 = vmatpush.msra.mxu0 0.0
        %503 = vmatpush.msra.mxu0 0.0
        %504 = vmatpush.msra.mxu0 0.0
        %505 = vmatpush.msra.mxu0 0.0
        %506 = vmatpush.msra.mxu0 0.0
        %507 = vmatpush.msra.mxu0 0.0
        %508 = vmatpush.msra.mxu0 0.0
        %509 = vmatpush.msra.mxu0 0.0
        %510 = vmatpush.msra.mxu0 0.0
        %511 = vmatpush.msra.mxu0 0.0
        %512 = vmatpush.msra.mxu0 0.0
        %513 = vmatpush.msra.mxu0 0.0
        %514 = vmatpush.msra.mxu0 0.0
        %515 = vmatpush.msra.mxu0 0.0
        %516 = vmatpush.msra.mxu0 0.0
        %517 = vmatpush.msra.mxu0 %v484
        %518 = vmatmul.f32.gmra.mxu0 %v500
        %v519 = vpop.f32.mrf.mxu0
        %v520 = vadd.f32 0.0, %v519
        %521 = vdwg.mxu0
        %522 = vmatpush.msra.mxu0 0.0
        %523 = vmatpush.msra.mxu0 0.0
        %524 = vmatpush.msra.mxu0 0.0
        %525 = vmatpush.msra.mxu0 0.0
        %526 = vmatpush.msra.mxu0 0.0
        %527 = vmatpush.msra.mxu0 0.0
        %528 = vmatpush.msra.mxu0 0.0
        %529 = vmatpush.msra.mxu0 0.0
        %530 = vmatpush.msra.mxu0 0.0
        %531 = vmatpush.msra.mxu0 0.0
        %532 = vmatpush.msra.mxu0 0.0
        %533 = vmatpush.msra.mxu0 0.0
        %534 = vmatpush.msra.mxu0 0.0
        %535 = vmatpush.msra.mxu0 0.0
        %536 = vmatpush.msra.mxu0 0.0
        %537 = vmatpush.msra.mxu0 %v487
        %538 = vmatmul.f32.gmra.mxu0 %v500
        %v539 = vpop.f32.mrf.mxu0
        %v540 = vadd.f32 0.0, %v539
        %541 = vdwg.mxu0
        %542 = vmatpush.msra.mxu0 0.0
        %543 = vmatpush.msra.mxu0 0.0
        %544 = vmatpush.msra.mxu0 0.0
        %545 = vmatpush.msra.mxu0 0.0
        %546 = vmatpush.msra.mxu0 0.0
        %547 = vmatpush.msra.mxu0 0.0
        %548 = vmatpush.msra.mxu0 0.0
        %549 = vmatpush.msra.mxu0 0.0
        %550 = vmatpush.msra.mxu0 0.0
        %551 = vmatpush.msra.mxu0 0.0
        %552 = vmatpush.msra.mxu0 0.0
        %553 = vmatpush.msra.mxu0 0.0
        %554 = vmatpush.msra.mxu0 0.0
        %555 = vmatpush.msra.mxu0 0.0
        %556 = vmatpush.msra.mxu0 0.0
        %557 = vmatpush.msra.mxu0 %v490
        %558 = vmatmul.f32.gmra.mxu0 %v500
        %v559 = vpop.f32.mrf.mxu0
        %v560 = vadd.f32 0.0, %v559
        %561 = vdwg.mxu0
        %562 = vmatpush.msra.mxu0 0.0
        %563 = vmatpush.msra.mxu0 0.0
        %564 = vmatpush.msra.mxu0 0.0
        %565 = vmatpush.msra.mxu0 0.0
        %566 = vmatpush.msra.mxu0 0.0
        %567 = vmatpush.msra.mxu0 0.0
        %568 = vmatpush.msra.mxu0 0.0
        %569 = vmatpush.msra.mxu0 0.0
        %570 = vmatpush.msra.mxu0 0.0
        %571 = vmatpush.msra.mxu0 0.0
        %572 = vmatpush.msra.mxu0 0.0
        %573 = vmatpush.msra.mxu0 0.0
        %574 = vmatpush.msra.mxu0 0.0
        %575 = vmatpush.msra.mxu0 0.0
        %576 = vmatpush.msra.mxu0 0.0
        %577 = vmatpush.msra.mxu0 %v493
        %578 = vmatmul.f32.gmra.mxu0 %v500
        %v579 = vpop.f32.mrf.mxu0
        %v580 = vadd.f32 0.0, %v579
        %581 = vdwg.mxu0
        %582 = vmatpush.msra.mxu0 0.0
        %583 = vmatpush.msra.mxu0 0.0
        %584 = vmatpush.msra.mxu0 0.0
        %585 = vmatpush.msra.mxu0 0.0
        %586 = vmatpush.msra.mxu0 0.0
        %587 = vmatpush.msra.mxu0 0.0
        %588 = vmatpush.msra.mxu0 0.0
        %589 = vmatpush.msra.mxu0 0.0
        %590 = vmatpush.msra.mxu0 0.0
        %591 = vmatpush.msra.mxu0 0.0
        %592 = vmatpush.msra.mxu0 0.0
        %593 = vmatpush.msra.mxu0 0.0
        %594 = vmatpush.msra.mxu0 0.0
        %595 = vmatpush.msra.mxu0 0.0
        %596 = vmatpush.msra.mxu0 0.0
        %597 = vmatpush.msra.mxu0 %v496
        %598 = vmatmul.f32.gmra.mxu0 %v500
        %v599 = vpop.f32.mrf.mxu0
        %v600 = vadd.f32 0.0, %v599
        %601 = vdwg.mxu0
        %v602 = vsub.f32 1.0, %v446
        %s603 = smul.f32 %s462, %s462
        %v604 = vstv %s603
        %v605 = vmul.f32 %v604, %v446
        %v606 = vmul.f32 %v605, %v602
        %v607 = vstv %s462
        %v608 = vmul.f32 %v607, %v446
        %v609 = vadd.f32 %v520, %v608
        %v610 = vadd.f32 %v540, %v608
        %v611 = vmul.f32 %v609, %v609
        %v612 = vmul.f32 %v610, %v610
        %v613 = vmul.f32 %v609, %v610
        %v614 = vmul.f32 %v520, %v520
        %v615 = vsub.f32 %v560, %v614
        %s616 = smul.f32 %s462, 2.0
        %v617 = vstv %s616
        %v618 = vmul.f32 %v617, %v520
        %v619 = vmul.f32 %v618, %v602
        %v620 = vadd.f32 %v615, %v619
        %v621 = vadd.f32 %v620, %v606
        %v622 = vmul.f32 %v540, %v540
        %v623 = vsub.f32 %v580, %v622
        %v624 = vmul.f32 %v617, %v540
        %v625 = vmul.f32 %v624, %v602
        %v626 = vadd.f32 %v623, %v625
        %v627 = vadd.f32 %v626, %v606
        %v628 = vmul.f32 %v520, %v540
        %v629 = vsub.f32 %v600, %v628
        %v630 = vadd.f32 %v520, %v540
        %v631 = vmul.f32 %v607, %v630
        %v632 = vmul.f32 %v631, %v602
        %v633 = vadd.f32 %v629, %v632
        %v634 = vadd.f32 %v633, %v606
        %v635 = vmul.f32 %v634, 2.0
        %v636 = vadd.f32 %v635, 0.0009
        %v637 = vadd.f32 %v621, %v627
        %v638 = vadd.f32 %v637, 0.0009
        %v639 = vrcp.pop %v638
        %v640 = vmul.f32 %v638, %v639
        %v641 = vsub.f32 2.0, %v640
        %v642 = vmul.f32 %v639, %v641
        %v643 = vmul.f32 %v636, %v642
        %v644 = vmul.f32 %v613, 2.0
        %v645 = vadd.f32 %v644, 0.0001
        %v646 = vadd.f32 %v611, %v612
        %v647 = vadd.f32 %v646, 0.0001
        %v648 = vrcp.pop %v647
        %v649 = vmul.f32 %v647, %v648
        %v650 = vsub.f32 2.0, %v649
        %v651 = vmul.f32 %v648, %v650
        %v652 = vmul.f32 %v645, %v651
        %v653 = vmul.f32 %v652, %v643
        %v654 = vmul.f32 %v653, %v447
        %655 = vadd.xlane.f32.xlu0 %v654
        %v656 = vpop.xlane.xlu0 %655
        %v657 = vrot.slane %v656, 4
        %v658 = vadd.f32 %v656, %v657
        %v659 = vrot.slane %v658, 2
        %v660 = vadd.f32 %v658, %v659
        %v661 = vrot.slane %v660, 1
        %v662 = vadd.f32 %v660, %v661
        %s663 = vtos %v662
        %v664 = vstv %s663
        %vm665 = vcmask 0
        %666 = vst.msk [vmem:[%s390] sm:$0x1] %vm665, %v664
        %v667 = vmul.f32 %v643, %v447
        %668 = vadd.xlane.f32.xlu0 %v667
        %v669 = vpop.xlane.xlu0 %668
        %v670 = vrot.slane %v669, 4
        %v671 = vadd.f32 %v669, %v670
        %v672 = vrot.slane %v671, 2
        %v673 = vadd.f32 %v671, %v672
        %v674 = vrot.slane %v673, 1
        %v675 = vadd.f32 %v673, %v674
        %s676 = vtos %v675
        %v677 = vstv %s676
        %678 = vst.msk [vmem:[%s418] sm:$0x1] %vm665, %v677
        %v679 = vld [vmem:[%s6] sm:$0xff]
        %v680 = vld [vmem:[%s7] sm:$0xff]
        %v681 = vld [vmem:[%s7 + $0x8] sm:$0xff]
        %v682 = vld [vmem:[%s7 + $0x10] sm:$0xff]
        %v683 = vld [vmem:[%s7 + $0x18] sm:$0xff]
        %v684 = vld [vmem:[%s7 + $0x20] sm:$0xff]
        %v685 = vld [vmem:[%s7 + $0x28] sm:$0xff]
        %v686 = vld [vmem:[%s7 + $0x30] sm:$0xff]
        %v687 = vld [vmem:[%s7 + $0x38] sm:$0xff]
        %v688 = vld [vmem:[%s7 + $0x40] sm:$0xff]
        %v689 = vld [vmem:[%s7 + $0x48] sm:$0xff]
        %v690 = vld [vmem:[%s7 + $0x50] sm:$0xff]
        %v691 = vld [vmem:[%s7 + $0x58] sm:$0xff]
        %v692 = vld [vmem:[%s7 + $0x60] sm:$0xff]
        %v693 = vld [vmem:[%s7 + $0x68] sm:$0xff]
        %v694 = vld [vmem:[%s7 + $0x70] sm:$0xff]
        %v695 = vld [vmem:[%s7 + $0x78] sm:$0xff]
        %696 = vmatpush.msra.mxu0 %v695
        %697 = vmatpush.msra.mxu0 %v694
        %698 = vmatpush.msra.mxu0 %v693
        %699 = vmatpush.msra.mxu0 %v692
        %700 = vmatpush.msra.mxu0 %v691
        %701 = vmatpush.msra.mxu0 %v690
        %702 = vmatpush.msra.mxu0 %v689
        %703 = vmatpush.msra.mxu0 %v688
        %704 = vmatpush.msra.mxu0 %v687
        %705 = vmatpush.msra.mxu0 %v686
        %706 = vmatpush.msra.mxu0 %v685
        %707 = vmatpush.msra.mxu0 %v684
        %708 = vmatpush.msra.mxu0 %v683
        %709 = vmatpush.msra.mxu0 %v682
        %710 = vmatpush.msra.mxu0 %v681
        %711 = vmatpush.msra.mxu0 %v680
        %712 = vmatmul.f32.gmra.mxu0 %v427
        %v713 = vpop.f32.mrf.mxu0
        %v714 = vadd.f32 0.0, %v713
        %715 = vmatmul.f32.gmra.mxu0 %v428
        %v716 = vpop.f32.mrf.mxu0
        %v717 = vadd.f32 0.0, %v716
        %718 = vdwg.mxu0
        %v720 = vsel %vm498, %v679, 0
        %722 = vmatpush.msra.mxu0 0.0
        %723 = vmatpush.msra.mxu0 0.0
        %724 = vmatpush.msra.mxu0 0.0
        %725 = vmatpush.msra.mxu0 0.0
        %726 = vmatpush.msra.mxu0 0.0
        %727 = vmatpush.msra.mxu0 0.0
        %728 = vmatpush.msra.mxu0 0.0
        %729 = vmatpush.msra.mxu0 0.0
        %730 = vmatpush.msra.mxu0 0.0
        %731 = vmatpush.msra.mxu0 0.0
        %732 = vmatpush.msra.mxu0 0.0
        %733 = vmatpush.msra.mxu0 0.0
        %734 = vmatpush.msra.mxu0 0.0
        %735 = vmatpush.msra.mxu0 0.0
        %736 = vmatpush.msra.mxu0 0.0
        %737 = vmatpush.msra.mxu0 %v714
        %738 = vmatmul.f32.gmra.mxu0 %v720
        %v739 = vpop.f32.mrf.mxu0
        %v740 = vadd.f32 0.0, %v739
        %741 = vdwg.mxu0
        %742 = vst [vmem:[%s422] sm:$0xff] %v740
        %743 = vmatpush.msra.mxu0 0.0
        %744 = vmatpush.msra.mxu0 0.0
        %745 = vmatpush.msra.mxu0 0.0
        %746 = vmatpush.msra.mxu0 0.0
        %747 = vmatpush.msra.mxu0 0.0
        %748 = vmatpush.msra.mxu0 0.0
        %749 = vmatpush.msra.mxu0 0.0
        %750 = vmatpush.msra.mxu0 0.0
        %751 = vmatpush.msra.mxu0 0.0
        %752 = vmatpush.msra.mxu0 0.0
        %753 = vmatpush.msra.mxu0 0.0
        %754 = vmatpush.msra.mxu0 0.0
        %755 = vmatpush.msra.mxu0 0.0
        %756 = vmatpush.msra.mxu0 0.0
        %757 = vmatpush.msra.mxu0 0.0
        %758 = vmatpush.msra.mxu0 %v717
        %759 = vmatmul.f32.gmra.mxu0 %v720
        %v760 = vpop.f32.mrf.mxu0
        %v761 = vadd.f32 0.0, %v760
        %762 = vdwg.mxu0
        %763 = vst [vmem:[%s426] sm:$0xff] %v761
        %s764 = sand.u32 %s212, 1
        %s765 = scalar_lea.sflag [#allocation3], %s764
        %s766 = sand.u32 %s212, 1
        %s767 = scalar_lea.vmem [#allocation2], %s766
        %p768 = scmp.lt.s32.totalorder %s26, 5
        %s769 = scalar_select %p768, %s26, 5
        %s770 = scalar_lea.vmem %s9, %s769
        %p771 = scmp.lt.s32.totalorder %s26, 5
        %s772 = scalar_select %p771, %s26, 5
        %s773 = smul.addr %s772, 8
        %s774 = scalar_lea.vmem %s10, %s773
        %p775 = scmp.lt.s32.totalorder %s26, 5
        %s776 = scalar_select %p775, %s26, 5
        %s777 = smul.addr %s776, 8
        %s778 = scalar_lea.vmem %s11, %s777
        // Predicated region
        $region53: #{yuv_ms_ssim_loss.8} parent=51 // pred_check
          %p779 = pneg %p222
        $region54: #{yuv_ms_ssim_loss.8} parent=51 // pred_check_branch
          %781 = sbr.rel (%p779) target = $region56
        $region55: #{yuv_ms_ssim_loss.8} parent=51 // pred_region
          %783 = vsyncadd %s765, 0
          %s784 = scalar_lea.hbm %s8, %s26
          %s786 = sshll.u32 %s767, 4
          %s787 = int_to_ptr.vmem [resolvable:$true] %s786
          %s788 = sshll.u32 %s784, 4
          %s789 = int_to_ptr.hbm [resolvable:$true] %s788
          %791 = dma.vmem_to_hbm [thread:$0]  %s787, 16, %s789, %s765
        $region56: #{yuv_ms_ssim_loss.8} parent=51 // pred_fallthru
          _
        // Predicated region
        $region57: #{yuv_ms_ssim_loss.8} parent=51 // pred_check
          %p792 = pneg %p248
        $region58: #{yuv_ms_ssim_loss.8} parent=51 // pred_check_branch
          %794 = sbr.rel (%p792) target = $region60
        $region59: #{yuv_ms_ssim_loss.8} parent=51 // pred_region
          _
        $region60: #{yuv_ms_ssim_loss.8} parent=51 // pred_fallthru
          _
        // Predicated region
        $region61: #{yuv_ms_ssim_loss.8} parent=51 // pred_check
          %p795 = pneg %p274
        $region62: #{yuv_ms_ssim_loss.8} parent=51 // pred_check_branch
          %797 = sbr.rel (%p795) target = $region64
        $region63: #{yuv_ms_ssim_loss.8} parent=51 // pred_region
          _
        $region64: #{yuv_ms_ssim_loss.8} parent=51 // pred_fallthru
          _
        // Predicated region
        $region65: #{yuv_ms_ssim_loss.8} parent=51 // pred_check
          %p798 = pneg %p300
        $region66: #{yuv_ms_ssim_loss.8} parent=51 // pred_check_branch
          %800 = sbr.rel (%p798) target = $region68
        $region67: #{yuv_ms_ssim_loss.8} parent=51 // pred_region
          _
        $region68: #{yuv_ms_ssim_loss.8} parent=51 // pred_fallthru
          _
      $region52: #{yuv_ms_ssim_loss.8} parent=5 // pred_fallthru
        _
      %p801 = scmp.le.s32.totalorder 2, %s21
      // Predicated region
      $region69: #{yuv_ms_ssim_loss.8} parent=5 // pred_check
        %p802 = pneg %p801
      $region70: #{yuv_ms_ssim_loss.8} parent=5 // pred_check_branch
        %804 = sbr.rel (%p802) target = $region72
      $region71: #{yuv_ms_ssim_loss.8} parent=5 // pred_region
        %s805 = ssub.s32 %s21, 2
        // Predicated region
        $region73: #{yuv_ms_ssim_loss.8} parent=71 // pred_check
          %p806 = pneg %p228
        $region74: #{yuv_ms_ssim_loss.8} parent=71 // pred_check_branch
          %808 = sbr.rel (%p806) target = $region76
        $region75: #{yuv_ms_ssim_loss.8} parent=71 // pred_region
          %s809 = sand.u32 %s213, 1
          %s810 = scalar_lea.sflag [#allocation3], %s809
          %s811 = sand.u32 %s213, 1
          %s812 = scalar_lea.vmem [#allocation2], %s811
          %814 = dma.done %s810, 16
        $region76: #{yuv_ms_ssim_loss.8} parent=71 // pred_fallthru
          _
        // Predicated region
        $region77: #{yuv_ms_ssim_loss.8} parent=71 // pred_check
          %p815 = pneg %p254
        $region78: #{yuv_ms_ssim_loss.8} parent=71 // pred_check_branch
          %817 = sbr.rel (%p815) target = $region80
        $region79: #{yuv_ms_ssim_loss.8} parent=71 // pred_region
          %p818 = scmp.lt.s32.totalorder %s27, 5
          %s819 = scalar_select %p818, %s27, 5
          %s820 = scalar_lea.vmem %s9, %s819
        $region80: #{yuv_ms_ssim_loss.8} parent=71 // pred_fallthru
          _
        // Predicated region
        $region81: #{yuv_ms_ssim_loss.8} parent=71 // pred_check
          %p821 = pneg %p280
        $region82: #{yuv_ms_ssim_loss.8} parent=71 // pred_check_branch
          %823 = sbr.rel (%p821) target = $region84
        $region83: #{yuv_ms_ssim_loss.8} parent=71 // pred_region
          %p824 = scmp.lt.s32.totalorder %s27, 5
          %s825 = scalar_select %p824, %s27, 5
          %s826 = smul.addr %s825, 8
          %s827 = scalar_lea.vmem %s10, %s826
        $region84: #{yuv_ms_ssim_loss.8} parent=71 // pred_fallthru
          _
        // Predicated region
        $region85: #{yuv_ms_ssim_loss.8} parent=71 // pred_check
          %p828 = pneg %p306
        $region86: #{yuv_ms_ssim_loss.8} parent=71 // pred_check_branch
          %830 = sbr.rel (%p828) target = $region88
        $region87: #{yuv_ms_ssim_loss.8} parent=71 // pred_region
          %p831 = scmp.lt.s32.totalorder %s27, 5
          %s832 = scalar_select %p831, %s27, 5
          %s833 = smul.addr %s832, 8
          %s834 = scalar_lea.vmem %s11, %s833
        $region88: #{yuv_ms_ssim_loss.8} parent=71 // pred_fallthru
          _
      $region72: #{yuv_ms_ssim_loss.8} parent=5 // pred_fallthru
        _
    $region6: #{yuv_ms_ssim_loss.8} parent=1 // loop_footer
      %s25 = sadd.s32 1, %s21
    $region7: #{yuv_ms_ssim_loss.8} parent=1 // loop_footer_branch
      %20 = sbr.rel target = $region3
    $region8: #{yuv_ms_ssim_loss.8} parent=1 // loop_exit
      _
    %835 = vsyncpa [#allocation3], 1
    %s836 = scalar_lea.sflag [#allocation3], 1
    %837 = vsyncpa %s836, 1

// kernel: yuv_ms_ssim_loss.7
$region0: #{yuv_ms_ssim_loss.7}
  #allocation0 [shape = 'u32[]', space=smem, size = 0x4, offset = 0x4, fixed_abs, tag = 'smem constant byte address 0x4 - core index']
  #allocation1 [shape = 'u32[72,128]{1,0:T(1,128)}', space=vmem, size = 0x9000, scoped, tag = 'internal scratch']
  %s0 = inlined_call_operand.vmem [shape: f32[6,8,128], index: 0, kind: input, shape index: {}]
  %s1 = inlined_call_operand.vmem [shape: f32[6,8,128], index: 1, kind: input, shape index: {}]
  %s2 = inlined_call_operand.vmem [shape: f32[16,8], index: 2, kind: input, shape index: {}]
  %s3 = inlined_call_operand.vmem [shape: f32[128,128], index: 3, kind: input, shape index: {}]
  %s4 = inlined_call_operand.vmem [shape: f32[16,128], index: 4, kind: input, shape index: {}]
  %s5 = inlined_call_operand.vmem [shape: f32[16,128], index: 5, kind: input, shape index: {}]
  %s6 = inlined_call_operand.vmem [shape: f32[8,8], index: 6, kind: input, shape index: {}]
  %s7 = inlined_call_operand.vmem [shape: f32[128,128], index: 7, kind: input, shape index: {}]
  %s8 = inlined_call_operand.hbm [shape: f32[6,1,1], index: 8, kind: output, shape index: {0}]
  %s9 = inlined_call_operand.vmem [shape: f32[6,1,1], index: 9, kind: output, shape index: {1}]
  %s10 = inlined_call_operand.vmem [shape: f32[6,8,128], index: 10, kind: output, shape index: {2}]
  %s11 = inlined_call_operand.vmem [shape: f32[6,8,128], index: 11, kind: output, shape index: {3}]
  %12 = xla_tuple %s8, %s9, %s10, %s11
  %s13 = sld [smem:[#allocation0]]
  $region89: #{yuv_ms_ssim_loss.7} parent=0
    _
  %s15 = ssub.s32 1, %s13
  %s16 = scalar_select 0, %s15, %s13
  $region1: #{yuv_ms_ssim_loss.7} parent=0
    #allocation2 [shape = 'u8[1024]{0}', space=vmem, size = 0x400, scoped, tag = 'output window, operand 0']
    #allocation3 [shape = 's32[2]{0}', space=sflag, size = 0x8, scoped, tag = 'scoped memory for yuv_ms_ssim_loss.7']
    %17 = vsyncpa [#allocation3], 0
    %s18 = scalar_lea.sflag [#allocation3], 1
    %19 = vsyncpa %s18, 0
    loop: start=0, step=1, limit=8
    $region2: #{yuv_ms_ssim_loss.7} parent=1 // loop_pre_header
      _
    $region3: #{yuv_ms_ssim_loss.7} parent=1 // loop_header
      %s21 = sphi 0, %s25
      %p22 = scmp.ge.s32.totalorder %s21, 8
      %s31 = sphi 0, %s33
      %s34 = sphi 0, %s31
      %s35 = sphi 0, %s34
      %s51 = sphi 0, %s35
      %s57 = sphi 0, %s59
      %s60 = sphi 0, %s57
      %s61 = sphi 0, %s60
      %s77 = sphi 0, %s61
      %s81 = sphi 0, %s81
      %s83 = sphi 0, %s81
      %s84 = sphi 0, %s83
      %s98 = sphi 0, %s84
      %s102 = sphi 0, %s102
      %s104 = sphi 0, %s102
      %s105 = sphi 0, %s104
      %s119 = sphi 0, %s105
      %s123 = sphi 0, %s123
      %s125 = sphi 0, %s123
      %s126 = sphi 0, %s125
      %s140 = sphi 0, %s126
      %s144 = sphi 0, %s144
      %s146 = sphi 0, %s144
      %s147 = sphi 0, %s146
      %s161 = sphi 0, %s147
      %s165 = sphi 0, %s165
      %s167 = sphi 0, %s165
      %s168 = sphi 0, %s167
      %s182 = sphi 0, %s168
      %s186 = sphi 0, %s186
      %s188 = sphi 0, %s186
      %s189 = sphi 0, %s188
      %s203 = sphi 0, %s189
      %s209 = sphi 0, %s211
      %s212 = sphi 0, %s209
      %s213 = sphi 0, %s212
      %s229 = sphi 0, %s213
      %s235 = sphi 0, %s237
      %s238 = sphi 0, %s235
      %s239 = sphi 0, %s238
      %s255 = sphi 0, %s239
      %s261 = sphi 0, %s263
      %s264 = sphi 0, %s261
      %s265 = sphi 0, %s264
      %s281 = sphi 0, %s265
      %s287 = sphi 0, %s289
      %s290 = sphi 0, %s287
      %s291 = sphi 0, %s290
      %s307 = sphi 0, %s291
    $region4: #{yuv_ms_ssim_loss.7} parent=1 // loop_header_branch
      %24 = sbr.rel (%p22) target = $region8
    $region5: #{yuv_ms_ssim_loss.7} parent=1 // loop_body
      %s26 = ssub.s32 %s21, 1
      %s27 = ssub.s32 %s21, 2
      %s28 = sadd.s32 %s21, 1
      %s29 = ssub.s32 %s21, %s28
      %p30 = scmp.eq.s32.totalorder %s29, 0
      %s32 = sadd.s32 %s31, 1
      %s33 = scalar_select %p30, %s31, %s32
      %p36 = pneg %p30
      %p37 = scmp.eq.s32.totalorder %s21, 5
      %p38 = por %p36, %p37
      %p39 = scmp.ne.s32.totalorder %s31, %s34
      %p40 = scmp.eq.s32.totalorder %s21, 0
      %p41 = por %p39, %p40
      %p42 = scmp.ne.s32.totalorder %s31, %s34
      %p43 = scmp.eq.s32.totalorder %s26, 5
      %p44 = por %p42, %p43
      %p45 = scmp.ne.s32.totalorder %s34, %s35
      %p46 = scmp.eq.s32.totalorder %s26, 0
      %p47 = por %p45, %p46
      %p48 = scmp.ne.s32.totalorder %s34, %s35
      %p49 = scmp.eq.s32.totalorder %s27, 5
      %p50 = por %p48, %p49
      %p52 = scmp.ne.s32.totalorder %s35, %s51
      %p53 = scmp.eq.s32.totalorder %s27, 0
      %p54 = por %p52, %p53
      %s55 = ssub.s32 %s21, %s28
      %p56 = scmp.eq.s32.totalorder %s55, 0
      %s58 = sadd.s32 %s57, 1
      %s59 = scalar_select %p56, %s57, %s58
      %p62 = pneg %p56
      %p63 = scmp.eq.s32.totalorder %s21, 5
      %p64 = por %p62, %p63
      %p65 = scmp.ne.s32.totalorder %s57, %s60
      %p66 = scmp.eq.s32.totalorder %s21, 0
      %p67 = por %p65, %p66
      %p68 = scmp.ne.s32.totalorder %s57, %s60
      %p69 = scmp.eq.s32.totalorder %s26, 5
      %p70 = por %p68, %p69
      %p71 = scmp.ne.s32.totalorder %s60, %s61
      %p72 = scmp.eq.s32.totalorder %s26, 0
      %p73 = por %p71, %p72
      %p74 = scmp.ne.s32.totalorder %s60, %s61
      %p75 = scmp.eq.s32.totalorder %s27, 5
      %p76 = por %p74, %p75
      %p78 = scmp.ne.s32.totalorder %s61, %s77
      %p79 = scmp.eq.s32.totalorder %s27, 0
      %p80 = por %p78, %p79
      %s82 = sadd.s32 %s81, 1
      %p85 = scmp.eq.s32.totalorder %s21, 5
      %p86 = scmp.ne.s32.totalorder %s81, %s83
      %p87 = scmp.eq.s32.totalorder %s21, 0
      %p88 = por %p86, %p87
      %p89 = scmp.ne.s32.totalorder %s81, %s83
      %p90 = scmp.eq.s32.totalorder %s26, 5
      %p91 = por %p89, %p90
      %p92 = scmp.ne.s32.totalorder %s83, %s84
      %p93 = scmp.eq.s32.totalorder %s26, 0
      %p94 = por %p92, %p93
      %p95 = scmp.ne.s32.totalorder %s83, %s84
      %p96 = scmp.eq.s32.totalorder %s27, 5
      %p97 = por %p95, %p96
      %p99 = scmp.ne.s32.totalorder %s84, %s98
      %p100 = scmp.eq.s32.totalorder %s27, 0
      %p101 = por %p99, %p100
      %s103 = sadd.s32 %s102, 1
      %p106 = scmp.eq.s32.totalorder %s21, 5
      %p107 = scmp.ne.s32.totalorder %s102, %s104
      %p108 = scmp.eq.s32.totalorder %s21, 0
      %p109 = por %p107, %p108
      %p110 = scmp.ne.s32.totalorder %s102, %s104
      %p111 = scmp.eq.s32.totalorder %s26, 5
      %p112 = por %p110, %p111
      %p113 = scmp.ne.s32.totalorder %s104, %s105
      %p114 = scmp.eq.s32.totalorder %s26, 0
      %p115 = por %p113, %p114
      %p116 = scmp.ne.s32.totalorder %s104, %s105
      %p117 = scmp.eq.s32.totalorder %s27, 5
      %p118 = por %p116, %p117
      %p120 = scmp.ne.s32.totalorder %s105, %s119
      %p121 = scmp.eq.s32.totalorder %s27, 0
      %p122 = por %p120, %p121
      %s124 = sadd.s32 %s123, 1
      %p127 = scmp.eq.s32.totalorder %s21, 5
      %p128 = scmp.ne.s32.totalorder %s123, %s125
      %p129 = scmp.eq.s32.totalorder %s21, 0
      %p130 = por %p128, %p129
      %p131 = scmp.ne.s32.totalorder %s123, %s125
      %p132 = scmp.eq.s32.totalorder %s26, 5
      %p133 = por %p131, %p132
      %p134 = scmp.ne.s32.totalorder %s125, %s126
      %p135 = scmp.eq.s32.totalorder %s26, 0
      %p136 = por %p134, %p135
      %p137 = scmp.ne.s32.totalorder %s125, %s126
      %p138 = scmp.eq.s32.totalorder %s27, 5
      %p139 = por %p137, %p138
      %p141 = scmp.ne.s32.totalorder %s126, %s140
      %p142 = scmp.eq.s32.totalorder %s27, 0
      %p143 = por %p141, %p142
      %s145 = sadd.s32 %s144, 1
      %p148 = scmp.eq.s32.totalorder %s21, 5
      %p149 = scmp.ne.s32.totalorder %s144, %s146
      %p150 = scmp.eq.s32.totalorder %s21, 0
      %p151 = por %p149, %p150
      %p152 = scmp.ne.s32.totalorder %s144, %s146
      %p153 = scmp.eq.s32.totalorder %s26, 5
      %p154 = por %p152, %p153
      %p155 = scmp.ne.s32.totalorder %s146, %s147
      %p156 = scmp.eq.s32.totalorder %s26, 0
      %p157 = por %p155, %p156
      %p158 = scmp.ne.s32.totalorder %s146, %s147
      %p159 = scmp.eq.s32.totalorder %s27, 5
      %p160 = por %p158, %p159
      %p162 = scmp.ne.s32.totalorder %s147, %s161
      %p163 = scmp.eq.s32.totalorder %s27, 0
      %p164 = por %p162, %p163
      %s166 = sadd.s32 %s165, 1
      %p169 = scmp.eq.s32.totalorder %s21, 5
      %p170 = scmp.ne.s32.totalorder %s165, %s167
      %p171 = scmp.eq.s32.totalorder %s21, 0
      %p172 = por %p170, %p171
      %p173 = scmp.ne.s32.totalorder %s165, %s167
      %p174 = scmp.eq.s32.totalorder %s26, 5
      %p175 = por %p173, %p174
      %p176 = scmp.ne.s32.totalorder %s167, %s168
      %p177 = scmp.eq.s32.totalorder %s26, 0
      %p178 = por %p176, %p177
      %p179 = scmp.ne.s32.totalorder %s167, %s168
      %p180 = scmp.eq.s32.totalorder %s27, 5
      %p181 = por %p179, %p180
      %p183 = scmp.ne.s32.totalorder %s168, %s182
      %p184 = scmp.eq.s32.totalorder %s27, 0
      %p185 = por %p183, %p184
      %s187 = sadd.s32 %s186, 1
      %p190 = scmp.eq.s32.totalorder %s21, 5
      %p191 = scmp.ne.s32.totalorder %s186, %s188
      %p192 = scmp.eq.s32.totalorder %s21, 0
      %p193 = por %p191, %p192
      %p194 = scmp.ne.s32.totalorder %s186, %s188
      %p195 = scmp.eq.s32.totalorder %s26, 5
      %p196 = por %p194, %p195
      %p197 = scmp.ne.s32.totalorder %s188, %s189
      %p198 = scmp.eq.s32.totalorder %s26, 0
      %p199 = por %p197, %p198
      %p200 = scmp.ne.s32.totalorder %s188, %s189
      %p201 = scmp.eq.s32.totalorder %s27, 5
      %p202 = por %p200, %p201
      %p204 = scmp.ne.s32.totalorder %s189, %s203
      %p205 = scmp.eq.s32.totalorder %s27, 0
      %p206 = por %p204, %p205
      %s207 = ssub.s32 %s21, %s28
      %p208 = scmp.eq.s32.totalorder %s207, 0
      %s210 = sadd.s32 %s209, 1
      %s211 = scalar_select %p208, %s209, %s210
      %p214 = pneg %p208
      %p215 = scmp.eq.s32.totalorder %s21, 5
      %p216 = por %p214, %p215
      %p217 = scmp.ne.s32.totalorder %s209, %s212
      %p218 = scmp.eq.s32.totalorder %s21, 0
      %p219 = por %p217, %p218
      %p220 = scmp.ne.s32.totalorder %s209, %s212
      %p221 = scmp.eq.s32.totalorder %s26, 5
      %p222 = por %p220, %p221
      %p223 = scmp.ne.s32.totalorder %s212, %s213
      %p224 = scmp.eq.s32.totalorder %s26, 0
      %p225 = por %p223, %p224
      %p226 = scmp.ne.s32.totalorder %s212, %s213
      %p227 = scmp.eq.s32.totalorder %s27, 5
      %p228 = por %p226, %p227
      %p230 = scmp.ne.s32.totalorder %s213, %s229
      %p231 = scmp.eq.s32.totalorder %s27, 0
      %p232 = por %p230, %p231
      %s233 = ssub.s32 %s21, %s28
      %p234 = scmp.eq.s32.totalorder %s233, 0
      %s236 = sadd.s32 %s235, 1
      %s237 = scalar_select %p234, %s235, %s236
      %p240 = pneg %p234
      %p241 = scmp.eq.s32.totalorder %s21, 5
      %p242 = por %p240, %p241
      %p243 = scmp.ne.s32.totalorder %s235, %s238
      %p244 = scmp.eq.s32.totalorder %s21, 0
      %p245 = por %p243, %p244
      %p246 = scmp.ne.s32.totalorder %s235, %s238
      %p247 = scmp.eq.s32.totalorder %s26, 5
      %p248 = por %p246, %p247
      %p249 = scmp.ne.s32.totalorder %s238, %s239
      %p250 = scmp.eq.s32.totalorder %s26, 0
      %p251 = por %p249, %p250
      %p252 = scmp.ne.s32.totalorder %s238, %s239
      %p253 = scmp.eq.s32.totalorder %s27, 5
      %p254 = por %p252, %p253
      %p256 = scmp.ne.s32.totalorder %s239, %s255
      %p257 = scmp.eq.s32.totalorder %s27, 0
      %p258 = por %p256, %p257
      %s259 = ssub.s32 %s21, %s28
      %p260 = scmp.eq.s32.totalorder %s259, 0
      %s262 = sadd.s32 %s261, 1
      %s263 = scalar_select %p260, %s261, %s262
      %p266 = pneg %p260
      %p267 = scmp.eq.s32.totalorder %s21, 5
      %p268 = por %p266, %p267
      %p269 = scmp.ne.s32.totalorder %s261, %s264
      %p270 = scmp.eq.s32.totalorder %s21, 0
      %p271 = por %p269, %p270
      %p272 = scmp.ne.s32.totalorder %s261, %s264
      %p273 = scmp.eq.s32.totalorder %s26, 5
      %p274 = por %p272, %p273
      %p275 = scmp.ne.s32.totalorder %s264, %s265
      %p276 = scmp.eq.s32.totalorder %s26, 0
      %p277 = por %p275, %p276
      %p278 = scmp.ne.s32.totalorder %s264, %s265
      %p279 = scmp.eq.s32.totalorder %s27, 5
      %p280 = por %p278, %p279
      %p282 = scmp.ne.s32.totalorder %s265, %s281
      %p283 = scmp.eq.s32.totalorder %s27, 0
      %p284 = por %p282, %p283
      %s285 = ssub.s32 %s21, %s28
      %p286 = scmp.eq.s32.totalorder %s285, 0
      %s288 = sadd.s32 %s287, 1
      %s289 = scalar_select %p286, %s287, %s288
      %p292 = pneg %p286
      %p293 = scmp.eq.s32.totalorder %s21, 5
      %p294 = por %p292, %p293
      %p295 = scmp.ne.s32.totalorder %s287, %s290
      %p296 = scmp.eq.s32.totalorder %s21, 0
      %p297 = por %p295, %p296
      %p298 = scmp.ne.s32.totalorder %s287, %s290
      %p299 = scmp.eq.s32.totalorder %s26, 5
      %p300 = por %p298, %p299
      %p301 = scmp.ne.s32.totalorder %s290, %s291
      %p302 = scmp.eq.s32.totalorder %s26, 0
      %p303 = por %p301, %p302
      %p304 = scmp.ne.s32.totalorder %s290, %s291
      %p305 = scmp.eq.s32.totalorder %s27, 5
      %p306 = por %p304, %p305
      %p308 = scmp.ne.s32.totalorder %s291, %s307
      %p309 = scmp.eq.s32.totalorder %s27, 0
      %p310 = por %p308, %p309
      %p311 = scmp.le.s32.totalorder 1, %s21
      %p312 = scmp.lt.s32.totalorder %s21, 7
      %p313 = pnand %p311, %p312
      %p314 = pneg %p313
      // Predicated region
      $region9: #{yuv_ms_ssim_loss.7} parent=5 // pred_check
        _
      $region10: #{yuv_ms_ssim_loss.7} parent=5 // pred_check_branch
        %316 = sbr.rel (%p313) target = $region12
      $region11: #{yuv_ms_ssim_loss.7} parent=5 // pred_region
        %s317 = ssub.s32 %s21, 1
        // Predicated region
        $region13: #{yuv_ms_ssim_loss.7} parent=11 // pred_check
          %p318 = pneg %p94
        $region14: #{yuv_ms_ssim_loss.7} parent=11 // pred_check_branch
          %320 = sbr.rel (%p318) target = $region16
        $region15: #{yuv_ms_ssim_loss.7} parent=11 // pred_region
          _
        $region16: #{yuv_ms_ssim_loss.7} parent=11 // pred_fallthru
          _
        // Predicated region
        $region17: #{yuv_ms_ssim_loss.7} parent=11 // pred_check
          %p321 = pneg %p115
        $region18: #{yuv_ms_ssim_loss.7} parent=11 // pred_check_branch
          %323 = sbr.rel (%p321) target = $region20
        $region19: #{yuv_ms_ssim_loss.7} parent=11 // pred_region
          _
        $region20: #{yuv_ms_ssim_loss.7} parent=11 // pred_fallthru
          _
        // Predicated region
        $region21: #{yuv_ms_ssim_loss.7} parent=11 // pred_check
          %p324 = pneg %p136
        $region22: #{yuv_ms_ssim_loss.7} parent=11 // pred_check_branch
          %326 = sbr.rel (%p324) target = $region24
        $region23: #{yuv_ms_ssim_loss.7} parent=11 // pred_region
          _
        $region24: #{yuv_ms_ssim_loss.7} parent=11 // pred_fallthru
          _
        // Predicated region
        $region25: #{yuv_ms_ssim_loss.7} parent=11 // pred_check
          %p327 = pneg %p157
        $region26: #{yuv_ms_ssim_loss.7} parent=11 // pred_check_branch
          %329 = sbr.rel (%p327) target = $region28
        $region27: #{yuv_ms_ssim_loss.7} parent=11 // pred_region
          _
        $region28: #{yuv_ms_ssim_loss.7} parent=11 // pred_fallthru
          _
        // Predicated region
        $region29: #{yuv_ms_ssim_loss.7} parent=11 // pred_check
          %p330 = pneg %p178
        $region30: #{yuv_ms_ssim_loss.7} parent=11 // pred_check_branch
          %332 = sbr.rel (%p330) target = $region32
        $region31: #{yuv_ms_ssim_loss.7} parent=11 // pred_region
          _
        $region32: #{yuv_ms_ssim_loss.7} parent=11 // pred_fallthru
          _
        // Predicated region
        $region33: #{yuv_ms_ssim_loss.7} parent=11 // pred_check
          %p333 = pneg %p199
        $region34: #{yuv_ms_ssim_loss.7} parent=11 // pred_check_branch
          %335 = sbr.rel (%p333) target = $region36
        $region35: #{yuv_ms_ssim_loss.7} parent=11 // pred_region
          _
        $region36: #{yuv_ms_ssim_loss.7} parent=11 // pred_fallthru
          _
      $region12: #{yuv_ms_ssim_loss.7} parent=5 // pred_fallthru
        _
      %p336 = scmp.lt.s32.totalorder %s21, 6
      // Predicated region
      $region37: #{yuv_ms_ssim_loss.7} parent=5 // pred_check
        %p337 = pneg %p336
      $region38: #{yuv_ms_ssim_loss.7} parent=5 // pred_check_branch
        %339 = sbr.rel (%p337) target = $region40
      $region39: #{yuv_ms_ssim_loss.7} parent=5 // pred_region
        // Predicated region
        $region41: #{yuv_ms_ssim_loss.7} parent=39 // pred_check
          %p340 = pneg %p41
        $region42: #{yuv_ms_ssim_loss.7} parent=39 // pred_check_branch
          %342 = sbr.rel (%p340) target = $region44
        $region43: #{yuv_ms_ssim_loss.7} parent=39 // pred_region
          %p343 = scmp.lt.s32.totalorder %s21, 5
          %s344 = scalar_select %p343, %s21, 5
          %s345 = smul.addr %s344, 8
          %s346 = scalar_lea.vmem %s0, %s345
        $region44: #{yuv_ms_ssim_loss.7} parent=39 // pred_fallthru
          _
        // Predicated region
        $region45: #{yuv_ms_ssim_loss.7} parent=39 // pred_check
          %p347 = pneg %p67
        $region46: #{yuv_ms_ssim_loss.7} parent=39 // pred_check_branch
          %349 = sbr.rel (%p347) target = $region48
        $region47: #{yuv_ms_ssim_loss.7} parent=39 // pred_region
          %p350 = scmp.lt.s32.totalorder %s21, 5
          %s351 = scalar_select %p350, %s21, 5
          %s352 = smul.addr %s351, 8
          %s353 = scalar_lea.vmem %s1, %s352
        $region48: #{yuv_ms_ssim_loss.7} parent=39 // pred_fallthru
          _
      $region40: #{yuv_ms_ssim_loss.7} parent=5 // pred_fallthru
        _
      %p354 = scmp.le.s32.totalorder 1, %s21
      %p355 = scmp.lt.s32.totalorder %s21, 7
      %p356 = pnand %p354, %p355
      %p357 = pneg %p356
      // Predicated region
      $region49: #{yuv_ms_ssim_loss.7} parent=5 // pred_check
        _
      $region50: #{yuv_ms_ssim_loss.7} parent=5 // pred_check_branch
        %359 = sbr.rel (%p356) target = $region52
      $region51: #{yuv_ms_ssim_loss.7} parent=5 // pred_region
        %s360 = ssub.s32 %s21, 1
        %p361 = scmp.lt.s32.totalorder %s26, 5
        %s362 = scalar_select %p361, %s26, 5
        %s363 = smul.addr %s362, 8
        %s364 = scalar_lea.vmem %s0, %s363
        %p365 = pneg %p47
        %p366 = pneg %p44
        %p367 = scmp.lt.s32.totalorder %s26, 5
        %s368 = scalar_select %p367, %s26, 5
        %s369 = smul.addr %s368, 8
        %s370 = scalar_lea.vmem %s1, %s369
        %p371 = pneg %p73
        %p372 = pneg %p70
        %p373 = pneg %p94
        %p374 = pneg %p91
        %p375 = pneg %p115
        %p376 = pneg %p112
        %p377 = pneg %p136
        %p378 = pneg %p133
        %p379 = pneg %p157
        %p380 = pneg %p154
        %p381 = pneg %p178
        %p382 = pneg %p175
        %p383 = pneg %p199
        %p384 = pneg %p196
        %p385 = pneg %p225
        %p386 = pneg %p222
        %s387 = sand.u32 %s212, 1
        %s388 = scalar_lea.sflag [#allocation3], %s387
        %s389 = sand.u32 %s212, 1
        %s390 = scalar_lea.vmem [#allocation2], %s389
        %p391 = pneg %p251
        %p392 = pneg %p248
        %p393 = scmp.lt.s32.totalorder %s26, 5
        %s394 = scalar_select %p393, %s26, 5
        %s395 = scalar_lea.vmem %s9, %s394
        %p396 = pneg %p277
        %p397 = pneg %p274
        %p398 = scmp.lt.s32.totalorder %s26, 5
        %s399 = scalar_select %p398, %s26, 5
        %s400 = smul.addr %s399, 8
        %s401 = scalar_lea.vmem %s10, %s400
        %p402 = pneg %p303
        %p403 = pneg %p300
        %p404 = scmp.lt.s32.totalorder %s26, 5
        %s405 = scalar_select %p404, %s26, 5
        %s406 = smul.addr %s405, 8
        %s407 = scalar_lea.vmem %s11, %s406
        %p408 = scmp.lt.s32.totalorder %s26, 5
        %s409 = scalar_select %p408, %s26, 5
        %s410 = smul.addr %s409, 8
        %s411 = scalar_lea.vmem %s0, %s410
        %p412 = scmp.lt.s32.totalorder %s26, 5
        %s413 = scalar_select %p412, %s26, 5
        %s414 = smul.addr %s413, 8
        %s415 = scalar_lea.vmem %s1, %s414
        %p416 = scmp.lt.s32.totalorder %s26, 5
        %s417 = scalar_select %p416, %s26, 5
        %s418 = scalar_lea.vmem %s9, %s417
        %p419 = scmp.lt.s32.totalorder %s26, 5
        %s420 = scalar_select %p419, %s26, 5
        %s421 = smul.addr %s420, 8
        %s422 = scalar_lea.vmem %s10, %s421
        %p423 = scmp.lt.s32.totalorder %s26, 5
        %s424 = scalar_select %p423, %s26, 5
        %s425 = smul.addr %s424, 8
        %s426 = scalar_lea.vmem %s11, %s425
        %v427 = vld [vmem:[%s411] sm:$0xff]
        %v428 = vld [vmem:[%s415] sm:$0xff]
        %v429 = vld [vmem:[%s2] sm:$0xff]
        %v430 = vld [vmem:[%s2 + $0x8] sm:$0xff]
        %v431 = vld [vmem:[%s3] sm:$0xff]
        %v432 = vld [vmem:[%s3 + $0x8] sm:$0xff]
        %v433 = vld [vmem:[%s3 + $0x10] sm:$0xff]
        %v434 = vld [vmem:[%s3 + $0x18] sm:$0xff]
        %v435 = vld [vmem:[%s3 + $0x20] sm:$0xff]
        %v436 = vld [vmem:[%s3 + $0x28] sm:$0xff]
        %v437 = vld [vmem:[%s3 + $0x30] sm:$0xff]
        %v438 = vld [vmem:[%s3 + $0x38] sm:$0xff]
        %v439 = vld [vmem:[%s3 + $0x40] sm:$0xff]
        %v440 = vld [vmem:[%s3 + $0x48] sm:$0xff]
        %v441 = vld [vmem:[%s3 + $0x50] sm:$0xff]
        %v442 = vld [vmem:[%s3 + $0x58] sm:$0xff]
        %v443 = vld [vmem:[%s3 + $0x60] sm:$0xff]
        %v444 = vld [vmem:[%s3 + $0x68] sm:$0xff]
        %v445 = vld [vmem:[%s3 + $0x70] sm:$0xff]
        %v446 = vld [vmem:[%s3 + $0x78] sm:$0xff]
        %v447 = vld [vmem:[%s4] sm:$0xff]
        %v448 = vld [vmem:[%s4 + $0x8] sm:$0xff]
        %v449 = vld [vmem:[%s5] sm:$0xff]
        %v450 = vld [vmem:[%s5 + $0x8] sm:$0xff]
        %p451 = scmp.lt.s32.totalorder %s26, 0
        %s452 = ssub.s32 0, %s26
        %s453 = scalar_select %p451, %s452, %s26
        %s454 = sdiv.u32.pop %s453, 3
        %s455 = srem.u32.pop %s453, 3
        %s456 = ssub.s32 0, %s455
        %s457 = scalar_select %p451, %s456, %s455
        %p458 = scmp.ne.s32.totalorder %s457, 0
        %p459 = scmp.lt.s32.totalorder %s457, 0
        %p460 = pnand %p459, %p458
        %p461 = pneg %p460
        %s462 = sadd.s32 %s457, 3
        %s463 = scalar_select %p461, %s462, %s457
        %p464 = scmp.eq.s32.totalorder %s463, 0
        %s465 = scalar_select %p464, 0.0, 128.0
        %v466 = vmul.f32 %v427, %v427
        %v467 = vmul.f32 %v428, %v428
        %v468 = vmul.f32 %v427, %v428
        %469 = vmatpush.msra.mxu0 %v446
        %470 = vmatpush.msra.mxu0 %v445
        %471 = vmatpush.msra.mxu0 %v444
        %472 = vmatpush.msra.mxu0 %v443
        %473 = vmatpush.msra.mxu0 %v442
        %474 = vmatpush.msra.mxu0 %v441
        %475 = vmatpush.msra.mxu0 %v440
        %476 = vmatpush.msra.mxu0 %v439
        %477 = vmatpush.msra.mxu0 %v438
        %478 = vmatpush.msra.mxu0 %v437
        %479 = vmatpush.msra.mxu0 %v436
        %480 = vmatpush.msra.mxu0 %v435
        %481 = vmatpush.msra.mxu0 %v434
        %482 = vmatpush.msra.mxu0 %v433
        %483 = vmatpush.msra.mxu0 %v432
        %484 = vmatpush.msra.mxu0 %v431
        %485 = vmatmul.f32.gmra.mxu0 %v427
        %v486 = vpop.f32.mrf.mxu0
        %v487 = vadd.f32 0.0, %v486
        %488 = vmatmul.f32.gmra.mxu0 %v428
        %v489 = vpop.f32.mrf.mxu0
        %v490 = vadd.f32 0.0, %v489
        %491 = vmatmul.f32.gmra.mxu0 %v466
        %v492 = vpop.f32.mrf.mxu0
        %v493 = vadd.f32 0.0, %v492
        %494 = vmatmul.f32.gmra.mxu0 %v467
        %v495 = vpop.f32.mrf.mxu0
        %v496 = vadd.f32 0.0, %v495
        %497 = vmatmul.f32.gmra.mxu0 %v468
        %v498 = vpop.f32.mrf.mxu0
        %v499 = vadd.f32 0.0, %v498
        %500 = vdwg.mxu0
        %vm501 = vcmask 64512
        %v503 = vsel %vm501, %v429, 0
        %v506 = vsel %vm501, %v430, 0
        %508 = vmatpush.msra.mxu0 0.0
        %509 = vmatpush.msra.mxu0 0.0
        %510 = vmatpush.msra.mxu0 0.0
        %511 = vmatpush.msra.mxu0 0.0
        %512 = vmatpush.msra.mxu0 0.0
        %513 = vmatpush.msra.mxu0 0.0
        %514 = vmatpush.msra.mxu0 0.0
        %515 = vmatpush.msra.mxu0 0.0
        %516 = vmatpush.msra.mxu0 0.0
        %517 = vmatpush.msra.mxu0 0.0
        %518 = vmatpush.msra.mxu0 0.0
        %519 = vmatpush.msra.mxu0 0.0
        %520 = vmatpush.msra.mxu0 0.0
        %521 = vmatpush.msra.mxu0 0.0
        %522 = vmatpush.msra.mxu0 0.0
        %523 = vmatpush.msra.mxu0 %v487
        %524 = vmatmul.f32.gmra.mxu0 %v503
        %v525 = vpop.f32.mrf.mxu0
        %v526 = vadd.f32 0.0, %v525
        %527 = vmatmul.f32.gmra.mxu0 %v506
        %v528 = vpop.f32.mrf.mxu0
        %v529 = vadd.f32 0.0, %v528
        %530 = vdwg.mxu0
        %531 = vmatpush.msra.mxu0 0.0
        %532 = vmatpush.msra.mxu0 0.0
        %533 = vmatpush.msra.mxu0 0.0
        %534 = vmatpush.msra.mxu0 0.0
        %535 = vmatpush.msra.mxu0 0.0
        %536 = vmatpush.msra.mxu0 0.0
        %537 = vmatpush.msra.mxu0 0.0
        %538 = vmatpush.msra.mxu0 0.0
        %539 = vmatpush.msra.mxu0 0.0
        %540 = vmatpush.msra.mxu0 0.0
        %541 = vmatpush.msra.mxu0 0.0
        %542 = vmatpush.msra.mxu0 0.0
        %543 = vmatpush.msra.mxu0 0.0
        %544 = vmatpush.msra.mxu0 0.0
        %545 = vmatpush.msra.mxu0 0.0
        %546 = vmatpush.msra.mxu0 %v490
        %547 = vmatmul.f32.gmra.mxu0 %v503
        %v548 = vpop.f32.mrf.mxu0
        %v549 = vadd.f32 0.0, %v548
        %550 = vmatmul.f32.gmra.mxu0 %v506
        %v551 = vpop.f32.mrf.mxu0
        %v552 = vadd.f32 0.0, %v551
        %553 = vdwg.mxu0
        %554 = vmatpush.msra.mxu0 0.0
        %555 = vmatpush.msra.mxu0 0.0
        %556 = vmatpush.msra.mxu0 0.0
        %557 = vmatpush.msra.mxu0 0.0
        %558 = vmatpush.msra.mxu0 0.0
        %559 = vmatpush.msra.mxu0 0.0
        %560 = vmatpush.msra.mxu0 0.0
        %561 = vmatpush.msra.mxu0 0.0
        %562 = vmatpush.msra.mxu0 0.0
        %563 = vmatpush.msra.mxu0 0.0
        %564 = vmatpush.msra.mxu0 0.0
        %565 = vmatpush.msra.mxu0 0.0
        %566 = vmatpush.msra.mxu0 0.0
        %567 = vmatpush.msra.mxu0 0.0
        %568 = vmatpush.msra.mxu0 0.0
        %569 = vmatpush.msra.mxu0 %v493
        %570 = vmatmul.f32.gmra.mxu0 %v503
        %v571 = vpop.f32.mrf.mxu0
        %v572 = vadd.f32 0.0, %v571
        %573 = vmatmul.f32.gmra.mxu0 %v506
        %v574 = vpop.f32.mrf.mxu0
        %v575 = vadd.f32 0.0, %v574
        %576 = vdwg.mxu0
        %577 = vmatpush.msra.mxu0 0.0
        %578 = vmatpush.msra.mxu0 0.0
        %579 = vmatpush.msra.mxu0 0.0
        %580 = vmatpush.msra.mxu0 0.0
        %581 = vmatpush.msra.mxu0 0.0
        %582 = vmatpush.msra.mxu0 0.0
        %583 = vmatpush.msra.mxu0 0.0
        %584 = vmatpush.msra.mxu0 0.0
        %585 = vmatpush.msra.mxu0 0.0
        %586 = vmatpush.msra.mxu0 0.0
        %587 = vmatpush.msra.mxu0 0.0
        %588 = vmatpush.msra.mxu0 0.0
        %589 = vmatpush.msra.mxu0 0.0
        %590 = vmatpush.msra.mxu0 0.0
        %591 = vmatpush.msra.mxu0 0.0
        %592 = vmatpush.msra.mxu0 %v496
        %593 = vmatmul.f32.gmra.mxu0 %v503
        %v594 = vpop.f32.mrf.mxu0
        %v595 = vadd.f32 0.0, %v594
        %596 = vmatmul.f32.gmra.mxu0 %v506
        %v597 = vpop.f32.mrf.mxu0
        %v598 = vadd.f32 0.0, %v597
        %599 = vdwg.mxu0
        %600 = vmatpush.msra.mxu0 0.0
        %601 = vmatpush.msra.mxu0 0.0
        %602 = vmatpush.msra.mxu0 0.0
        %603 = vmatpush.msra.mxu0 0.0
        %604 = vmatpush.msra.mxu0 0.0
        %605 = vmatpush.msra.mxu0 0.0
        %606 = vmatpush.msra.mxu0 0.0
        %607 = vmatpush.msra.mxu0 0.0
        %608 = vmatpush.msra.mxu0 0.0
        %609 = vmatpush.msra.mxu0 0.0
        %610 = vmatpush.msra.mxu0 0.0
        %611 = vmatpush.msra.mxu0 0.0
        %612 = vmatpush.msra.mxu0 0.0
        %613 = vmatpush.msra.mxu0 0.0
        %614 = vmatpush.msra.mxu0 0.0
        %615 = vmatpush.msra.mxu0 %v499
        %616 = vmatmul.f32.gmra.mxu0 %v503
        %v617 = vpop.f32.mrf.mxu0
        %v618 = vadd.f32 0.0, %v617
        %619 = vmatmul.f32.gmra.mxu0 %v506
        %v620 = vpop.f32.mrf.mxu0
        %v621 = vadd.f32 0.0, %v620
        %622 = vdwg.mxu0
        %v623 = vsub.f32 1.0, %v447
        %v624 = vsub.f32 1.0, %v448
        %s625 = smul.f32 %s465, %s465
        %v626 = vstv %s625
        %v627 = vmul.f32 %v626, %v447
        %v628 = vmul.f32 %v626, %v448
        %v629 = vmul.f32 %v627, %v623
        %v630 = vmul.f32 %v628, %v624
        %v631 = vstv %s465
        %v632 = vmul.f32 %v631, %v447
        %v633 = vmul.f32 %v631, %v448
        %v634 = vadd.f32 %v526, %v632
        %v635 = vadd.f32 %v529, %v633
        %v636 = vadd.f32 %v549, %v632
        %v637 = vadd.f32 %v552, %v633
        %v638 = vmul.f32 %v634, %v634
        %v639 = vmul.f32 %v635, %v635
        %v640 = vmul.f32 %v636, %v636
        %v641 = vmul.f32 %v637, %v637
        %v642 = vmul.f32 %v634, %v636
        %v643 = vmul.f32 %v635, %v637
        %v644 = vmul.f32 %v526, %v526
        %v645 = vmul.f32 %v529, %v529
        %v646 = vsub.f32 %v572, %v644
        %v647 = vsub.f32 %v575, %v645
        %s648 = smul.f32 %s465, 2.0
        %v649 = vstv %s648
        %v650 = vmul.f32 %v649, %v526
        %v651 = vmul.f32 %v649, %v529
        %v652 = vmul.f32 %v650, %v623
        %v653 = vmul.f32 %v651, %v624
        %v654 = vadd.f32 %v646, %v652
        %v655 = vadd.f32 %v647, %v653
        %v656 = vadd.f32 %v654, %v629
        %v657 = vadd.f32 %v655, %v630
        %v658 = vmul.f32 %v549, %v549
        %v659 = vmul.f32 %v552, %v552
        %v660 = vsub.f32 %v595, %v658
        %v661 = vsub.f32 %v598, %v659
        %v662 = vmul.f32 %v649, %v549
        %v663 = vmul.f32 %v649, %v552
        %v664 = vmul.f32 %v662, %v623
        %v665 = vmul.f32 %v663, %v624
        %v666 = vadd.f32 %v660, %v664
        %v667 = vadd.f32 %v661, %v665
        %v668 = vadd.f32 %v666, %v629
        %v669 = vadd.f32 %v667, %v630
        %v670 = vmul.f32 %v526, %v549
        %v671 = vmul.f32 %v529, %v552
        %v672 = vsub.f32 %v618, %v670
        %v673 = vsub.f32 %v621, %v671
        %v674 = vadd.f32 %v526, %v549
        %v675 = vadd.f32 %v529, %v552
        %v676 = vmul.f32 %v631, %v674
        %v677 = vmul.f32 %v631, %v675
        %v678 = vmul.f32 %v676, %v623
        %v679 = vmul.f32 %v677, %v624
        %v680 = vadd.f32 %v672, %v678
        %v681 = vadd.f32 %v673, %v679
        %v682 = vadd.f32 %v680, %v629
        %v683 = vadd.f32 %v681, %v630
        %v684 = vmul.f32 %v682, 2.0
        %v685 = vmul.f32 %v683, 2.0
        %v686 = vadd.f32 %v684, 0.0009
        %v687 = vadd.f32 %v685, 0.0009
        %v688 = vadd.f32 %v656, %v668
        %v689 = vadd.f32 %v657, %v669
        %v690 = vadd.f32 %v688, 0.0009
        %v691 = vadd.f32 %v689, 0.0009
        %v692 = vrcp.pop %v690
        %v693 = vrcp.pop %v691
        %v694 = vmul.f32 %v690, %v692
        %v695 = vmul.f32 %v691, %v693
        %v696 = vsub.f32 2.0, %v694
        %v697 = vsub.f32 2.0, %v695
        %v698 = vmul.f32 %v692, %v696
        %v699 = vmul.f32 %v693, %v697
        %v700 = vmul.f32 %v686, %v698
        %v701 = vmul.f32 %v687, %v699
        %v702 = vmul.f32 %v642, 2.0
        %v703 = vmul.f32 %v643, 2.0
        %v704 = vadd.f32 %v702, 0.0001
        %v705 = vadd.f32 %v703, 0.0001
        %v706 = vadd.f32 %v638, %v640
        %v707 = vadd.f32 %v639, %v641
        %v708 = vadd.f32 %v706, 0.0001
        %v709 = vadd.f32 %v707, 0.0001
        %v710 = vrcp.pop %v708
        %v711 = vrcp.pop %v709
        %v712 = vmul.f32 %v708, %v710
        %v713 = vmul.f32 %v709, %v711
        %v714 = vsub.f32 2.0, %v712
        %v715 = vsub.f32 2.0, %v713
        %v716 = vmul.f32 %v710, %v714
        %v717 = vmul.f32 %v711, %v715
        %v718 = vmul.f32 %v704, %v716
        %v719 = vmul.f32 %v705, %v717
        %v720 = vmul.f32 %v718, %v700
        %v721 = vmul.f32 %v719, %v701
        %v722 = vmul.f32 %v720, %v449
        %v723 = vmul.f32 %v721, %v450
        %v724 = vadd.f32 %v722, %v723
        %725 = vadd.xlane.f32.xlu0 %v724
        %v726 = vpop.xlane.xlu0 %725
        %v727 = vrot.slane %v726, 4
        %v728 = vadd.f32 %v726, %v727
        %v729 = vrot.slane %v728, 2
        %v730 = vadd.f32 %v728, %v729
        %v731 = vrot.slane %v730, 1
        %v732 = vadd.f32 %v730, %v731
        %s733 = vtos %v732
        %v734 = vstv %s733
        %vm735 = vcmask 0
        %736 = vst.msk [vmem:[%s390] sm:$0x1] %vm735, %v734
        %v737 = vmul.f32 %v700, %v449
        %v738 = vmul.f32 %v701, %v450
        %v739 = vadd.f32 %v737, %v738
        %740 = vadd.xlane.f32.xlu0 %v739
        %v741 = vpop.xlane.xlu0 %740
        %v742 = vrot.slane %v741, 4
        %v743 = vadd.f32 %v741, %v742
        %v744 = vrot.slane %v743, 2
        %v745 = vadd.f32 %v743, %v744
        %v746 = vrot.slane %v745, 1
        %v747 = vadd.f32 %v745, %v746
        %s748 = vtos %v747
        %v749 = vstv %s748
        %750 = vst.msk [vmem:[%s418] sm:$0x1] %vm735, %v749
        %v751 = vld [vmem:[%s6] sm:$0xff]
        %v752 = vld [vmem:[%s7] sm:$0xff]
        %v753 = vld [vmem:[%s7 + $0x8] sm:$0xff]
        %v754 = vld [vmem:[%s7 + $0x10] sm:$0xff]
        %v755 = vld [vmem:[%s7 + $0x18] sm:$0xff]
        %v756 = vld [vmem:[%s7 + $0x20] sm:$0xff]
        %v757 = vld [vmem:[%s7 + $0x28] sm:$0xff]
        %v758 = vld [vmem:[%s7 + $0x30] sm:$0xff]
        %v759 = vld [vmem:[%s7 + $0x38] sm:$0xff]
        %v760 = vld [vmem:[%s7 + $0x40] sm:$0xff]
        %v761 = vld [vmem:[%s7 + $0x48] sm:$0xff]
        %v762 = vld [vmem:[%s7 + $0x50] sm:$0xff]
        %v763 = vld [vmem:[%s7 + $0x58] sm:$0xff]
        %v764 = vld [vmem:[%s7 + $0x60] sm:$0xff]
        %v765 = vld [vmem:[%s7 + $0x68] sm:$0xff]
        %v766 = vld [vmem:[%s7 + $0x70] sm:$0xff]
        %v767 = vld [vmem:[%s7 + $0x78] sm:$0xff]
        %768 = vmatpush.msra.mxu0 %v767
        %769 = vmatpush.msra.mxu0 %v766
        %770 = vmatpush.msra.mxu0 %v765
        %771 = vmatpush.msra.mxu0 %v764
        %772 = vmatpush.msra.mxu0 %v763
        %773 = vmatpush.msra.mxu0 %v762
        %774 = vmatpush.msra.mxu0 %v761
        %775 = vmatpush.msra.mxu0 %v760
        %776 = vmatpush.msra.mxu0 %v759
        %777 = vmatpush.msra.mxu0 %v758
        %778 = vmatpush.msra.mxu0 %v757
        %779 = vmatpush.msra.mxu0 %v756
        %780 = vmatpush.msra.mxu0 %v755
        %781 = vmatpush.msra.mxu0 %v754
        %782 = vmatpush.msra.mxu0 %v753
        %783 = vmatpush.msra.mxu0 %v752
        %784 = vmatmul.f32.gmra.mxu0 %v427
        %v785 = vpop.f32.mrf.mxu0
        %v786 = vadd.f32 0.0, %v785
        %787 = vmatmul.f32.gmra.mxu0 %v428
        %v788 = vpop.f32.mrf.mxu0
        %v789 = vadd.f32 0.0, %v788
        %790 = vdwg.mxu0
        %v792 = vsel %vm501, %v751, 0
        %794 = vmatpush.msra.mxu0 0.0
        %795 = vmatpush.msra.mxu0 0.0
        %796 = vmatpush.msra.mxu0 0.0
        %797 = vmatpush.msra.mxu0 0.0
        %798 = vmatpush.msra.mxu0 0.0
        %799 = vmatpush.msra.mxu0 0.0
        %800 = vmatpush.msra.mxu0 0.0
        %801 = vmatpush.msra.mxu0 0.0
        %802 = vmatpush.msra.mxu0 0.0
        %803 = vmatpush.msra.mxu0 0.0
        %804 = vmatpush.msra.mxu0 0.0
        %805 = vmatpush.msra.mxu0 0.0
        %806 = vmatpush.msra.mxu0 0.0
        %807 = vmatpush.msra.mxu0 0.0
        %808 = vmatpush.msra.mxu0 0.0
        %809 = vmatpush.msra.mxu0 %v786
        %810 = vmatmul.f32.gmra.mxu0 %v792
        %v811 = vpop.f32.mrf.mxu0
        %v812 = vadd.f32 0.0, %v811
        %813 = vdwg.mxu0
        %814 = vst [vmem:[%s422] sm:$0xff] %v812
        %815 = vmatpush.msra.mxu0 0.0
        %816 = vmatpush.msra.mxu0 0.0
        %817 = vmatpush.msra.mxu0 0.0
        %818 = vmatpush.msra.mxu0 0.0
        %819 = vmatpush.msra.mxu0 0.0
        %820 = vmatpush.msra.mxu0 0.0
        %821 = vmatpush.msra.mxu0 0.0
        %822 = vmatpush.msra.mxu0 0.0
        %823 = vmatpush.msra.mxu0 0.0
        %824 = vmatpush.msra.mxu0 0.0
        %825 = vmatpush.msra.mxu0 0.0
        %826 = vmatpush.msra.mxu0 0.0
        %827 = vmatpush.msra.mxu0 0.0
        %828 = vmatpush.msra.mxu0 0.0
        %829 = vmatpush.msra.mxu0 0.0
        %830 = vmatpush.msra.mxu0 %v789
        %831 = vmatmul.f32.gmra.mxu0 %v792
        %v832 = vpop.f32.mrf.mxu0
        %v833 = vadd.f32 0.0, %v832
        %834 = vdwg.mxu0
        %835 = vst [vmem:[%s426] sm:$0xff] %v833
        %s836 = sand.u32 %s212, 1
        %s837 = scalar_lea.sflag [#allocation3], %s836
        %s838 = sand.u32 %s212, 1
        %s839 = scalar_lea.vmem [#allocation2], %s838
        %p840 = scmp.lt.s32.totalorder %s26, 5
        %s841 = scalar_select %p840, %s26, 5
        %s842 = scalar_lea.vmem %s9, %s841
        %p843 = scmp.lt.s32.totalorder %s26, 5
        %s844 = scalar_select %p843, %s26, 5
        %s845 = smul.addr %s844, 8
        %s846 = scalar_lea.vmem %s10, %s845
        %p847 = scmp.lt.s32.totalorder %s26, 5
        %s848 = scalar_select %p847, %s26, 5
        %s849 = smul.addr %s848, 8
        %s850 = scalar_lea.vmem %s11, %s849
        // Predicated region
        $region53: #{yuv_ms_ssim_loss.7} parent=51 // pred_check
          %p851 = pneg %p222
        $region54: #{yuv_ms_ssim_loss.7} parent=51 // pred_check_branch
          %853 = sbr.rel (%p851) target = $region56
        $region55: #{yuv_ms_ssim_loss.7} parent=51 // pred_region
          %855 = vsyncadd %s837, 0
          %s856 = scalar_lea.hbm %s8, %s26
          %s858 = sshll.u32 %s839, 4
          %s859 = int_to_ptr.vmem [resolvable:$true] %s858
          %s860 = sshll.u32 %s856, 4
          %s861 = int_to_ptr.hbm [resolvable:$true] %s860
          %863 = dma.vmem_to_hbm [thread:$0]  %s859, 16, %s861, %s837
        $region56: #{yuv_ms_ssim_loss.7} parent=51 // pred_fallthru
          _
        // Predicated region
        $region57: #{yuv_ms_ssim_loss.7} parent=51 // pred_check
          %p864 = pneg %p248
        $region58: #{yuv_ms_ssim_loss.7} parent=51 // pred_check_branch
          %866 = sbr.rel (%p864) target = $region60
        $region59: #{yuv_ms_ssim_loss.7} parent=51 // pred_region
          _
        $region60: #{yuv_ms_ssim_loss.7} parent=51 // pred_fallthru
          _
        // Predicated region
        $region61: #{yuv_ms_ssim_loss.7} parent=51 // pred_check
          %p867 = pneg %p274
        $region62: #{yuv_ms_ssim_loss.7} parent=51 // pred_check_branch
          %869 = sbr.rel (%p867) target = $region64
        $region63: #{yuv_ms_ssim_loss.7} parent=51 // pred_region
          _
        $region64: #{yuv_ms_ssim_loss.7} parent=51 // pred_fallthru
          _
        // Predicated region
        $region65: #{yuv_ms_ssim_loss.7} parent=51 // pred_check
          %p870 = pneg %p300
        $region66: #{yuv_ms_ssim_loss.7} parent=51 // pred_check_branch
          %872 = sbr.rel (%p870) target = $region68
        $region67: #{yuv_ms_ssim_loss.7} parent=51 // pred_region
          _
        $region68: #{yuv_ms_ssim_loss.7} parent=51 // pred_fallthru
          _
      $region52: #{yuv_ms_ssim_loss.7} parent=5 // pred_fallthru
        _
      %p873 = scmp.le.s32.totalorder 2, %s21
      // Predicated region
      $region69: #{yuv_ms_ssim_loss.7} parent=5 // pred_check
        %p874 = pneg %p873
      $region70: #{yuv_ms_ssim_loss.7} parent=5 // pred_check_branch
        %876 = sbr.rel (%p874) target = $region72
      $region71: #{yuv_ms_ssim_loss.7} parent=5 // pred_region
        %s877 = ssub.s32 %s21, 2
        // Predicated region
        $region73: #{yuv_ms_ssim_loss.7} parent=71 // pred_check
          %p878 = pneg %p228
        $region74: #{yuv_ms_ssim_loss.7} parent=71 // pred_check_branch
          %880 = sbr.rel (%p878) target = $region76
        $region75: #{yuv_ms_ssim_loss.7} parent=71 // pred_region
          %s881 = sand.u32 %s213, 1
          %s882 = scalar_lea.sflag [#allocation3], %s881
          %s883 = sand.u32 %s213, 1
          %s884 = scalar_lea.vmem [#allocation2], %s883
          %886 = dma.done %s882, 16
        $region76: #{yuv_ms_ssim_loss.7} parent=71 // pred_fallthru
          _
        // Predicated region
        $region77: #{yuv_ms_ssim_loss.7} parent=71 // pred_check
          %p887 = pneg %p254
        $region78: #{yuv_ms_ssim_loss.7} parent=71 // pred_check_branch
          %889 = sbr.rel (%p887) target = $region80
        $region79: #{yuv_ms_ssim_loss.7} parent=71 // pred_region
          %p890 = scmp.lt.s32.totalorder %s27, 5
          %s891 = scalar_select %p890, %s27, 5
          %s892 = scalar_lea.vmem %s9, %s891
        $region80: #{yuv_ms_ssim_loss.7} parent=71 // pred_fallthru
          _
        // Predicated region
        $region81: #{yuv_ms_ssim_loss.7} parent=71 // pred_check
          %p893 = pneg %p280
        $region82: #{yuv_ms_ssim_loss.7} parent=71 // pred_check_branch
          %895 = sbr.rel (%p893) target = $region84
        $region83: #{yuv_ms_ssim_loss.7} parent=71 // pred_region
          %p896 = scmp.lt.s32.totalorder %s27, 5
          %s897 = scalar_select %p896, %s27, 5
          %s898 = smul.addr %s897, 8
          %s899 = scalar_lea.vmem %s10, %s898
        $region84: #{yuv_ms_ssim_loss.7} parent=71 // pred_fallthru
          _
        // Predicated region
        $region85: #{yuv_ms_ssim_loss.7} parent=71 // pred_check
          %p900 = pneg %p306
        $region86: #{yuv_ms_ssim_loss.7} parent=71 // pred_check_branch
          %902 = sbr.rel (%p900) target = $region88
        $region87: #{yuv_ms_ssim_loss.7} parent=71 // pred_region
          %p903 = scmp.lt.s32.totalorder %s27, 5
          %s904 = scalar_select %p903, %s27, 5
          %s905 = smul.addr %s904, 8
          %s906 = scalar_lea.vmem %s11, %s905
        $region88: #{yuv_ms_ssim_loss.7} parent=71 // pred_fallthru
          _
      $region72: #{yuv_ms_ssim_loss.7} parent=5 // pred_fallthru
        _
    $region6: #{yuv_ms_ssim_loss.7} parent=1 // loop_footer
      %s25 = sadd.s32 1, %s21
    $region7: #{yuv_ms_ssim_loss.7} parent=1 // loop_footer_branch
      %20 = sbr.rel target = $region3
    $region8: #{yuv_ms_ssim_loss.7} parent=1 // loop_exit
      _
    %907 = vsyncpa [#allocation3], 1
    %s908 = scalar_lea.sflag [#allocation3], 1
    %909 = vsyncpa %s908, 1

// kernel: yuv_ms_ssim_loss.6
$region0: #{yuv_ms_ssim_loss.6}
  #allocation0 [shape = 'u32[]', space=smem, size = 0x4, offset = 0x4, fixed_abs, tag = 'smem constant byte address 0x4 - core index']
  #allocation1 [shape = 'u32[72,128]{1,0:T(1,128)}', space=vmem, size = 0x9000, scoped, tag = 'internal scratch']
  %s0 = inlined_call_operand.vmem [shape: f32[6,16,128], index: 0, kind: input, shape index: {}]
  %s1 = inlined_call_operand.vmem [shape: f32[6,16,128], index: 1, kind: input, shape index: {}]
  %s2 = inlined_call_operand.vmem [shape: f32[16,16], index: 2, kind: input, shape index: {}]
  %s3 = inlined_call_operand.vmem [shape: f32[128,128], index: 3, kind: input, shape index: {}]
  %s4 = inlined_call_operand.vmem [shape: f32[16,128], index: 4, kind: input, shape index: {}]
  %s5 = inlined_call_operand.vmem [shape: f32[16,128], index: 5, kind: input, shape index: {}]
  %s6 = inlined_call_operand.vmem [shape: f32[8,16], index: 6, kind: input, shape index: {}]
  %s7 = inlined_call_operand.vmem [shape: f32[128,128], index: 7, kind: input, shape index: {}]
  %s8 = inlined_call_operand.hbm [shape: f32[6,1,1], index: 8, kind: output, shape index: {0}]
  %s9 = inlined_call_operand.vmem [shape: f32[6,1,1], index: 9, kind: output, shape index: {1}]
  %s10 = inlined_call_operand.vmem [shape: f32[6,8,128], index: 10, kind: output, shape index: {2}]
  %s11 = inlined_call_operand.vmem [shape: f32[6,8,128], index: 11, kind: output, shape index: {3}]
  %12 = xla_tuple %s8, %s9, %s10, %s11
  %s13 = sld [smem:[#allocation0]]
  $region89: #{yuv_ms_ssim_loss.6} parent=0
    _
  %s15 = ssub.s32 1, %s13
  %s16 = scalar_select 0, %s15, %s13
  $region1: #{yuv_ms_ssim_loss.6} parent=0
    #allocation2 [shape = 'u8[1024]{0}', space=vmem, size = 0x400, scoped, tag = 'output window, operand 0']
    #allocation3 [shape = 's32[2]{0}', space=sflag, size = 0x8, scoped, tag = 'scoped memory for yuv_ms_ssim_loss.6']
    %17 = vsyncpa [#allocation3], 0
    %s18 = scalar_lea.sflag [#allocation3], 1
    %19 = vsyncpa %s18, 0
    loop: start=0, step=1, limit=8
    $region2: #{yuv_ms_ssim_loss.6} parent=1 // loop_pre_header
      _
    $region3: #{yuv_ms_ssim_loss.6} parent=1 // loop_header
      %s21 = sphi 0, %s25
      %p22 = scmp.ge.s32.totalorder %s21, 8
      %s31 = sphi 0, %s33
      %s34 = sphi 0, %s31
      %s35 = sphi 0, %s34
      %s51 = sphi 0, %s35
      %s57 = sphi 0, %s59
      %s60 = sphi 0, %s57
      %s61 = sphi 0, %s60
      %s77 = sphi 0, %s61
      %s81 = sphi 0, %s81
      %s83 = sphi 0, %s81
      %s84 = sphi 0, %s83
      %s98 = sphi 0, %s84
      %s102 = sphi 0, %s102
      %s104 = sphi 0, %s102
      %s105 = sphi 0, %s104
      %s119 = sphi 0, %s105
      %s123 = sphi 0, %s123
      %s125 = sphi 0, %s123
      %s126 = sphi 0, %s125
      %s140 = sphi 0, %s126
      %s144 = sphi 0, %s144
      %s146 = sphi 0, %s144
      %s147 = sphi 0, %s146
      %s161 = sphi 0, %s147
      %s165 = sphi 0, %s165
      %s167 = sphi 0, %s165
      %s168 = sphi 0, %s167
      %s182 = sphi 0, %s168
      %s186 = sphi 0, %s186
      %s188 = sphi 0, %s186
      %s189 = sphi 0, %s188
      %s203 = sphi 0, %s189
      %s209 = sphi 0, %s211
      %s212 = sphi 0, %s209
      %s213 = sphi 0, %s212
      %s229 = sphi 0, %s213
      %s235 = sphi 0, %s237
      %s238 = sphi 0, %s235
      %s239 = sphi 0, %s238
      %s255 = sphi 0, %s239
      %s261 = sphi 0, %s263
      %s264 = sphi 0, %s261
      %s265 = sphi 0, %s264
      %s281 = sphi 0, %s265
      %s287 = sphi 0, %s289
      %s290 = sphi 0, %s287
      %s291 = sphi 0, %s290
      %s307 = sphi 0, %s291
    $region4: #{yuv_ms_ssim_loss.6} parent=1 // loop_header_branch
      %24 = sbr.rel (%p22) target = $region8
    $region5: #{yuv_ms_ssim_loss.6} parent=1 // loop_body
      %s26 = ssub.s32 %s21, 1
      %s27 = ssub.s32 %s21, 2
      %s28 = sadd.s32 %s21, 1
      %s29 = ssub.s32 %s21, %s28
      %p30 = scmp.eq.s32.totalorder %s29, 0
      %s32 = sadd.s32 %s31, 1
      %s33 = scalar_select %p30, %s31, %s32
      %p36 = pneg %p30
      %p37 = scmp.eq.s32.totalorder %s21, 5
      %p38 = por %p36, %p37
      %p39 = scmp.ne.s32.totalorder %s31, %s34
      %p40 = scmp.eq.s32.totalorder %s21, 0
      %p41 = por %p39, %p40
      %p42 = scmp.ne.s32.totalorder %s31, %s34
      %p43 = scmp.eq.s32.totalorder %s26, 5
      %p44 = por %p42, %p43
      %p45 = scmp.ne.s32.totalorder %s34, %s35
      %p46 = scmp.eq.s32.totalorder %s26, 0
      %p47 = por %p45, %p46
      %p48 = scmp.ne.s32.totalorder %s34, %s35
      %p49 = scmp.eq.s32.totalorder %s27, 5
      %p50 = por %p48, %p49
      %p52 = scmp.ne.s32.totalorder %s35, %s51
      %p53 = scmp.eq.s32.totalorder %s27, 0
      %p54 = por %p52, %p53
      %s55 = ssub.s32 %s21, %s28
      %p56 = scmp.eq.s32.totalorder %s55, 0
      %s58 = sadd.s32 %s57, 1
      %s59 = scalar_select %p56, %s57, %s58
      %p62 = pneg %p56
      %p63 = scmp.eq.s32.totalorder %s21, 5
      %p64 = por %p62, %p63
      %p65 = scmp.ne.s32.totalorder %s57, %s60
      %p66 = scmp.eq.s32.totalorder %s21, 0
      %p67 = por %p65, %p66
      %p68 = scmp.ne.s32.totalorder %s57, %s60
      %p69 = scmp.eq.s32.totalorder %s26, 5
      %p70 = por %p68, %p69
      %p71 = scmp.ne.s32.totalorder %s60, %s61
      %p72 = scmp.eq.s32.totalorder %s26, 0
      %p73 = por %p71, %p72
      %p74 = scmp.ne.s32.totalorder %s60, %s61
      %p75 = scmp.eq.s32.totalorder %s27, 5
      %p76 = por %p74, %p75
      %p78 = scmp.ne.s32.totalorder %s61, %s77
      %p79 = scmp.eq.s32.totalorder %s27, 0
      %p80 = por %p78, %p79
      %s82 = sadd.s32 %s81, 1
      %p85 = scmp.eq.s32.totalorder %s21, 5
      %p86 = scmp.ne.s32.totalorder %s81, %s83
      %p87 = scmp.eq.s32.totalorder %s21, 0
      %p88 = por %p86, %p87
      %p89 = scmp.ne.s32.totalorder %s81, %s83
      %p90 = scmp.eq.s32.totalorder %s26, 5
      %p91 = por %p89, %p90
      %p92 = scmp.ne.s32.totalorder %s83, %s84
      %p93 = scmp.eq.s32.totalorder %s26, 0
      %p94 = por %p92, %p93
      %p95 = scmp.ne.s32.totalorder %s83, %s84
      %p96 = scmp.eq.s32.totalorder %s27, 5
      %p97 = por %p95, %p96
      %p99 = scmp.ne.s32.totalorder %s84, %s98
      %p100 = scmp.eq.s32.totalorder %s27, 0
      %p101 = por %p99, %p100
      %s103 = sadd.s32 %s102, 1
      %p106 = scmp.eq.s32.totalorder %s21, 5
      %p107 = scmp.ne.s32.totalorder %s102, %s104
      %p108 = scmp.eq.s32.totalorder %s21, 0
      %p109 = por %p107, %p108
      %p110 = scmp.ne.s32.totalorder %s102, %s104
      %p111 = scmp.eq.s32.totalorder %s26, 5
      %p112 = por %p110, %p111
      %p113 = scmp.ne.s32.totalorder %s104, %s105
      %p114 = scmp.eq.s32.totalorder %s26, 0
      %p115 = por %p113, %p114
      %p116 = scmp.ne.s32.totalorder %s104, %s105
      %p117 = scmp.eq.s32.totalorder %s27, 5
      %p118 = por %p116, %p117
      %p120 = scmp.ne.s32.totalorder %s105, %s119
      %p121 = scmp.eq.s32.totalorder %s27, 0
      %p122 = por %p120, %p121
      %s124 = sadd.s32 %s123, 1
      %p127 = scmp.eq.s32.totalorder %s21, 5
      %p128 = scmp.ne.s32.totalorder %s123, %s125
      %p129 = scmp.eq.s32.totalorder %s21, 0
      %p130 = por %p128, %p129
      %p131 = scmp.ne.s32.totalorder %s123, %s125
      %p132 = scmp.eq.s32.totalorder %s26, 5
      %p133 = por %p131, %p132
      %p134 = scmp.ne.s32.totalorder %s125, %s126
      %p135 = scmp.eq.s32.totalorder %s26, 0
      %p136 = por %p134, %p135
      %p137 = scmp.ne.s32.totalorder %s125, %s126
      %p138 = scmp.eq.s32.totalorder %s27, 5
      %p139 = por %p137, %p138
      %p141 = scmp.ne.s32.totalorder %s126, %s140
      %p142 = scmp.eq.s32.totalorder %s27, 0
      %p143 = por %p141, %p142
      %s145 = sadd.s32 %s144, 1
      %p148 = scmp.eq.s32.totalorder %s21, 5
      %p149 = scmp.ne.s32.totalorder %s144, %s146
      %p150 = scmp.eq.s32.totalorder %s21, 0
      %p151 = por %p149, %p150
      %p152 = scmp.ne.s32.totalorder %s144, %s146
      %p153 = scmp.eq.s32.totalorder %s26, 5
      %p154 = por %p152, %p153
      %p155 = scmp.ne.s32.totalorder %s146, %s147
      %p156 = scmp.eq.s32.totalorder %s26, 0
      %p157 = por %p155, %p156
      %p158 = scmp.ne.s32.totalorder %s146, %s147
      %p159 = scmp.eq.s32.totalorder %s27, 5
      %p160 = por %p158, %p159
      %p162 = scmp.ne.s32.totalorder %s147, %s161
      %p163 = scmp.eq.s32.totalorder %s27, 0
      %p164 = por %p162, %p163
      %s166 = sadd.s32 %s165, 1
      %p169 = scmp.eq.s32.totalorder %s21, 5
      %p170 = scmp.ne.s32.totalorder %s165, %s167
      %p171 = scmp.eq.s32.totalorder %s21, 0
      %p172 = por %p170, %p171
      %p173 = scmp.ne.s32.totalorder %s165, %s167
      %p174 = scmp.eq.s32.totalorder %s26, 5
      %p175 = por %p173, %p174
      %p176 = scmp.ne.s32.totalorder %s167, %s168
      %p177 = scmp.eq.s32.totalorder %s26, 0
      %p178 = por %p176, %p177
      %p179 = scmp.ne.s32.totalorder %s167, %s168
      %p180 = scmp.eq.s32.totalorder %s27, 5
      %p181 = por %p179, %p180
      %p183 = scmp.ne.s32.totalorder %s168, %s182
      %p184 = scmp.eq.s32.totalorder %s27, 0
      %p185 = por %p183, %p184
      %s187 = sadd.s32 %s186, 1
      %p190 = scmp.eq.s32.totalorder %s21, 5
      %p191 = scmp.ne.s32.totalorder %s186, %s188
      %p192 = scmp.eq.s32.totalorder %s21, 0
      %p193 = por %p191, %p192
      %p194 = scmp.ne.s32.totalorder %s186, %s188
      %p195 = scmp.eq.s32.totalorder %s26, 5
      %p196 = por %p194, %p195
      %p197 = scmp.ne.s32.totalorder %s188, %s189
      %p198 = scmp.eq.s32.totalorder %s26, 0
      %p199 = por %p197, %p198
      %p200 = scmp.ne.s32.totalorder %s188, %s189
      %p201 = scmp.eq.s32.totalorder %s27, 5
      %p202 = por %p200, %p201
      %p204 = scmp.ne.s32.totalorder %s189, %s203
      %p205 = scmp.eq.s32.totalorder %s27, 0
      %p206 = por %p204, %p205
      %s207 = ssub.s32 %s21, %s28
      %p208 = scmp.eq.s32.totalorder %s207, 0
      %s210 = sadd.s32 %s209, 1
      %s211 = scalar_select %p208, %s209, %s210
      %p214 = pneg %p208
      %p215 = scmp.eq.s32.totalorder %s21, 5
      %p216 = por %p214, %p215
      %p217 = scmp.ne.s32.totalorder %s209, %s212
      %p218 = scmp.eq.s32.totalorder %s21, 0
      %p219 = por %p217, %p218
      %p220 = scmp.ne.s32.totalorder %s209, %s212
      %p221 = scmp.eq.s32.totalorder %s26, 5
      %p222 = por %p220, %p221
      %p223 = scmp.ne.s32.totalorder %s212, %s213
      %p224 = scmp.eq.s32.totalorder %s26, 0
      %p225 = por %p223, %p224
      %p226 = scmp.ne.s32.totalorder %s212, %s213
      %p227 = scmp.eq.s32.totalorder %s27, 5
      %p228 = por %p226, %p227
      %p230 = scmp.ne.s32.totalorder %s213, %s229
      %p231 = scmp.eq.s32.totalorder %s27, 0
      %p232 = por %p230, %p231
      %s233 = ssub.s32 %s21, %s28
      %p234 = scmp.eq.s32.totalorder %s233, 0
      %s236 = sadd.s32 %s235, 1
      %s237 = scalar_select %p234, %s235, %s236
      %p240 = pneg %p234
      %p241 = scmp.eq.s32.totalorder %s21, 5
      %p242 = por %p240, %p241
      %p243 = scmp.ne.s32.totalorder %s235, %s238
      %p244 = scmp.eq.s32.totalorder %s21, 0
      %p245 = por %p243, %p244
      %p246 = scmp.ne.s32.totalorder %s235, %s238
      %p247 = scmp.eq.s32.totalorder %s26, 5
      %p248 = por %p246, %p247
      %p249 = scmp.ne.s32.totalorder %s238, %s239
      %p250 = scmp.eq.s32.totalorder %s26, 0
      %p251 = por %p249, %p250
      %p252 = scmp.ne.s32.totalorder %s238, %s239
      %p253 = scmp.eq.s32.totalorder %s27, 5
      %p254 = por %p252, %p253
      %p256 = scmp.ne.s32.totalorder %s239, %s255
      %p257 = scmp.eq.s32.totalorder %s27, 0
      %p258 = por %p256, %p257
      %s259 = ssub.s32 %s21, %s28
      %p260 = scmp.eq.s32.totalorder %s259, 0
      %s262 = sadd.s32 %s261, 1
      %s263 = scalar_select %p260, %s261, %s262
      %p266 = pneg %p260
      %p267 = scmp.eq.s32.totalorder %s21, 5
      %p268 = por %p266, %p267
      %p269 = scmp.ne.s32.totalorder %s261, %s264
      %p270 = scmp.eq.s32.totalorder %s21, 0
      %p271 = por %p269, %p270
      %p272 = scmp.ne.s32.totalorder %s261, %s264
      %p273 = scmp.eq.s32.totalorder %s26, 5
      %p274 = por %p272, %p273
      %p275 = scmp.ne.s32.totalorder %s264, %s265
      %p276 = scmp.eq.s32.totalorder %s26, 0
      %p277 = por %p275, %p276
      %p278 = scmp.ne.s32.totalorder %s264, %s265
      %p279 = scmp.eq.s32.totalorder %s27, 5
      %p280 = por %p278, %p279
      %p282 = scmp.ne.s32.totalorder %s265, %s281
      %p283 = scmp.eq.s32.totalorder %s27, 0
      %p284 = por %p282, %p283
      %s285 = ssub.s32 %s21, %s28
      %p286 = scmp.eq.s32.totalorder %s285, 0
      %s288 = sadd.s32 %s287, 1
      %s289 = scalar_select %p286, %s287, %s288
      %p292 = pneg %p286
      %p293 = scmp.eq.s32.totalorder %s21, 5
      %p294 = por %p292, %p293
      %p295 = scmp.ne.s32.totalorder %s287, %s290
      %p296 = scmp.eq.s32.totalorder %s21, 0
      %p297 = por %p295, %p296
      %p298 = scmp.ne.s32.totalorder %s287, %s290
      %p299 = scmp.eq.s32.totalorder %s26, 5
      %p300 = por %p298, %p299
      %p301 = scmp.ne.s32.totalorder %s290, %s291
      %p302 = scmp.eq.s32.totalorder %s26, 0
      %p303 = por %p301, %p302
      %p304 = scmp.ne.s32.totalorder %s290, %s291
      %p305 = scmp.eq.s32.totalorder %s27, 5
      %p306 = por %p304, %p305
      %p308 = scmp.ne.s32.totalorder %s291, %s307
      %p309 = scmp.eq.s32.totalorder %s27, 0
      %p310 = por %p308, %p309
      %p311 = scmp.le.s32.totalorder 1, %s21
      %p312 = scmp.lt.s32.totalorder %s21, 7
      %p313 = pnand %p311, %p312
      %p314 = pneg %p313
      // Predicated region
      $region9: #{yuv_ms_ssim_loss.6} parent=5 // pred_check
        _
      $region10: #{yuv_ms_ssim_loss.6} parent=5 // pred_check_branch
        %316 = sbr.rel (%p313) target = $region12
      $region11: #{yuv_ms_ssim_loss.6} parent=5 // pred_region
        %s317 = ssub.s32 %s21, 1
        // Predicated region
        $region13: #{yuv_ms_ssim_loss.6} parent=11 // pred_check
          %p318 = pneg %p94
        $region14: #{yuv_ms_ssim_loss.6} parent=11 // pred_check_branch
          %320 = sbr.rel (%p318) target = $region16
        $region15: #{yuv_ms_ssim_loss.6} parent=11 // pred_region
          _
        $region16: #{yuv_ms_ssim_loss.6} parent=11 // pred_fallthru
          _
        // Predicated region
        $region17: #{yuv_ms_ssim_loss.6} parent=11 // pred_check
          %p321 = pneg %p115
        $region18: #{yuv_ms_ssim_loss.6} parent=11 // pred_check_branch
          %323 = sbr.rel (%p321) target = $region20
        $region19: #{yuv_ms_ssim_loss.6} parent=11 // pred_region
          _
        $region20: #{yuv_ms_ssim_loss.6} parent=11 // pred_fallthru
          _
        // Predicated region
        $region21: #{yuv_ms_ssim_loss.6} parent=11 // pred_check
          %p324 = pneg %p136
        $region22: #{yuv_ms_ssim_loss.6} parent=11 // pred_check_branch
          %326 = sbr.rel (%p324) target = $region24
        $region23: #{yuv_ms_ssim_loss.6} parent=11 // pred_region
          _
        $region24: #{yuv_ms_ssim_loss.6} parent=11 // pred_fallthru
          _
        // Predicated region
        $region25: #{yuv_ms_ssim_loss.6} parent=11 // pred_check
          %p327 = pneg %p157
        $region26: #{yuv_ms_ssim_loss.6} parent=11 // pred_check_branch
          %329 = sbr.rel (%p327) target = $region28
        $region27: #{yuv_ms_ssim_loss.6} parent=11 // pred_region
          _
        $region28: #{yuv_ms_ssim_loss.6} parent=11 // pred_fallthru
          _
        // Predicated region
        $region29: #{yuv_ms_ssim_loss.6} parent=11 // pred_check
          %p330 = pneg %p178
        $region30: #{yuv_ms_ssim_loss.6} parent=11 // pred_check_branch
          %332 = sbr.rel (%p330) target = $region32
        $region31: #{yuv_ms_ssim_loss.6} parent=11 // pred_region
          _
        $region32: #{yuv_ms_ssim_loss.6} parent=11 // pred_fallthru
          _
        // Predicated region
        $region33: #{yuv_ms_ssim_loss.6} parent=11 // pred_check
          %p333 = pneg %p199
        $region34: #{yuv_ms_ssim_loss.6} parent=11 // pred_check_branch
          %335 = sbr.rel (%p333) target = $region36
        $region35: #{yuv_ms_ssim_loss.6} parent=11 // pred_region
          _
        $region36: #{yuv_ms_ssim_loss.6} parent=11 // pred_fallthru
          _
      $region12: #{yuv_ms_ssim_loss.6} parent=5 // pred_fallthru
        _
      %p336 = scmp.lt.s32.totalorder %s21, 6
      // Predicated region
      $region37: #{yuv_ms_ssim_loss.6} parent=5 // pred_check
        %p337 = pneg %p336
      $region38: #{yuv_ms_ssim_loss.6} parent=5 // pred_check_branch
        %339 = sbr.rel (%p337) target = $region40
      $region39: #{yuv_ms_ssim_loss.6} parent=5 // pred_region
        // Predicated region
        $region41: #{yuv_ms_ssim_loss.6} parent=39 // pred_check
          %p340 = pneg %p41
        $region42: #{yuv_ms_ssim_loss.6} parent=39 // pred_check_branch
          %342 = sbr.rel (%p340) target = $region44
        $region43: #{yuv_ms_ssim_loss.6} parent=39 // pred_region
          %p343 = scmp.lt.s32.totalorder %s21, 5
          %s344 = scalar_select %p343, %s21, 5
          %s345 = smul.addr %s344, 2
          %s346 = smul.addr %s345, 8
          %s347 = scalar_lea.vmem %s0, %s346
        $region44: #{yuv_ms_ssim_loss.6} parent=39 // pred_fallthru
          _
        // Predicated region
        $region45: #{yuv_ms_ssim_loss.6} parent=39 // pred_check
          %p348 = pneg %p67
        $region46: #{yuv_ms_ssim_loss.6} parent=39 // pred_check_branch
          %350 = sbr.rel (%p348) target = $region48
        $region47: #{yuv_ms_ssim_loss.6} parent=39 // pred_region
          %p351 = scmp.lt.s32.totalorder %s21, 5
          %s352 = scalar_select %p351, %s21, 5
          %s353 = smul.addr %s352, 2
          %s354 = smul.addr %s353, 8
          %s355 = scalar_lea.vmem %s1, %s354
        $region48: #{yuv_ms_ssim_loss.6} parent=39 // pred_fallthru
          _
      $region40: #{yuv_ms_ssim_loss.6} parent=5 // pred_fallthru
        _
      %p356 = scmp.le.s32.totalorder 1, %s21
      %p357 = scmp.lt.s32.totalorder %s21, 7
      %p358 = pnand %p356, %p357
      %p359 = pneg %p358
      // Predicated region
      $region49: #{yuv_ms_ssim_loss.6} parent=5 // pred_check
        _
      $region50: #{yuv_ms_ssim_loss.6} parent=5 // pred_check_branch
        %361 = sbr.rel (%p358) target = $region52
      $region51: #{yuv_ms_ssim_loss.6} parent=5 // pred_region
        %s362 = ssub.s32 %s21, 1
        %p363 = scmp.lt.s32.totalorder %s26, 5
        %s364 = scalar_select %p363, %s26, 5
        %s365 = smul.addr %s364, 2
        %s366 = smul.addr %s365, 8
        %s367 = scalar_lea.vmem %s0, %s366
        %p368 = pneg %p47
        %p369 = pneg %p44
        %p370 = scmp.lt.s32.totalorder %s26, 5
        %s371 = scalar_select %p370, %s26, 5
        %s372 = smul.addr %s371, 2
        %s373 = smul.addr %s372, 8
        %s374 = scalar_lea.vmem %s1, %s373
        %p375 = pneg %p73
        %p376 = pneg %p70
        %p377 = pneg %p94
        %p378 = pneg %p91
        %p379 = pneg %p115
        %p380 = pneg %p112
        %p381 = pneg %p136
        %p382 = pneg %p133
        %p383 = pneg %p157
        %p384 = pneg %p154
        %p385 = pneg %p178
        %p386 = pneg %p175
        %p387 = pneg %p199
        %p388 = pneg %p196
        %p389 = pneg %p225
        %p390 = pneg %p222
        %s391 = sand.u32 %s212, 1
        %s392 = scalar_lea.sflag [#allocation3], %s391
        %s393 = sand.u32 %s212, 1
        %s394 = scalar_lea.vmem [#allocation2], %s393
        %p395 = pneg %p251
        %p396 = pneg %p248
        %p397 = scmp.lt.s32.totalorder %s26, 5
        %s398 = scalar_select %p397, %s26, 5
        %s399 = scalar_lea.vmem %s9, %s398
        %p400 = pneg %p277
        %p401 = pneg %p274
        %p402 = scmp.lt.s32.totalorder %s26, 5
        %s403 = scalar_select %p402, %s26, 5
        %s404 = smul.addr %s403, 8
        %s405 = scalar_lea.vmem %s10, %s404
        %p406 = pneg %p303
        %p407 = pneg %p300
        %p408 = scmp.lt.s32.totalorder %s26, 5
        %s409 = scalar_select %p408, %s26, 5
        %s410 = smul.addr %s409, 8
        %s411 = scalar_lea.vmem %s11, %s410
        %p412 = scmp.lt.s32.totalorder %s26, 5
        %s413 = scalar_select %p412, %s26, 5
        %s414 = smul.addr %s413, 2
        %s415 = smul.addr %s414, 8
        %s416 = scalar_lea.vmem %s0, %s415
        %p417 = scmp.lt.s32.totalorder %s26, 5
        %s418 = scalar_select %p417, %s26, 5
        %s419 = smul.addr %s418, 2
        %s420 = smul.addr %s419, 8
        %s421 = scalar_lea.vmem %s1, %s420
        %p422 = scmp.lt.s32.totalorder %s26, 5
        %s423 = scalar_select %p422, %s26, 5
        %s424 = scalar_lea.vmem %s9, %s423
        %p425 = scmp.lt.s32.totalorder %s26, 5
        %s426 = scalar_select %p425, %s26, 5
        %s427 = smul.addr %s426, 8
        %s428 = scalar_lea.vmem %s10, %s427
        %p429 = scmp.lt.s32.totalorder %s26, 5
        %s430 = scalar_select %p429, %s26, 5
        %s431 = smul.addr %s430, 8
        %s432 = scalar_lea.vmem %s11, %s431
        %v433 = vld [vmem:[%s416] sm:$0xff]
        %v434 = vld [vmem:[%s416 + $0x8] sm:$0xff]
        %v435 = vld [vmem:[%s421] sm:$0xff]
        %v436 = vld [vmem:[%s421 + $0x8] sm:$0xff]
        %v437 = vld [vmem:[%s2] sm:$0xff]
        %v438 = vld [vmem:[%s2 + $0x8] sm:$0xff]
        %v439 = vld [vmem:[%s3] sm:$0xff]
        %v440 = vld [vmem:[%s3 + $0x8] sm:$0xff]
        %v441 = vld [vmem:[%s3 + $0x10] sm:$0xff]
        %v442 = vld [vmem:[%s3 + $0x18] sm:$0xff]
        %v443 = vld [vmem:[%s3 + $0x20] sm:$0xff]
        %v444 = vld [vmem:[%s3 + $0x28] sm:$0xff]
        %v445 = vld [vmem:[%s3 + $0x30] sm:$0xff]
        %v446 = vld [vmem:[%s3 + $0x38] sm:$0xff]
        %v447 = vld [vmem:[%s3 + $0x40] sm:$0xff]
        %v448 = vld [vmem:[%s3 + $0x48] sm:$0xff]
        %v449 = vld [vmem:[%s3 + $0x50] sm:$0xff]
        %v450 = vld [vmem:[%s3 + $0x58] sm:$0xff]
        %v451 = vld [vmem:[%s3 + $0x60] sm:$0xff]
        %v452 = vld [vmem:[%s3 + $0x68] sm:$0xff]
        %v453 = vld [vmem:[%s3 + $0x70] sm:$0xff]
        %v454 = vld [vmem:[%s3 + $0x78] sm:$0xff]
        %v455 = vld [vmem:[%s4] sm:$0xff]
        %v456 = vld [vmem:[%s4 + $0x8] sm:$0xff]
        %v457 = vld [vmem:[%s5] sm:$0xff]
        %v458 = vld [vmem:[%s5 + $0x8] sm:$0xff]
        %p459 = scmp.lt.s32.totalorder %s26, 0
        %s460 = ssub.s32 0, %s26
        %s461 = scalar_select %p459, %s460, %s26
        %s462 = sdiv.u32.pop %s461, 3
        %s463 = srem.u32.pop %s461, 3
        %s464 = ssub.s32 0, %s463
        %s465 = scalar_select %p459, %s464, %s463
        %p466 = scmp.ne.s32.totalorder %s465, 0
        %p467 = scmp.lt.s32.totalorder %s465, 0
        %p468 = pnand %p467, %p466
        %p469 = pneg %p468
        %s470 = sadd.s32 %s465, 3
        %s471 = scalar_select %p469, %s470, %s465
        %p472 = scmp.eq.s32.totalorder %s471, 0
        %s473 = scalar_select %p472, 0.0, 128.0
        %v474 = vmul.f32 %v433, %v433
        %v475 = vmul.f32 %v434, %v434
        %v476 = vmul.f32 %v435, %v435
        %v477 = vmul.f32 %v436, %v436
        %v478 = vmul.f32 %v433, %v435
        %v479 = vmul.f32 %v434, %v436
        %480 = vmatpush.msra.mxu0 %v454
        %481 = vmatpush.msra.mxu0 %v453
        %482 = vmatpush.msra.mxu0 %v452
        %483 = vmatpush.msra.mxu0 %v451
        %484 = vmatpush.msra.mxu0 %v450
        %485 = vmatpush.msra.mxu0 %v449
        %486 = vmatpush.msra.mxu0 %v448
        %487 = vmatpush.msra.mxu0 %v447
        %488 = vmatpush.msra.mxu0 %v446
        %489 = vmatpush.msra.mxu0 %v445
        %490 = vmatpush.msra.mxu0 %v444
        %491 = vmatpush.msra.mxu0 %v443
        %492 = vmatpush.msra.mxu0 %v442
        %493 = vmatpush.msra.mxu0 %v441
        %494 = vmatpush.msra.mxu0 %v440
        %495 = vmatpush.msra.mxu0 %v439
        %496 = vmatmul.f32.gmra.mxu0 %v433
        %v497 = vpop.f32.mrf.mxu0
        %v498 = vadd.f32 0.0, %v497
        %499 = vmatmul.f32.gmra.mxu0 %v434
        %v500 = vpop.f32.mrf.mxu0
        %v501 = vadd.f32 0.0, %v500
        %502 = vmatmul.f32.gmra.mxu0 %v435
        %v503 = vpop.f32.mrf.mxu0
        %v504 = vadd.f32 0.0, %v503
        %505 = vmatmul.f32.gmra.mxu0 %v436
        %v506 = vpop.f32.mrf.mxu0
        %v507 = vadd.f32 0.0, %v506
        %508 = vmatmul.f32.gmra.mxu0 %v474
        %v509 = vpop.f32.mrf.mxu0
        %v510 = vadd.f32 0.0, %v509
        %511 = vmatmul.f32.gmra.mxu0 %v475
        %v512 = vpop.f32.mrf.mxu0
        %v513 = vadd.f32 0.0, %v512
        %514 = vmatmul.f32.gmra.mxu0 %v476
        %v515 = vpop.f32.mrf.mxu0
        %v516 = vadd.f32 0.0, %v515
        %517 = vmatmul.f32.gmra.mxu0 %v477
        %v518 = vpop.f32.mrf.mxu0
        %v519 = vadd.f32 0.0, %v518
        %520 = vmatmul.f32.gmra.mxu0 %v478
        %v521 = vpop.f32.mrf.mxu0
        %v522 = vadd.f32 0.0, %v521
        %523 = vmatmul.f32.gmra.mxu0 %v479
        %v524 = vpop.f32.mrf.mxu0
        %v525 = vadd.f32 0.0, %v524
        %526 = vdwg.mxu0
        %vm527 = vcmask 130048
        %v529 = vsel %vm527, %v437, 0
        %v532 = vsel %vm527, %v438, 0
        %534 = vmatpush.msra.mxu0 0.0
        %535 = vmatpush.msra.mxu0 0.0
        %536 = vmatpush.msra.mxu0 0.0
        %537 = vmatpush.msra.mxu0 0.0
        %538 = vmatpush.msra.mxu0 0.0
        %539 = vmatpush.msra.mxu0 0.0
        %540 = vmatpush.msra.mxu0 0.0
        %541 = vmatpush.msra.mxu0 0.0
        %542 = vmatpush.msra.mxu0 0.0
        %543 = vmatpush.msra.mxu0 0.0
        %544 = vmatpush.msra.mxu0 0.0
        %545 = vmatpush.msra.mxu0 0.0
        %546 = vmatpush.msra.mxu0 0.0
        %547 = vmatpush.msra.mxu0 0.0
        %548 = vmatpush.msra.mxu0 %v501
        %549 = vmatpush.msra.mxu0 %v498
        %550 = vmatmul.f32.gmra.mxu0 %v529
        %v551 = vpop.f32.mrf.mxu0
        %v552 = vadd.f32 0.0, %v551
        %553 = vmatmul.f32.gmra.mxu0 %v532
        %v554 = vpop.f32.mrf.mxu0
        %v555 = vadd.f32 0.0, %v554
        %556 = vdwg.mxu0
        %557 = vmatpush.msra.mxu0 0.0
        %558 = vmatpush.msra.mxu0 0.0
        %559 = vmatpush.msra.mxu0 0.0
        %560 = vmatpush.msra.mxu0 0.0
        %561 = vmatpush.msra.mxu0 0.0
        %562 = vmatpush.msra.mxu0 0.0
        %563 = vmatpush.msra.mxu0 0.0
        %564 = vmatpush.msra.mxu0 0.0
        %565 = vmatpush.msra.mxu0 0.0
        %566 = vmatpush.msra.mxu0 0.0
        %567 = vmatpush.msra.mxu0 0.0
        %568 = vmatpush.msra.mxu0 0.0
        %569 = vmatpush.msra.mxu0 0.0
        %570 = vmatpush.msra.mxu0 0.0
        %571 = vmatpush.msra.mxu0 %v507
        %572 = vmatpush.msra.mxu0 %v504
        %573 = vmatmul.f32.gmra.mxu0 %v529
        %v574 = vpop.f32.mrf.mxu0
        %v575 = vadd.f32 0.0, %v574
        %576 = vmatmul.f32.gmra.mxu0 %v532
        %v577 = vpop.f32.mrf.mxu0
        %v578 = vadd.f32 0.0, %v577
        %579 = vdwg.mxu0
        %580 = vmatpush.msra.mxu0 0.0
        %581 = vmatpush.msra.mxu0 0.0
        %582 = vmatpush.msra.mxu0 0.0
        %583 = vmatpush.msra.mxu0 0.0
        %584 = vmatpush.msra.mxu0 0.0
        %585 = vmatpush.msra.mxu0 0.0
        %586 = vmatpush.msra.mxu0 0.0
        %587 = vmatpush.msra.mxu0 0.0
        %588 = vmatpush.msra.mxu0 0.0
        %589 = vmatpush.msra.mxu0 0.0
        %590 = vmatpush.msra.mxu0 0.0
        %591 = vmatpush.msra.mxu0 0.0
        %592 = vmatpush.msra.mxu0 0.0
        %593 = vmatpush.msra.mxu0 0.0
        %594 = vmatpush.msra.mxu0 %v513
        %595 = vmatpush.msra.mxu0 %v510
        %596 = vmatmul.f32.gmra.mxu0 %v529
        %v597 = vpop.f32.mrf.mxu0
        %v598 = vadd.f32 0.0, %v597
        %599 = vmatmul.f32.gmra.mxu0 %v532
        %v600 = vpop.f32.mrf.mxu0
        %v601 = vadd.f32 0.0, %v600
        %602 = vdwg.mxu0
        %603 = vmatpush.msra.mxu0 0.0
        %604 = vmatpush.msra.mxu0 0.0
        %605 = vmatpush.msra.mxu0 0.0
        %606 = vmatpush.msra.mxu0 0.0
        %607 = vmatpush.msra.mxu0 0.0
        %608 = vmatpush.msra.mxu0 0.0
        %609 = vmatpush.msra.mxu0 0.0
        %610 = vmatpush.msra.mxu0 0.0
        %611 = vmatpush.msra.mxu0 0.0
        %612 = vmatpush.msra.mxu0 0.0
        %613 = vmatpush.msra.mxu0 0.0
        %614 = vmatpush.msra.mxu0 0.0
        %615 = vmatpush.msra.mxu0 0.0
        %616 = vmatpush.msra.mxu0 0.0
        %617 = vmatpush.msra.mxu0 %v519
        %618 = vmatpush.msra.mxu0 %v516
        %619 = vmatmul.f32.gmra.mxu0 %v529
        %v620 = vpop.f32.mrf.mxu0
        %v621 = vadd.f32 0.0, %v620
        %622 = vmatmul.f32.gmra.mxu0 %v532
        %v623 = vpop.f32.mrf.mxu0
        %v624 = vadd.f32 0.0, %v623
        %625 = vdwg.mxu0
        %626 = vmatpush.msra.mxu0 0.0
        %627 = vmatpush.msra.mxu0 0.0
        %628 = vmatpush.msra.mxu0 0.0
        %629 = vmatpush.msra.mxu0 0.0
        %630 = vmatpush.msra.mxu0 0.0
        %631 = vmatpush.msra.mxu0 0.0
        %632 = vmatpush.msra.mxu0 0.0
        %633 = vmatpush.msra.mxu0 0.0
        %634 = vmatpush.msra.mxu0 0.0
        %635 = vmatpush.msra.mxu0 0.0
        %636 = vmatpush.msra.mxu0 0.0
        %637 = vmatpush.msra.mxu0 0.0
        %638 = vmatpush.msra.mxu0 0.0
        %639 = vmatpush.msra.mxu0 0.0
        %640 = vmatpush.msra.mxu0 %v525
        %641 = vmatpush.msra.mxu0 %v522
        %642 = vmatmul.f32.gmra.mxu0 %v529
        %v643 = vpop.f32.mrf.mxu0
        %v644 = vadd.f32 0.0, %v643
        %645 = vmatmul.f32.gmra.mxu0 %v532
        %v646 = vpop.f32.mrf.mxu0
        %v647 = vadd.f32 0.0, %v646
        %648 = vdwg.mxu0
        %v649 = vsub.f32 1.0, %v455
        %v650 = vsub.f32 1.0, %v456
        %s651 = smul.f32 %s473, %s473
        %v652 = vstv %s651
        %v653 = vmul.f32 %v652, %v455
        %v654 = vmul.f32 %v652, %v456
        %v655 = vmul.f32 %v653, %v649
        %v656 = vmul.f32 %v654, %v650
        %v657 = vstv %s473
        %v658 = vmul.f32 %v657, %v455
        %v659 = vmul.f32 %v657, %v456
        %v660 = vadd.f32 %v552, %v658
        %v661 = vadd.f32 %v555, %v659
        %v662 = vadd.f32 %v575, %v658
        %v663 = vadd.f32 %v578, %v659
        %v664 = vmul.f32 %v660, %v660
        %v665 = vmul.f32 %v661, %v661
        %v666 = vmul.f32 %v662, %v662
        %v667 = vmul.f32 %v663, %v663
        %v668 = vmul.f32 %v660, %v662
        %v669 = vmul.f32 %v661, %v663
        %v670 = vmul.f32 %v552, %v552
        %v671 = vmul.f32 %v555, %v555
        %v672 = vsub.f32 %v598, %v670
        %v673 = vsub.f32 %v601, %v671
        %s674 = smul.f32 %s473, 2.0
        %v675 = vstv %s674
        %v676 = vmul.f32 %v675, %v552
        %v677 = vmul.f32 %v675, %v555
        %v678 = vmul.f32 %v676, %v649
        %v679 = vmul.f32 %v677, %v650
        %v680 = vadd.f32 %v672, %v678
        %v681 = vadd.f32 %v673, %v679
        %v682 = vadd.f32 %v680, %v655
        %v683 = vadd.f32 %v681, %v656
        %v684 = vmul.f32 %v575, %v575
        %v685 = vmul.f32 %v578, %v578
        %v686 = vsub.f32 %v621, %v684
        %v687 = vsub.f32 %v624, %v685
        %v688 = vmul.f32 %v675, %v575
        %v689 = vmul.f32 %v675, %v578
        %v690 = vmul.f32 %v688, %v649
        %v691 = vmul.f32 %v689, %v650
        %v692 = vadd.f32 %v686, %v690
        %v693 = vadd.f32 %v687, %v691
        %v694 = vadd.f32 %v692, %v655
        %v695 = vadd.f32 %v693, %v656
        %v696 = vmul.f32 %v552, %v575
        %v697 = vmul.f32 %v555, %v578
        %v698 = vsub.f32 %v644, %v696
        %v699 = vsub.f32 %v647, %v697
        %v700 = vadd.f32 %v552, %v575
        %v701 = vadd.f32 %v555, %v578
        %v702 = vmul.f32 %v657, %v700
        %v703 = vmul.f32 %v657, %v701
        %v704 = vmul.f32 %v702, %v649
        %v705 = vmul.f32 %v703, %v650
        %v706 = vadd.f32 %v698, %v704
        %v707 = vadd.f32 %v699, %v705
        %v708 = vadd.f32 %v706, %v655
        %v709 = vadd.f32 %v707, %v656
        %v710 = vmul.f32 %v708, 2.0
        %v711 = vmul.f32 %v709, 2.0
        %v712 = vadd.f32 %v710, 0.0009
        %v713 = vadd.f32 %v711, 0.0009
        %v714 = vadd.f32 %v682, %v694
        %v715 = vadd.f32 %v683, %v695
        %v716 = vadd.f32 %v714, 0.0009
        %v717 = vadd.f32 %v715, 0.0009
        %v718 = vrcp.pop %v716
        %v719 = vrcp.pop %v717
        %v720 = vmul.f32 %v716, %v718
        %v721 = vmul.f32 %v717, %v719
        %v722 = vsub.f32 2.0, %v720
        %v723 = vsub.f32 2.0, %v721
        %v724 = vmul.f32 %v718, %v722
        %v725 = vmul.f32 %v719, %v723
        %v726 = vmul.f32 %v712, %v724
        %v727 = vmul.f32 %v713, %v725
        %v728 = vmul.f32 %v668, 2.0
        %v729 = vmul.f32 %v669, 2.0
        %v730 = vadd.f32 %v728, 0.0001
        %v731 = vadd.f32 %v729, 0.0001
        %v732 = vadd.f32 %v664, %v666
        %v733 = vadd.f32 %v665, %v667
        %v734 = vadd.f32 %v732, 0.0001
        %v735 = vadd.f32 %v733, 0.0001
        %v736 = vrcp.pop %v734
        %v737 = vrcp.pop %v735
        %v738 = vmul.f32 %v734, %v736
        %v739 = vmul.f32 %v735, %v737
        %v740 = vsub.f32 2.0, %v738
        %v741 = vsub.f32 2.0, %v739
        %v742 = vmul.f32 %v736, %v740
        %v743 = vmul.f32 %v737, %v741
        %v744 = vmul.f32 %v730, %v742
        %v745 = vmul.f32 %v731, %v743
        %v746 = vmul.f32 %v744, %v726
        %v747 = vmul.f32 %v745, %v727
        %v748 = vmul.f32 %v746, %v457
        %v749 = vmul.f32 %v747, %v458
        %v750 = vadd.f32 %v748, %v749
        %751 = vadd.xlane.f32.xlu0 %v750
        %v752 = vpop.xlane.xlu0 %751
        %v753 = vrot.slane %v752, 4
        %v754 = vadd.f32 %v752, %v753
        %v755 = vrot.slane %v754, 2
        %v756 = vadd.f32 %v754, %v755
        %v757 = vrot.slane %v756, 1
        %v758 = vadd.f32 %v756, %v757
        %s759 = vtos %v758
        %v760 = vstv %s759
        %vm761 = vcmask 0
        %762 = vst.msk [vmem:[%s394] sm:$0x1] %vm761, %v760
        %v763 = vmul.f32 %v726, %v457
        %v764 = vmul.f32 %v727, %v458
        %v765 = vadd.f32 %v763, %v764
        %766 = vadd.xlane.f32.xlu0 %v765
        %v767 = vpop.xlane.xlu0 %766
        %v768 = vrot.slane %v767, 4
        %v769 = vadd.f32 %v767, %v768
        %v770 = vrot.slane %v769, 2
        %v771 = vadd.f32 %v769, %v770
        %v772 = vrot.slane %v771, 1
        %v773 = vadd.f32 %v771, %v772
        %s774 = vtos %v773
        %v775 = vstv %s774
        %776 = vst.msk [vmem:[%s424] sm:$0x1] %vm761, %v775
        %v777 = vld [vmem:[%s6] sm:$0xff]
        %v778 = vld [vmem:[%s7] sm:$0xff]
        %v779 = vld [vmem:[%s7 + $0x8] sm:$0xff]
        %v780 = vld [vmem:[%s7 + $0x10] sm:$0xff]
        %v781 = vld [vmem:[%s7 + $0x18] sm:$0xff]
        %v782 = vld [vmem:[%s7 + $0x20] sm:$0xff]
        %v783 = vld [vmem:[%s7 + $0x28] sm:$0xff]
        %v784 = vld [vmem:[%s7 + $0x30] sm:$0xff]
        %v785 = vld [vmem:[%s7 + $0x38] sm:$0xff]
        %v786 = vld [vmem:[%s7 + $0x40] sm:$0xff]
        %v787 = vld [vmem:[%s7 + $0x48] sm:$0xff]
        %v788 = vld [vmem:[%s7 + $0x50] sm:$0xff]
        %v789 = vld [vmem:[%s7 + $0x58] sm:$0xff]
        %v790 = vld [vmem:[%s7 + $0x60] sm:$0xff]
        %v791 = vld [vmem:[%s7 + $0x68] sm:$0xff]
        %v792 = vld [vmem:[%s7 + $0x70] sm:$0xff]
        %v793 = vld [vmem:[%s7 + $0x78] sm:$0xff]
        %794 = vmatpush.msra.mxu0 %v793
        %795 = vmatpush.msra.mxu0 %v792
        %796 = vmatpush.msra.mxu0 %v791
        %797 = vmatpush.msra.mxu0 %v790
        %798 = vmatpush.msra.mxu0 %v789
        %799 = vmatpush.msra.mxu0 %v788
        %800 = vmatpush.msra.mxu0 %v787
        %801 = vmatpush.msra.mxu0 %v786
        %802 = vmatpush.msra.mxu0 %v785
        %803 = vmatpush.msra.mxu0 %v784
        %804 = vmatpush.msra.mxu0 %v783
        %805 = vmatpush.msra.mxu0 %v782
        %806 = vmatpush.msra.mxu0 %v781
        %807 = vmatpush.msra.mxu0 %v780
        %808 = vmatpush.msra.mxu0 %v779
        %809 = vmatpush.msra.mxu0 %v778
        %810 = vmatmul.f32.gmra.mxu0 %v433
        %v811 = vpop.f32.mrf.mxu0
        %v812 = vadd.f32 0.0, %v811
        %813 = vmatmul.f32.gmra.mxu0 %v434
        %v814 = vpop.f32.mrf.mxu0
        %v815 = vadd.f32 0.0, %v814
        %816 = vmatmul.f32.gmra.mxu0 %v435
        %v817 = vpop.f32.mrf.mxu0
        %v818 = vadd.f32 0.0, %v817
        %819 = vmatmul.f32.gmra.mxu0 %v436
        %v820 = vpop.f32.mrf.mxu0
        %v821 = vadd.f32 0.0, %v820
        %822 = vdwg.mxu0
        %v824 = vsel %vm527, %v777, 0
        %826 = vmatpush.msra.mxu0 0.0
        %827 = vmatpush.msra.mxu0 0.0
        %828 = vmatpush.msra.mxu0 0.0
        %829 = vmatpush.msra.mxu0 0.0
        %830 = vmatpush.msra.mxu0 0.0
        %831 = vmatpush.msra.mxu0 0.0
        %832 = vmatpush.msra.mxu0 0.0
        %833 = vmatpush.msra.mxu0 0.0
        %834 = vmatpush.msra.mxu0 0.0
        %835 = vmatpush.msra.mxu0 0.0
        %836 = vmatpush.msra.mxu0 0.0
        %837 = vmatpush.msra.mxu0 0.0
        %838 = vmatpush.msra.mxu0 0.0
        %839 = vmatpush.msra.mxu0 0.0
        %840 = vmatpush.msra.mxu0 %v815
        %841 = vmatpush.msra.mxu0 %v812
        %842 = vmatmul.f32.gmra.mxu0 %v824
        %v843 = vpop.f32.mrf.mxu0
        %v844 = vadd.f32 0.0, %v843
        %845 = vdwg.mxu0
        %846 = vst [vmem:[%s428] sm:$0xff] %v844
        %847 = vmatpush.msra.mxu0 0.0
        %848 = vmatpush.msra.mxu0 0.0
        %849 = vmatpush.msra.mxu0 0.0
        %850 = vmatpush.msra.mxu0 0.0
        %851 = vmatpush.msra.mxu0 0.0
        %852 = vmatpush.msra.mxu0 0.0
        %853 = vmatpush.msra.mxu0 0.0
        %854 = vmatpush.msra.mxu0 0.0
        %855 = vmatpush.msra.mxu0 0.0
        %856 = vmatpush.msra.mxu0 0.0
        %857 = vmatpush.msra.mxu0 0.0
        %858 = vmatpush.msra.mxu0 0.0
        %859 = vmatpush.msra.mxu0 0.0
        %860 = vmatpush.msra.mxu0 0.0
        %861 = vmatpush.msra.mxu0 %v821
        %862 = vmatpush.msra.mxu0 %v818
        %863 = vmatmul.f32.gmra.mxu0 %v824
        %v864 = vpop.f32.mrf.mxu0
        %v865 = vadd.f32 0.0, %v864
        %866 = vdwg.mxu0
        %867 = vst [vmem:[%s432] sm:$0xff] %v865
        %s868 = sand.u32 %s212, 1
        %s869 = scalar_lea.sflag [#allocation3], %s868
        %s870 = sand.u32 %s212, 1
        %s871 = scalar_lea.vmem [#allocation2], %s870
        %p872 = scmp.lt.s32.totalorder %s26, 5
        %s873 = scalar_select %p872, %s26, 5
        %s874 = scalar_lea.vmem %s9, %s873
        %p875 = scmp.lt.s32.totalorder %s26, 5
        %s876 = scalar_select %p875, %s26, 5
        %s877 = smul.addr %s876, 8
        %s878 = scalar_lea.vmem %s10, %s877
        %p879 = scmp.lt.s32.totalorder %s26, 5
        %s880 = scalar_select %p879, %s26, 5
        %s881 = smul.addr %s880, 8
        %s882 = scalar_lea.vmem %s11, %s881
        // Predicated region
        $region53: #{yuv_ms_ssim_loss.6} parent=51 // pred_check
          %p883 = pneg %p222
        $region54: #{yuv_ms_ssim_loss.6} parent=51 // pred_check_branch
          %885 = sbr.rel (%p883) target = $region56
        $region55: #{yuv_ms_ssim_loss.6} parent=51 // pred_region
          %887 = vsyncadd %s869, 0
          %s888 = scalar_lea.hbm %s8, %s26
          %s890 = sshll.u32 %s871, 4
          %s891 = int_to_ptr.vmem [resolvable:$true] %s890
          %s892 = sshll.u32 %s888, 4
          %s893 = int_to_ptr.hbm [resolvable:$true] %s892
          %895 = dma.vmem_to_hbm [thread:$0]  %s891, 16, %s893, %s869
        $region56: #{yuv_ms_ssim_loss.6} parent=51 // pred_fallthru
          _
        // Predicated region
        $region57: #{yuv_ms_ssim_loss.6} parent=51 // pred_check
          %p896 = pneg %p248
        $region58: #{yuv_ms_ssim_loss.6} parent=51 // pred_check_branch
          %898 = sbr.rel (%p896) target = $region60
        $region59: #{yuv_ms_ssim_loss.6} parent=51 // pred_region
          _
        $region60: #{yuv_ms_ssim_loss.6} parent=51 // pred_fallthru
          _
        // Predicated region
        $region61: #{yuv_ms_ssim_loss.6} parent=51 // pred_check
          %p899 = pneg %p274
        $region62: #{yuv_ms_ssim_loss.6} parent=51 // pred_check_branch
          %901 = sbr.rel (%p899) target = $region64
        $region63: #{yuv_ms_ssim_loss.6} parent=51 // pred_region
          _
        $region64: #{yuv_ms_ssim_loss.6} parent=51 // pred_fallthru
          _
        // Predicated region
        $region65: #{yuv_ms_ssim_loss.6} parent=51 // pred_check
          %p902 = pneg %p300
        $region66: #{yuv_ms_ssim_loss.6} parent=51 // pred_check_branch
          %904 = sbr.rel (%p902) target = $region68
        $region67: #{yuv_ms_ssim_loss.6} parent=51 // pred_region
          _
        $region68: #{yuv_ms_ssim_loss.6} parent=51 // pred_fallthru
          _
      $region52: #{yuv_ms_ssim_loss.6} parent=5 // pred_fallthru
        _
      %p905 = scmp.le.s32.totalorder 2, %s21
      // Predicated region
      $region69: #{yuv_ms_ssim_loss.6} parent=5 // pred_check
        %p906 = pneg %p905
      $region70: #{yuv_ms_ssim_loss.6} parent=5 // pred_check_branch
        %908 = sbr.rel (%p906) target = $region72
      $region71: #{yuv_ms_ssim_loss.6} parent=5 // pred_region
        %s909 = ssub.s32 %s21, 2
        // Predicated region
        $region73: #{yuv_ms_ssim_loss.6} parent=71 // pred_check
          %p910 = pneg %p228
        $region74: #{yuv_ms_ssim_loss.6} parent=71 // pred_check_branch
          %912 = sbr.rel (%p910) target = $region76
        $region75: #{yuv_ms_ssim_loss.6} parent=71 // pred_region
          %s913 = sand.u32 %s213, 1
          %s914 = scalar_lea.sflag [#allocation3], %s913
          %s915 = sand.u32 %s213, 1
          %s916 = scalar_lea.vmem [#allocation2], %s915
          %918 = dma.done %s914, 16
        $region76: #{yuv_ms_ssim_loss.6} parent=71 // pred_fallthru
          _
        // Predicated region
        $region77: #{yuv_ms_ssim_loss.6} parent=71 // pred_check
          %p919 = pneg %p254
        $region78: #{yuv_ms_ssim_loss.6} parent=71 // pred_check_branch
          %921 = sbr.rel (%p919) target = $region80
        $region79: #{yuv_ms_ssim_loss.6} parent=71 // pred_region
          %p922 = scmp.lt.s32.totalorder %s27, 5
          %s923 = scalar_select %p922, %s27, 5
          %s924 = scalar_lea.vmem %s9, %s923
        $region80: #{yuv_ms_ssim_loss.6} parent=71 // pred_fallthru
          _
        // Predicated region
        $region81: #{yuv_ms_ssim_loss.6} parent=71 // pred_check
          %p925 = pneg %p280
        $region82: #{yuv_ms_ssim_loss.6} parent=71 // pred_check_branch
          %927 = sbr.rel (%p925) target = $region84
        $region83: #{yuv_ms_ssim_loss.6} parent=71 // pred_region
          %p928 = scmp.lt.s32.totalorder %s27, 5
          %s929 = scalar_select %p928, %s27, 5
          %s930 = smul.addr %s929, 8
          %s931 = scalar_lea.vmem %s10, %s930
        $region84: #{yuv_ms_ssim_loss.6} parent=71 // pred_fallthru
          _
        // Predicated region
        $region85: #{yuv_ms_ssim_loss.6} parent=71 // pred_check
          %p932 = pneg %p306
        $region86: #{yuv_ms_ssim_loss.6} parent=71 // pred_check_branch
          %934 = sbr.rel (%p932) target = $region88
        $region87: #{yuv_ms_ssim_loss.6} parent=71 // pred_region
          %p935 = scmp.lt.s32.totalorder %s27, 5
          %s936 = scalar_select %p935, %s27, 5
          %s937 = smul.addr %s936, 8
          %s938 = scalar_lea.vmem %s11, %s937
        $region88: #{yuv_ms_ssim_loss.6} parent=71 // pred_fallthru
          _
      $region72: #{yuv_ms_ssim_loss.6} parent=5 // pred_fallthru
        _
    $region6: #{yuv_ms_ssim_loss.6} parent=1 // loop_footer
      %s25 = sadd.s32 1, %s21
    $region7: #{yuv_ms_ssim_loss.6} parent=1 // loop_footer_branch
      %20 = sbr.rel target = $region3
    $region8: #{yuv_ms_ssim_loss.6} parent=1 // loop_exit
      _
    %939 = vsyncpa [#allocation3], 1
    %s940 = scalar_lea.sflag [#allocation3], 1
    %941 = vsyncpa %s940, 1

// kernel: yuv_ms_ssim_loss.5
$region0: #{yuv_ms_ssim_loss.5}
  #allocation0 [shape = 'u32[]', space=smem, size = 0x4, offset = 0x4, fixed_abs, tag = 'smem constant byte address 0x4 - core index']
  #allocation1 [shape = 'u32[72,128]{1,0:T(1,128)}', space=vmem, size = 0x9000, scoped, tag = 'internal scratch']
  %s0 = inlined_call_operand.vmem [shape: f32[6,32,128], index: 0, kind: input, shape index: {}]
  %s1 = inlined_call_operand.vmem [shape: f32[6,32,128], index: 1, kind: input, shape index: {}]
  %s2 = inlined_call_operand.vmem [shape: f32[32,32], index: 2, kind: input, shape index: {}]
  %s3 = inlined_call_operand.vmem [shape: f32[128,128], index: 3, kind: input, shape index: {}]
  %s4 = inlined_call_operand.vmem [shape: f32[32,128], index: 4, kind: input, shape index: {}]
  %s5 = inlined_call_operand.vmem [shape: f32[32,128], index: 5, kind: input, shape index: {}]
  %s6 = inlined_call_operand.vmem [shape: f32[16,32], index: 6, kind: input, shape index: {}]
  %s7 = inlined_call_operand.vmem [shape: f32[128,128], index: 7, kind: input, shape index: {}]
  %s8 = inlined_call_operand.hbm [shape: f32[6,1,1], index: 8, kind: output, shape index: {0}]
  %s9 = inlined_call_operand.vmem [shape: f32[6,1,1], index: 9, kind: output, shape index: {1}]
  %s10 = inlined_call_operand.vmem [shape: f32[6,16,128], index: 10, kind: output, shape index: {2}]
  %s11 = inlined_call_operand.vmem [shape: f32[6,16,128], index: 11, kind: output, shape index: {3}]
  %12 = xla_tuple %s8, %s9, %s10, %s11
  %s13 = sld [smem:[#allocation0]]
  $region89: #{yuv_ms_ssim_loss.5} parent=0
    _
  %s15 = ssub.s32 1, %s13
  %s16 = scalar_select 0, %s15, %s13
  $region1: #{yuv_ms_ssim_loss.5} parent=0
    #allocation2 [shape = 'u8[1024]{0}', space=vmem, size = 0x400, scoped, tag = 'output window, operand 0']
    #allocation3 [shape = 's32[2]{0}', space=sflag, size = 0x8, scoped, tag = 'scoped memory for yuv_ms_ssim_loss.5']
    %17 = vsyncpa [#allocation3], 0
    %s18 = scalar_lea.sflag [#allocation3], 1
    %19 = vsyncpa %s18, 0
    loop: start=0, step=1, limit=8
    $region2: #{yuv_ms_ssim_loss.5} parent=1 // loop_pre_header
      _
    $region3: #{yuv_ms_ssim_loss.5} parent=1 // loop_header
      %s21 = sphi 0, %s25
      %p22 = scmp.ge.s32.totalorder %s21, 8
      %s31 = sphi 0, %s33
      %s34 = sphi 0, %s31
      %s35 = sphi 0, %s34
      %s51 = sphi 0, %s35
      %s57 = sphi 0, %s59
      %s60 = sphi 0, %s57
      %s61 = sphi 0, %s60
      %s77 = sphi 0, %s61
      %s81 = sphi 0, %s81
      %s83 = sphi 0, %s81
      %s84 = sphi 0, %s83
      %s98 = sphi 0, %s84
      %s102 = sphi 0, %s102
      %s104 = sphi 0, %s102
      %s105 = sphi 0, %s104
      %s119 = sphi 0, %s105
      %s123 = sphi 0, %s123
      %s125 = sphi 0, %s123
      %s126 = sphi 0, %s125
      %s140 = sphi 0, %s126
      %s144 = sphi 0, %s144
      %s146 = sphi 0, %s144
      %s147 = sphi 0, %s146
      %s161 = sphi 0, %s147
      %s165 = sphi 0, %s165
      %s167 = sphi 0, %s165
      %s168 = sphi 0, %s167
      %s182 = sphi 0, %s168
      %s186 = sphi 0, %s186
      %s188 = sphi 0, %s186
      %s189 = sphi 0, %s188
      %s203 = sphi 0, %s189
      %s209 = sphi 0, %s211
      %s212 = sphi 0, %s209
      %s213 = sphi 0, %s212
      %s229 = sphi 0, %s213
      %s235 = sphi 0, %s237
      %s238 = sphi 0, %s235
      %s239 = sphi 0, %s238
      %s255 = sphi 0, %s239
      %s261 = sphi 0, %s263
      %s264 = sphi 0, %s261
      %s265 = sphi 0, %s264
      %s281 = sphi 0, %s265
      %s287 = sphi 0, %s289
      %s290 = sphi 0, %s287
      %s291 = sphi 0, %s290
      %s307 = sphi 0, %s291
    $region4: #{yuv_ms_ssim_loss.5} parent=1 // loop_header_branch
      %24 = sbr.rel (%p22) target = $region8
    $region5: #{yuv_ms_ssim_loss.5} parent=1 // loop_body
      %s26 = ssub.s32 %s21, 1
      %s27 = ssub.s32 %s21, 2
      %s28 = sadd.s32 %s21, 1
      %s29 = ssub.s32 %s21, %s28
      %p30 = scmp.eq.s32.totalorder %s29, 0
      %s32 = sadd.s32 %s31, 1
      %s33 = scalar_select %p30, %s31, %s32
      %p36 = pneg %p30
      %p37 = scmp.eq.s32.totalorder %s21, 5
      %p38 = por %p36, %p37
      %p39 = scmp.ne.s32.totalorder %s31, %s34
      %p40 = scmp.eq.s32.totalorder %s21, 0
      %p41 = por %p39, %p40
      %p42 = scmp.ne.s32.totalorder %s31, %s34
      %p43 = scmp.eq.s32.totalorder %s26, 5
      %p44 = por %p42, %p43
      %p45 = scmp.ne.s32.totalorder %s34, %s35
      %p46 = scmp.eq.s32.totalorder %s26, 0
      %p47 = por %p45, %p46
      %p48 = scmp.ne.s32.totalorder %s34, %s35
      %p49 = scmp.eq.s32.totalorder %s27, 5
      %p50 = por %p48, %p49
      %p52 = scmp.ne.s32.totalorder %s35, %s51
      %p53 = scmp.eq.s32.totalorder %s27, 0
      %p54 = por %p52, %p53
      %s55 = ssub.s32 %s21, %s28
      %p56 = scmp.eq.s32.totalorder %s55, 0
      %s58 = sadd.s32 %s57, 1
      %s59 = scalar_select %p56, %s57, %s58
      %p62 = pneg %p56
      %p63 = scmp.eq.s32.totalorder %s21, 5
      %p64 = por %p62, %p63
      %p65 = scmp.ne.s32.totalorder %s57, %s60
      %p66 = scmp.eq.s32.totalorder %s21, 0
      %p67 = por %p65, %p66
      %p68 = scmp.ne.s32.totalorder %s57, %s60
      %p69 = scmp.eq.s32.totalorder %s26, 5
      %p70 = por %p68, %p69
      %p71 = scmp.ne.s32.totalorder %s60, %s61
      %p72 = scmp.eq.s32.totalorder %s26, 0
      %p73 = por %p71, %p72
      %p74 = scmp.ne.s32.totalorder %s60, %s61
      %p75 = scmp.eq.s32.totalorder %s27, 5
      %p76 = por %p74, %p75
      %p78 = scmp.ne.s32.totalorder %s61, %s77
      %p79 = scmp.eq.s32.totalorder %s27, 0
      %p80 = por %p78, %p79
      %s82 = sadd.s32 %s81, 1
      %p85 = scmp.eq.s32.totalorder %s21, 5
      %p86 = scmp.ne.s32.totalorder %s81, %s83
      %p87 = scmp.eq.s32.totalorder %s21, 0
      %p88 = por %p86, %p87
      %p89 = scmp.ne.s32.totalorder %s81, %s83
      %p90 = scmp.eq.s32.totalorder %s26, 5
      %p91 = por %p89, %p90
      %p92 = scmp.ne.s32.totalorder %s83, %s84
      %p93 = scmp.eq.s32.totalorder %s26, 0
      %p94 = por %p92, %p93
      %p95 = scmp.ne.s32.totalorder %s83, %s84
      %p96 = scmp.eq.s32.totalorder %s27, 5
      %p97 = por %p95, %p96
      %p99 = scmp.ne.s32.totalorder %s84, %s98
      %p100 = scmp.eq.s32.totalorder %s27, 0
      %p101 = por %p99, %p100
      %s103 = sadd.s32 %s102, 1
      %p106 = scmp.eq.s32.totalorder %s21, 5
      %p107 = scmp.ne.s32.totalorder %s102, %s104
      %p108 = scmp.eq.s32.totalorder %s21, 0
      %p109 = por %p107, %p108
      %p110 = scmp.ne.s32.totalorder %s102, %s104
      %p111 = scmp.eq.s32.totalorder %s26, 5
      %p112 = por %p110, %p111
      %p113 = scmp.ne.s32.totalorder %s104, %s105
      %p114 = scmp.eq.s32.totalorder %s26, 0
      %p115 = por %p113, %p114
      %p116 = scmp.ne.s32.totalorder %s104, %s105
      %p117 = scmp.eq.s32.totalorder %s27, 5
      %p118 = por %p116, %p117
      %p120 = scmp.ne.s32.totalorder %s105, %s119
      %p121 = scmp.eq.s32.totalorder %s27, 0
      %p122 = por %p120, %p121
      %s124 = sadd.s32 %s123, 1
      %p127 = scmp.eq.s32.totalorder %s21, 5
      %p128 = scmp.ne.s32.totalorder %s123, %s125
      %p129 = scmp.eq.s32.totalorder %s21, 0
      %p130 = por %p128, %p129
      %p131 = scmp.ne.s32.totalorder %s123, %s125
      %p132 = scmp.eq.s32.totalorder %s26, 5
      %p133 = por %p131, %p132
      %p134 = scmp.ne.s32.totalorder %s125, %s126
      %p135 = scmp.eq.s32.totalorder %s26, 0
      %p136 = por %p134, %p135
      %p137 = scmp.ne.s32.totalorder %s125, %s126
      %p138 = scmp.eq.s32.totalorder %s27, 5
      %p139 = por %p137, %p138
      %p141 = scmp.ne.s32.totalorder %s126, %s140
      %p142 = scmp.eq.s32.totalorder %s27, 0
      %p143 = por %p141, %p142
      %s145 = sadd.s32 %s144, 1
      %p148 = scmp.eq.s32.totalorder %s21, 5
      %p149 = scmp.ne.s32.totalorder %s144, %s146
      %p150 = scmp.eq.s32.totalorder %s21, 0
      %p151 = por %p149, %p150
      %p152 = scmp.ne.s32.totalorder %s144, %s146
      %p153 = scmp.eq.s32.totalorder %s26, 5
      %p154 = por %p152, %p153
      %p155 = scmp.ne.s32.totalorder %s146, %s147
      %p156 = scmp.eq.s32.totalorder %s26, 0
      %p157 = por %p155, %p156
      %p158 = scmp.ne.s32.totalorder %s146, %s147
      %p159 = scmp.eq.s32.totalorder %s27, 5
      %p160 = por %p158, %p159
      %p162 = scmp.ne.s32.totalorder %s147, %s161
      %p163 = scmp.eq.s32.totalorder %s27, 0
      %p164 = por %p162, %p163
      %s166 = sadd.s32 %s165, 1
      %p169 = scmp.eq.s32.totalorder %s21, 5
      %p170 = scmp.ne.s32.totalorder %s165, %s167
      %p171 = scmp.eq.s32.totalorder %s21, 0
      %p172 = por %p170, %p171
      %p173 = scmp.ne.s32.totalorder %s165, %s167
      %p174 = scmp.eq.s32.totalorder %s26, 5
      %p175 = por %p173, %p174
      %p176 = scmp.ne.s32.totalorder %s167, %s168
      %p177 = scmp.eq.s32.totalorder %s26, 0
      %p178 = por %p176, %p177
      %p179 = scmp.ne.s32.totalorder %s167, %s168
      %p180 = scmp.eq.s32.totalorder %s27, 5
      %p181 = por %p179, %p180
      %p183 = scmp.ne.s32.totalorder %s168, %s182
      %p184 = scmp.eq.s32.totalorder %s27, 0
      %p185 = por %p183, %p184
      %s187 = sadd.s32 %s186, 1
      %p190 = scmp.eq.s32.totalorder %s21, 5
      %p191 = scmp.ne.s32.totalorder %s186, %s188
      %p192 = scmp.eq.s32.totalorder %s21, 0
      %p193 = por %p191, %p192
      %p194 = scmp.ne.s32.totalorder %s186, %s188
      %p195 = scmp.eq.s32.totalorder %s26, 5
      %p196 = por %p194, %p195
      %p197 = scmp.ne.s32.totalorder %s188, %s189
      %p198 = scmp.eq.s32.totalorder %s26, 0
      %p199 = por %p197, %p198
      %p200 = scmp.ne.s32.totalorder %s188, %s189
      %p201 = scmp.eq.s32.totalorder %s27, 5
      %p202 = por %p200, %p201
      %p204 = scmp.ne.s32.totalorder %s189, %s203
      %p205 = scmp.eq.s32.totalorder %s27, 0
      %p206 = por %p204, %p205
      %s207 = ssub.s32 %s21, %s28
      %p208 = scmp.eq.s32.totalorder %s207, 0
      %s210 = sadd.s32 %s209, 1
      %s211 = scalar_select %p208, %s209, %s210
      %p214 = pneg %p208
      %p215 = scmp.eq.s32.totalorder %s21, 5
      %p216 = por %p214, %p215
      %p217 = scmp.ne.s32.totalorder %s209, %s212
      %p218 = scmp.eq.s32.totalorder %s21, 0
      %p219 = por %p217, %p218
      %p220 = scmp.ne.s32.totalorder %s209, %s212
      %p221 = scmp.eq.s32.totalorder %s26, 5
      %p222 = por %p220, %p221
      %p223 = scmp.ne.s32.totalorder %s212, %s213
      %p224 = scmp.eq.s32.totalorder %s26, 0
      %p225 = por %p223, %p224
      %p226 = scmp.ne.s32.totalorder %s212, %s213
      %p227 = scmp.eq.s32.totalorder %s27, 5
      %p228 = por %p226, %p227
      %p230 = scmp.ne.s32.totalorder %s213, %s229
      %p231 = scmp.eq.s32.totalorder %s27, 0
      %p232 = por %p230, %p231
      %s233 = ssub.s32 %s21, %s28
      %p234 = scmp.eq.s32.totalorder %s233, 0
      %s236 = sadd.s32 %s235, 1
      %s237 = scalar_select %p234, %s235, %s236
      %p240 = pneg %p234
      %p241 = scmp.eq.s32.totalorder %s21, 5
      %p242 = por %p240, %p241
      %p243 = scmp.ne.s32.totalorder %s235, %s238
      %p244 = scmp.eq.s32.totalorder %s21, 0
      %p245 = por %p243, %p244
      %p246 = scmp.ne.s32.totalorder %s235, %s238
      %p247 = scmp.eq.s32.totalorder %s26, 5
      %p248 = por %p246, %p247
      %p249 = scmp.ne.s32.totalorder %s238, %s239
      %p250 = scmp.eq.s32.totalorder %s26, 0
      %p251 = por %p249, %p250
      %p252 = scmp.ne.s32.totalorder %s238, %s239
      %p253 = scmp.eq.s32.totalorder %s27, 5
      %p254 = por %p252, %p253
      %p256 = scmp.ne.s32.totalorder %s239, %s255
      %p257 = scmp.eq.s32.totalorder %s27, 0
      %p258 = por %p256, %p257
      %s259 = ssub.s32 %s21, %s28
      %p260 = scmp.eq.s32.totalorder %s259, 0
      %s262 = sadd.s32 %s261, 1
      %s263 = scalar_select %p260, %s261, %s262
      %p266 = pneg %p260
      %p267 = scmp.eq.s32.totalorder %s21, 5
      %p268 = por %p266, %p267
      %p269 = scmp.ne.s32.totalorder %s261, %s264
      %p270 = scmp.eq.s32.totalorder %s21, 0
      %p271 = por %p269, %p270
      %p272 = scmp.ne.s32.totalorder %s261, %s264
      %p273 = scmp.eq.s32.totalorder %s26, 5
      %p274 = por %p272, %p273
      %p275 = scmp.ne.s32.totalorder %s264, %s265
      %p276 = scmp.eq.s32.totalorder %s26, 0
      %p277 = por %p275, %p276
      %p278 = scmp.ne.s32.totalorder %s264, %s265
      %p279 = scmp.eq.s32.totalorder %s27, 5
      %p280 = por %p278, %p279
      %p282 = scmp.ne.s32.totalorder %s265, %s281
      %p283 = scmp.eq.s32.totalorder %s27, 0
      %p284 = por %p282, %p283
      %s285 = ssub.s32 %s21, %s28
      %p286 = scmp.eq.s32.totalorder %s285, 0
      %s288 = sadd.s32 %s287, 1
      %s289 = scalar_select %p286, %s287, %s288
      %p292 = pneg %p286
      %p293 = scmp.eq.s32.totalorder %s21, 5
      %p294 = por %p292, %p293
      %p295 = scmp.ne.s32.totalorder %s287, %s290
      %p296 = scmp.eq.s32.totalorder %s21, 0
      %p297 = por %p295, %p296
      %p298 = scmp.ne.s32.totalorder %s287, %s290
      %p299 = scmp.eq.s32.totalorder %s26, 5
      %p300 = por %p298, %p299
      %p301 = scmp.ne.s32.totalorder %s290, %s291
      %p302 = scmp.eq.s32.totalorder %s26, 0
      %p303 = por %p301, %p302
      %p304 = scmp.ne.s32.totalorder %s290, %s291
      %p305 = scmp.eq.s32.totalorder %s27, 5
      %p306 = por %p304, %p305
      %p308 = scmp.ne.s32.totalorder %s291, %s307
      %p309 = scmp.eq.s32.totalorder %s27, 0
      %p310 = por %p308, %p309
      %p311 = scmp.le.s32.totalorder 1, %s21
      %p312 = scmp.lt.s32.totalorder %s21, 7
      %p313 = pnand %p311, %p312
      %p314 = pneg %p313
      // Predicated region
      $region9: #{yuv_ms_ssim_loss.5} parent=5 // pred_check
        _
      $region10: #{yuv_ms_ssim_loss.5} parent=5 // pred_check_branch
        %316 = sbr.rel (%p313) target = $region12
      $region11: #{yuv_ms_ssim_loss.5} parent=5 // pred_region
        %s317 = ssub.s32 %s21, 1
        // Predicated region
        $region13: #{yuv_ms_ssim_loss.5} parent=11 // pred_check
          %p318 = pneg %p94
        $region14: #{yuv_ms_ssim_loss.5} parent=11 // pred_check_branch
          %320 = sbr.rel (%p318) target = $region16
        $region15: #{yuv_ms_ssim_loss.5} parent=11 // pred_region
          _
        $region16: #{yuv_ms_ssim_loss.5} parent=11 // pred_fallthru
          _
        // Predicated region
        $region17: #{yuv_ms_ssim_loss.5} parent=11 // pred_check
          %p321 = pneg %p115
        $region18: #{yuv_ms_ssim_loss.5} parent=11 // pred_check_branch
          %323 = sbr.rel (%p321) target = $region20
        $region19: #{yuv_ms_ssim_loss.5} parent=11 // pred_region
          _
        $region20: #{yuv_ms_ssim_loss.5} parent=11 // pred_fallthru
          _
        // Predicated region
        $region21: #{yuv_ms_ssim_loss.5} parent=11 // pred_check
          %p324 = pneg %p136
        $region22: #{yuv_ms_ssim_loss.5} parent=11 // pred_check_branch
          %326 = sbr.rel (%p324) target = $region24
        $region23: #{yuv_ms_ssim_loss.5} parent=11 // pred_region
          _
        $region24: #{yuv_ms_ssim_loss.5} parent=11 // pred_fallthru
          _
        // Predicated region
        $region25: #{yuv_ms_ssim_loss.5} parent=11 // pred_check
          %p327 = pneg %p157
        $region26: #{yuv_ms_ssim_loss.5} parent=11 // pred_check_branch
          %329 = sbr.rel (%p327) target = $region28
        $region27: #{yuv_ms_ssim_loss.5} parent=11 // pred_region
          _
        $region28: #{yuv_ms_ssim_loss.5} parent=11 // pred_fallthru
          _
        // Predicated region
        $region29: #{yuv_ms_ssim_loss.5} parent=11 // pred_check
          %p330 = pneg %p178
        $region30: #{yuv_ms_ssim_loss.5} parent=11 // pred_check_branch
          %332 = sbr.rel (%p330) target = $region32
        $region31: #{yuv_ms_ssim_loss.5} parent=11 // pred_region
          _
        $region32: #{yuv_ms_ssim_loss.5} parent=11 // pred_fallthru
          _
        // Predicated region
        $region33: #{yuv_ms_ssim_loss.5} parent=11 // pred_check
          %p333 = pneg %p199
        $region34: #{yuv_ms_ssim_loss.5} parent=11 // pred_check_branch
          %335 = sbr.rel (%p333) target = $region36
        $region35: #{yuv_ms_ssim_loss.5} parent=11 // pred_region
          _
        $region36: #{yuv_ms_ssim_loss.5} parent=11 // pred_fallthru
          _
      $region12: #{yuv_ms_ssim_loss.5} parent=5 // pred_fallthru
        _
      %p336 = scmp.lt.s32.totalorder %s21, 6
      // Predicated region
      $region37: #{yuv_ms_ssim_loss.5} parent=5 // pred_check
        %p337 = pneg %p336
      $region38: #{yuv_ms_ssim_loss.5} parent=5 // pred_check_branch
        %339 = sbr.rel (%p337) target = $region40
      $region39: #{yuv_ms_ssim_loss.5} parent=5 // pred_region
        // Predicated region
        $region41: #{yuv_ms_ssim_loss.5} parent=39 // pred_check
          %p340 = pneg %p41
        $region42: #{yuv_ms_ssim_loss.5} parent=39 // pred_check_branch
          %342 = sbr.rel (%p340) target = $region44
        $region43: #{yuv_ms_ssim_loss.5} parent=39 // pred_region
          %p343 = scmp.lt.s32.totalorder %s21, 5
          %s344 = scalar_select %p343, %s21, 5
          %s345 = smul.addr %s344, 4
          %s346 = smul.addr %s345, 8
          %s347 = scalar_lea.vmem %s0, %s346
        $region44: #{yuv_ms_ssim_loss.5} parent=39 // pred_fallthru
          _
        // Predicated region
        $region45: #{yuv_ms_ssim_loss.5} parent=39 // pred_check
          %p348 = pneg %p67
        $region46: #{yuv_ms_ssim_loss.5} parent=39 // pred_check_branch
          %350 = sbr.rel (%p348) target = $region48
        $region47: #{yuv_ms_ssim_loss.5} parent=39 // pred_region
          %p351 = scmp.lt.s32.totalorder %s21, 5
          %s352 = scalar_select %p351, %s21, 5
          %s353 = smul.addr %s352, 4
          %s354 = smul.addr %s353, 8
          %s355 = scalar_lea.vmem %s1, %s354
        $region48: #{yuv_ms_ssim_loss.5} parent=39 // pred_fallthru
          _
      $region40: #{yuv_ms_ssim_loss.5} parent=5 // pred_fallthru
        _
      %p356 = scmp.le.s32.totalorder 1, %s21
      %p357 = scmp.lt.s32.totalorder %s21, 7
      %p358 = pnand %p356, %p357
      %p359 = pneg %p358
      // Predicated region
      $region49: #{yuv_ms_ssim_loss.5} parent=5 // pred_check
        _
      $region50: #{yuv_ms_ssim_loss.5} parent=5 // pred_check_branch
        %361 = sbr.rel (%p358) target = $region52
      $region51: #{yuv_ms_ssim_loss.5} parent=5 // pred_region
        %s362 = ssub.s32 %s21, 1
        %p363 = scmp.lt.s32.totalorder %s26, 5
        %s364 = scalar_select %p363, %s26, 5
        %s365 = smul.addr %s364, 4
        %s366 = smul.addr %s365, 8
        %s367 = scalar_lea.vmem %s0, %s366
        %p368 = pneg %p47
        %p369 = pneg %p44
        %p370 = scmp.lt.s32.totalorder %s26, 5
        %s371 = scalar_select %p370, %s26, 5
        %s372 = smul.addr %s371, 4
        %s373 = smul.addr %s372, 8
        %s374 = scalar_lea.vmem %s1, %s373
        %p375 = pneg %p73
        %p376 = pneg %p70
        %p377 = pneg %p94
        %p378 = pneg %p91
        %p379 = pneg %p115
        %p380 = pneg %p112
        %p381 = pneg %p136
        %p382 = pneg %p133
        %p383 = pneg %p157
        %p384 = pneg %p154
        %p385 = pneg %p178
        %p386 = pneg %p175
        %p387 = pneg %p199
        %p388 = pneg %p196
        %p389 = pneg %p225
        %p390 = pneg %p222
        %s391 = sand.u32 %s212, 1
        %s392 = scalar_lea.sflag [#allocation3], %s391
        %s393 = sand.u32 %s212, 1
        %s394 = scalar_lea.vmem [#allocation2], %s393
        %p395 = pneg %p251
        %p396 = pneg %p248
        %p397 = scmp.lt.s32.totalorder %s26, 5
        %s398 = scalar_select %p397, %s26, 5
        %s399 = scalar_lea.vmem %s9, %s398
        %p400 = pneg %p277
        %p401 = pneg %p274
        %p402 = scmp.lt.s32.totalorder %s26, 5
        %s403 = scalar_select %p402, %s26, 5
        %s404 = smul.addr %s403, 2
        %s405 = smul.addr %s404, 8
        %s406 = scalar_lea.vmem %s10, %s405
        %p407 = pneg %p303
        %p408 = pneg %p300
        %p409 = scmp.lt.s32.totalorder %s26, 5
        %s410 = scalar_select %p409, %s26, 5
        %s411 = smul.addr %s410, 2
        %s412 = smul.addr %s411, 8
        %s413 = scalar_lea.vmem %s11, %s412
        %p414 = scmp.lt.s32.totalorder %s26, 5
        %s415 = scalar_select %p414, %s26, 5
        %s416 = smul.addr %s415, 4
        %s417 = smul.addr %s416, 8
        %s418 = scalar_lea.vmem %s0, %s417
        %p419 = scmp.lt.s32.totalorder %s26, 5
        %s420 = scalar_select %p419, %s26, 5
        %s421 = smul.addr %s420, 4
        %s422 = smul.addr %s421, 8
        %s423 = scalar_lea.vmem %s1, %s422
        %p424 = scmp.lt.s32.totalorder %s26, 5
        %s425 = scalar_select %p424, %s26, 5
        %s426 = scalar_lea.vmem %s9, %s425
        %p427 = scmp.lt.s32.totalorder %s26, 5
        %s428 = scalar_select %p427, %s26, 5
        %s429 = smul.addr %s428, 2
        %s430 = smul.addr %s429, 8
        %s431 = scalar_lea.vmem %s10, %s430
        %p432 = scmp.lt.s32.totalorder %s26, 5
        %s433 = scalar_select %p432, %s26, 5
        %s434 = smul.addr %s433, 2
        %s435 = smul.addr %s434, 8
        %s436 = scalar_lea.vmem %s11, %s435
        %v437 = vld [vmem:[%s418] sm:$0xff]
        %v438 = vld [vmem:[%s418 + $0x8] sm:$0xff]
        %v439 = vld [vmem:[%s418 + $0x10] sm:$0xff]
        %v440 = vld [vmem:[%s418 + $0x18] sm:$0xff]
        %v441 = vld [vmem:[%s423] sm:$0xff]
        %v442 = vld [vmem:[%s423 + $0x8] sm:$0xff]
        %v443 = vld [vmem:[%s423 + $0x10] sm:$0xff]
        %v444 = vld [vmem:[%s423 + $0x18] sm:$0xff]
        %v445 = vld [vmem:[%s2] sm:$0xff]
        %v446 = vld [vmem:[%s2 + $0x8] sm:$0xff]
        %v447 = vld [vmem:[%s2 + $0x10] sm:$0xff]
        %v448 = vld [vmem:[%s2 + $0x18] sm:$0xff]
        %v449 = vld [vmem:[%s3] sm:$0xff]
        %v450 = vld [vmem:[%s3 + $0x8] sm:$0xff]
        %v451 = vld [vmem:[%s3 + $0x10] sm:$0xff]
        %v452 = vld [vmem:[%s3 + $0x18] sm:$0xff]
        %v453 = vld [vmem:[%s3 + $0x20] sm:$0xff]
        %v454 = vld [vmem:[%s3 + $0x28] sm:$0xff]
        %v455 = vld [vmem:[%s3 + $0x30] sm:$0xff]
        %v456 = vld [vmem:[%s3 + $0x38] sm:$0xff]
        %v457 = vld [vmem:[%s3 + $0x40] sm:$0xff]
        %v458 = vld [vmem:[%s3 + $0x48] sm:$0xff]
        %v459 = vld [vmem:[%s3 + $0x50] sm:$0xff]
        %v460 = vld [vmem:[%s3 + $0x58] sm:$0xff]
        %v461 = vld [vmem:[%s3 + $0x60] sm:$0xff]
        %v462 = vld [vmem:[%s3 + $0x68] sm:$0xff]
        %v463 = vld [vmem:[%s3 + $0x70] sm:$0xff]
        %v464 = vld [vmem:[%s3 + $0x78] sm:$0xff]
        %v465 = vld [vmem:[%s4] sm:$0xff]
        %v466 = vld [vmem:[%s4 + $0x8] sm:$0xff]
        %v467 = vld [vmem:[%s4 + $0x10] sm:$0xff]
        %v468 = vld [vmem:[%s4 + $0x18] sm:$0xff]
        %v469 = vld [vmem:[%s5] sm:$0xff]
        %v470 = vld [vmem:[%s5 + $0x8] sm:$0xff]
        %v471 = vld [vmem:[%s5 + $0x10] sm:$0xff]
        %v472 = vld [vmem:[%s5 + $0x18] sm:$0xff]
        %p473 = scmp.lt.s32.totalorder %s26, 0
        %s474 = ssub.s32 0, %s26
        %s475 = scalar_select %p473, %s474, %s26
        %s476 = sdiv.u32.pop %s475, 3
        %s477 = srem.u32.pop %s475, 3
        %s478 = ssub.s32 0, %s477
        %s479 = scalar_select %p473, %s478, %s477
        %p480 = scmp.ne.s32.totalorder %s479, 0
        %p481 = scmp.lt.s32.totalorder %s479, 0
        %p482 = pnand %p481, %p480
        %p483 = pneg %p482
        %s484 = sadd.s32 %s479, 3
        %s485 = scalar_select %p483, %s484, %s479
        %p486 = scmp.eq.s32.totalorder %s485, 0
        %s487 = scalar_select %p486, 0.0, 128.0
        %v488 = vmul.f32 %v437, %v437
        %v489 = vmul.f32 %v438, %v438
        %v490 = vmul.f32 %v439, %v439
        %v491 = vmul.f32 %v440, %v440
        %v492 = vmul.f32 %v441, %v441
        %v493 = vmul.f32 %v442, %v442
        %v494 = vmul.f32 %v443, %v443
        %v495 = vmul.f32 %v444, %v444
        %v496 = vmul.f32 %v437, %v441
        %v497 = vmul.f32 %v438, %v442
        %v498 = vmul.f32 %v439, %v443
        %v499 = vmul.f32 %v440, %v444
        %500 = vmatpush.msra.mxu0 %v464
        %501 = vmatpush.msra.mxu0 %v463
        %502 = vmatpush.msra.mxu0 %v462
        %503 = vmatpush.msra.mxu0 %v461
        %504 = vmatpush.msra.mxu0 %v460
        %505 = vmatpush.msra.mxu0 %v459
        %506 = vmatpush.msra.mxu0 %v458
        %507 = vmatpush.msra.mxu0 %v457
        %508 = vmatpush.msra.mxu0 %v456
        %509 = vmatpush.msra.mxu0 %v455
        %510 = vmatpush.msra.mxu0 %v454
        %511 = vmatpush.msra.mxu0 %v453
        %512 = vmatpush.msra.mxu0 %v452
        %513 = vmatpush.msra.mxu0 %v451
        %514 = vmatpush.msra.mxu0 %v450
        %515 = vmatpush.msra.mxu0 %v449
        %516 = vmatmul.f32.gmra.mxu0 %v437
        %v517 = vpop.f32.mrf.mxu0
        %v518 = vadd.f32 0.0, %v517
        %519 = vmatmul.f32.gmra.mxu0 %v438
        %v520 = vpop.f32.mrf.mxu0
        %v521 = vadd.f32 0.0, %v520
        %522 = vmatmul.f32.gmra.mxu0 %v439
        %v523 = vpop.f32.mrf.mxu0
        %v524 = vadd.f32 0.0, %v523
        %525 = vmatmul.f32.gmra.mxu0 %v440
        %v526 = vpop.f32.mrf.mxu0
        %v527 = vadd.f32 0.0, %v526
        %528 = vmatmul.f32.gmra.mxu0 %v441
        %v529 = vpop.f32.mrf.mxu0
        %v530 = vadd.f32 0.0, %v529
        %531 = vmatmul.f32.gmra.mxu0 %v442
        %v532 = vpop.f32.mrf.mxu0
        %v533 = vadd.f32 0.0, %v532
        %534 = vmatmul.f32.gmra.mxu0 %v443
        %v535 = vpop.f32.mrf.mxu0
        %v536 = vadd.f32 0.0, %v535
        %537 = vmatmul.f32.gmra.mxu0 %v444
        %v538 = vpop.f32.mrf.mxu0
        %v539 = vadd.f32 0.0, %v538
        %540 = vmatmul.f32.gmra.mxu0 %v488
        %v541 = vpop.f32.mrf.mxu0
        %v542 = vadd.f32 0.0, %v541
        %543 = vmatmul.f32.gmra.mxu0 %v489
        %v544 = vpop.f32.mrf.mxu0
        %v545 = vadd.f32 0.0, %v544
        %546 = vmatmul.f32.gmra.mxu0 %v490
        %v547 = vpop.f32.mrf.mxu0
        %v548 = vadd.f32 0.0, %v547
        %549 = vmatmul.f32.gmra.mxu0 %v491
        %v550 = vpop.f32.mrf.mxu0
        %v551 = vadd.f32 0.0, %v550
        %552 = vmatmul.f32.gmra.mxu0 %v492
        %v553 = vpop.f32.mrf.mxu0
        %v554 = vadd.f32 0.0, %v553
        %555 = vmatmul.f32.gmra.mxu0 %v493
        %v556 = vpop.f32.mrf.mxu0
        %v557 = vadd.f32 0.0, %v556
        %558 = vmatmul.f32.gmra.mxu0 %v494
        %v559 = vpop.f32.mrf.mxu0
        %v560 = vadd.f32 0.0, %v559
        %561 = vmatmul.f32.gmra.mxu0 %v495
        %v562 = vpop.f32.mrf.mxu0
        %v563 = vadd.f32 0.0, %v562
        %564 = vmatmul.f32.gmra.mxu0 %v496
        %v565 = vpop.f32.mrf.mxu0
        %v566 = vadd.f32 0.0, %v565
        %567 = vmatmul.f32.gmra.mxu0 %v497
        %v568 = vpop.f32.mrf.mxu0
        %v569 = vadd.f32 0.0, %v568
        %570 = vmatmul.f32.gmra.mxu0 %v498
        %v571 = vpop.f32.mrf.mxu0
        %v572 = vadd.f32 0.0, %v571
        %573 = vmatmul.f32.gmra.mxu0 %v499
        %v574 = vpop.f32.mrf.mxu0
        %v575 = vadd.f32 0.0, %v574
        %576 = vdwg.mxu0
        %vm577 = vcmask 261120
        %v579 = vsel %vm577, %v445, 0
        %v582 = vsel %vm577, %v446, 0
        %v585 = vsel %vm577, %v447, 0
        %v588 = vsel %vm577, %v448, 0
        %590 = vmatpush.msra.mxu0 0.0
        %591 = vmatpush.msra.mxu0 0.0
        %592 = vmatpush.msra.mxu0 0.0
        %593 = vmatpush.msra.mxu0 0.0
        %594 = vmatpush.msra.mxu0 0.0
        %595 = vmatpush.msra.mxu0 0.0
        %596 = vmatpush.msra.mxu0 0.0
        %597 = vmatpush.msra.mxu0 0.0
        %598 = vmatpush.msra.mxu0 0.0
        %599 = vmatpush.msra.mxu0 0.0
        %600 = vmatpush.msra.mxu0 0.0
        %601 = vmatpush.msra.mxu0 0.0
        %602 = vmatpush.msra.mxu0 %v527
        %603 = vmatpush.msra.mxu0 %v524
        %604 = vmatpush.msra.mxu0 %v521
        %605 = vmatpush.msra.mxu0 %v518
        %606 = vmatmul.f32.gmra.mxu0 %v579
        %v607 = vpop.f32.mrf.mxu0
        %v608 = vadd.f32 0.0, %v607
        %609 = vmatmul.f32.gmra.mxu0 %v582
        %v610 = vpop.f32.mrf.mxu0
        %v611 = vadd.f32 0.0, %v610
        %612 = vmatmul.f32.gmra.mxu0 %v585
        %v613 = vpop.f32.mrf.mxu0
        %v614 = vadd.f32 0.0, %v613
        %615 = vmatmul.f32.gmra.mxu0 %v588
        %v616 = vpop.f32.mrf.mxu0
        %v617 = vadd.f32 0.0, %v616
        %618 = vdwg.mxu0
        %619 = vmatpush.msra.mxu0 0.0
        %620 = vmatpush.msra.mxu0 0.0
        %621 = vmatpush.msra.mxu0 0.0
        %622 = vmatpush.msra.mxu0 0.0
        %623 = vmatpush.msra.mxu0 0.0
        %624 = vmatpush.msra.mxu0 0.0
        %625 = vmatpush.msra.mxu0 0.0
        %626 = vmatpush.msra.mxu0 0.0
        %627 = vmatpush.msra.mxu0 0.0
        %628 = vmatpush.msra.mxu0 0.0
        %629 = vmatpush.msra.mxu0 0.0
        %630 = vmatpush.msra.mxu0 0.0
        %631 = vmatpush.msra.mxu0 %v539
        %632 = vmatpush.msra.mxu0 %v536
        %633 = vmatpush.msra.mxu0 %v533
        %634 = vmatpush.msra.mxu0 %v530
        %635 = vmatmul.f32.gmra.mxu0 %v579
        %v636 = vpop.f32.mrf.mxu0
        %v637 = vadd.f32 0.0, %v636
        %638 = vmatmul.f32.gmra.mxu0 %v582
        %v639 = vpop.f32.mrf.mxu0
        %v640 = vadd.f32 0.0, %v639
        %641 = vmatmul.f32.gmra.mxu0 %v585
        %v642 = vpop.f32.mrf.mxu0
        %v643 = vadd.f32 0.0, %v642
        %644 = vmatmul.f32.gmra.mxu0 %v588
        %v645 = vpop.f32.mrf.mxu0
        %v646 = vadd.f32 0.0, %v645
        %647 = vdwg.mxu0
        %648 = vmatpush.msra.mxu0 0.0
        %649 = vmatpush.msra.mxu0 0.0
        %650 = vmatpush.msra.mxu0 0.0
        %651 = vmatpush.msra.mxu0 0.0
        %652 = vmatpush.msra.mxu0 0.0
        %653 = vmatpush.msra.mxu0 0.0
        %654 = vmatpush.msra.mxu0 0.0
        %655 = vmatpush.msra.mxu0 0.0
        %656 = vmatpush.msra.mxu0 0.0
        %657 = vmatpush.msra.mxu0 0.0
        %658 = vmatpush.msra.mxu0 0.0
        %659 = vmatpush.msra.mxu0 0.0
        %660 = vmatpush.msra.mxu0 %v551
        %661 = vmatpush.msra.mxu0 %v548
        %662 = vmatpush.msra.mxu0 %v545
        %663 = vmatpush.msra.mxu0 %v542
        %664 = vmatmul.f32.gmra.mxu0 %v579
        %v665 = vpop.f32.mrf.mxu0
        %v666 = vadd.f32 0.0, %v665
        %667 = vmatmul.f32.gmra.mxu0 %v582
        %v668 = vpop.f32.mrf.mxu0
        %v669 = vadd.f32 0.0, %v668
        %670 = vmatmul.f32.gmra.mxu0 %v585
        %v671 = vpop.f32.mrf.mxu0
        %v672 = vadd.f32 0.0, %v671
        %673 = vmatmul.f32.gmra.mxu0 %v588
        %v674 = vpop.f32.mrf.mxu0
        %v675 = vadd.f32 0.0, %v674
        %676 = vdwg.mxu0
        %677 = vmatpush.msra.mxu0 0.0
        %678 = vmatpush.msra.mxu0 0.0
        %679 = vmatpush.msra.mxu0 0.0
        %680 = vmatpush.msra.mxu0 0.0
        %681 = vmatpush.msra.mxu0 0.0
        %682 = vmatpush.msra.mxu0 0.0
        %683 = vmatpush.msra.mxu0 0.0
        %684 = vmatpush.msra.mxu0 0.0
        %685 = vmatpush.msra.mxu0 0.0
        %686 = vmatpush.msra.mxu0 0.0
        %687 = vmatpush.msra.mxu0 0.0
        %688 = vmatpush.msra.mxu0 0.0
        %689 = vmatpush.msra.mxu0 %v563
        %690 = vmatpush.msra.mxu0 %v560
        %691 = vmatpush.msra.mxu0 %v557
        %692 = vmatpush.msra.mxu0 %v554
        %693 = vmatmul.f32.gmra.mxu0 %v579
        %v694 = vpop.f32.mrf.mxu0
        %v695 = vadd.f32 0.0, %v694
        %696 = vmatmul.f32.gmra.mxu0 %v582
        %v697 = vpop.f32.mrf.mxu0
        %v698 = vadd.f32 0.0, %v697
        %699 = vmatmul.f32.gmra.mxu0 %v585
        %v700 = vpop.f32.mrf.mxu0
        %v701 = vadd.f32 0.0, %v700
        %702 = vmatmul.f32.gmra.mxu0 %v588
        %v703 = vpop.f32.mrf.mxu0
        %v704 = vadd.f32 0.0, %v703
        %705 = vdwg.mxu0
        %706 = vmatpush.msra.mxu0 0.0
        %707 = vmatpush.msra.mxu0 0.0
        %708 = vmatpush.msra.mxu0 0.0
        %709 = vmatpush.msra.mxu0 0.0
        %710 = vmatpush.msra.mxu0 0.0
        %711 = vmatpush.msra.mxu0 0.0
        %712 = vmatpush.msra.mxu0 0.0
        %713 = vmatpush.msra.mxu0 0.0
        %714 = vmatpush.msra.mxu0 0.0
        %715 = vmatpush.msra.mxu0 0.0
        %716 = vmatpush.msra.mxu0 0.0
        %717 = vmatpush.msra.mxu0 0.0
        %718 = vmatpush.msra.mxu0 %v575
        %719 = vmatpush.msra.mxu0 %v572
        %720 = vmatpush.msra.mxu0 %v569
        %721 = vmatpush.msra.mxu0 %v566
        %722 = vmatmul.f32.gmra.mxu0 %v579
        %v723 = vpop.f32.mrf.mxu0
        %v724 = vadd.f32 0.0, %v723
        %725 = vmatmul.f32.gmra.mxu0 %v582
        %v726 = vpop.f32.mrf.mxu0
        %v727 = vadd.f32 0.0, %v726
        %728 = vmatmul.f32.gmra.mxu0 %v585
        %v729 = vpop.f32.mrf.mxu0
        %v730 = vadd.f32 0.0, %v729
        %731 = vmatmul.f32.gmra.mxu0 %v588
        %v732 = vpop.f32.mrf.mxu0
        %v733 = vadd.f32 0.0, %v732
        %734 = vdwg.mxu0
        %v735 = vsub.f32 1.0, %v465
        %v736 = vsub.f32 1.0, %v466
        %v737 = vsub.f32 1.0, %v467
        %v738 = vsub.f32 1.0, %v468
        %s739 = smul.f32 %s487, %s487
        %v740 = vstv %s739
        %v741 = vmul.f32 %v740, %v465
        %v742 = vmul.f32 %v740, %v466
        %v743 = vmul.f32 %v740, %v467
        %v744 = vmul.f32 %v740, %v468
        %v745 = vmul.f32 %v741, %v735
        %v746 = vmul.f32 %v742, %v736
        %v747 = vmul.f32 %v743, %v737
        %v748 = vmul.f32 %v744, %v738
        %v749 = vstv %s487
        %v750 = vmul.f32 %v749, %v465
        %v751 = vmul.f32 %v749, %v466
        %v752 = vmul.f32 %v749, %v467
        %v753 = vmul.f32 %v749, %v468
        %v754 = vadd.f32 %v608, %v750
        %v755 = vadd.f32 %v611, %v751
        %v756 = vadd.f32 %v614, %v752
        %v757 = vadd.f32 %v617, %v753
        %v758 = vadd.f32 %v637, %v750
        %v759 = vadd.f32 %v640, %v751
        %v760 = vadd.f32 %v643, %v752
        %v761 = vadd.f32 %v646, %v753
        %v762 = vmul.f32 %v754, %v754
        %v763 = vmul.f32 %v755, %v755
        %v764 = vmul.f32 %v756, %v756
        %v765 = vmul.f32 %v757, %v757
        %v766 = vmul.f32 %v758, %v758
        %v767 = vmul.f32 %v759, %v759
        %v768 = vmul.f32 %v760, %v760
        %v769 = vmul.f32 %v761, %v761
        %v770 = vmul.f32 %v754, %v758
        %v771 = vmul.f32 %v755, %v759
        %v772 = vmul.f32 %v756, %v760
        %v773 = vmul.f32 %v757, %v761
        %v774 = vmul.f32 %v608, %v608
        %v775 = vmul.f32 %v611, %v611
        %v776 = vmul.f32 %v614, %v614
        %v777 = vmul.f32 %v617, %v617
        %v778 = vsub.f32 %v666, %v774
        %v779 = vsub.f32 %v669, %v775
        %v780 = vsub.f32 %v672, %v776
        %v781 = vsub.f32 %v675, %v777
        %s782 = smul.f32 %s487, 2.0
        %v783 = vstv %s782
        %v784 = vmul.f32 %v783, %v608
        %v785 = vmul.f32 %v783, %v611
        %v786 = vmul.f32 %v783, %v614
        %v787 = vmul.f32 %v783, %v617
        %v788 = vmul.f32 %v784, %v735
        %v789 = vmul.f32 %v785, %v736
        %v790 = vmul.f32 %v786, %v737
        %v791 = vmul.f32 %v787, %v738
        %v792 = vadd.f32 %v778, %v788
        %v793 = vadd.f32 %v779, %v789
        %v794 = vadd.f32 %v780, %v790
        %v795 = vadd.f32 %v781, %v791
        %v796 = vadd.f32 %v792, %v745
        %v797 = vadd.f32 %v793, %v746
        %v798 = vadd.f32 %v794, %v747
        %v799 = vadd.f32 %v795, %v748
        %v800 = vmul.f32 %v637, %v637
        %v801 = vmul.f32 %v640, %v640
        %v802 = vmul.f32 %v643, %v643
        %v803 = vmul.f32 %v646, %v646
        %v804 = vsub.f32 %v695, %v800
        %v805 = vsub.f32 %v698, %v801
        %v806 = vsub.f32 %v701, %v802
        %v807 = vsub.f32 %v704, %v803
        %v808 = vmul.f32 %v783, %v637
        %v809 = vmul.f32 %v783, %v640
        %v810 = vmul.f32 %v783, %v643
        %v811 = vmul.f32 %v783, %v646
        %v812 = vmul.f32 %v808, %v735
        %v813 = vmul.f32 %v809, %v736
        %v814 = vmul.f32 %v810, %v737
        %v815 = vmul.f32 %v811, %v738
        %v816 = vadd.f32 %v804, %v812
        %v817 = vadd.f32 %v805, %v813
        %v818 = vadd.f32 %v806, %v814
        %v819 = vadd.f32 %v807, %v815
        %v820 = vadd.f32 %v816, %v745
        %v821 = vadd.f32 %v817, %v746
        %v822 = vadd.f32 %v818, %v747
        %v823 = vadd.f32 %v819, %v748
        %v824 = vmul.f32 %v608, %v637
        %v825 = vmul.f32 %v611, %v640
        %v826 = vmul.f32 %v614, %v643
        %v827 = vmul.f32 %v617, %v646
        %v828 = vsub.f32 %v724, %v824
        %v829 = vsub.f32 %v727, %v825
        %v830 = vsub.f32 %v730, %v826
        %v831 = vsub.f32 %v733, %v827
        %v832 = vadd.f32 %v608, %v637
        %v833 = vadd.f32 %v611, %v640
        %v834 = vadd.f32 %v614, %v643
        %v835 = vadd.f32 %v617, %v646
        %v836 = vmul.f32 %v749, %v832
        %v837 = vmul.f32 %v749, %v833
        %v838 = vmul.f32 %v749, %v834
        %v839 = vmul.f32 %v749, %v835
        %v840 = vmul.f32 %v836, %v735
        %v841 = vmul.f32 %v837, %v736
        %v842 = vmul.f32 %v838, %v737
        %v843 = vmul.f32 %v839, %v738
        %v844 = vadd.f32 %v828, %v840
        %v845 = vadd.f32 %v829, %v841
        %v846 = vadd.f32 %v830, %v842
        %v847 = vadd.f32 %v831, %v843
        %v848 = vadd.f32 %v844, %v745
        %v849 = vadd.f32 %v845, %v746
        %v850 = vadd.f32 %v846, %v747
        %v851 = vadd.f32 %v847, %v748
        %v852 = vmul.f32 %v848, 2.0
        %v853 = vmul.f32 %v849, 2.0
        %v854 = vmul.f32 %v850, 2.0
        %v855 = vmul.f32 %v851, 2.0
        %v856 = vadd.f32 %v852, 0.0009
        %v857 = vadd.f32 %v853, 0.0009
        %v858 = vadd.f32 %v854, 0.0009
        %v859 = vadd.f32 %v855, 0.0009
        %v860 = vadd.f32 %v796, %v820
        %v861 = vadd.f32 %v797, %v821
        %v862 = vadd.f32 %v798, %v822
        %v863 = vadd.f32 %v799, %v823
        %v864 = vadd.f32 %v860, 0.0009
        %v865 = vadd.f32 %v861, 0.0009
        %v866 = vadd.f32 %v862, 0.0009
        %v867 = vadd.f32 %v863, 0.0009
        %v868 = vrcp.pop %v864
        %v869 = vrcp.pop %v865
        %v870 = vrcp.pop %v866
        %v871 = vrcp.pop %v867
        %v872 = vmul.f32 %v864, %v868
        %v873 = vmul.f32 %v865, %v869
        %v874 = vmul.f32 %v866, %v870
        %v875 = vmul.f32 %v867, %v871
        %v876 = vsub.f32 2.0, %v872
        %v877 = vsub.f32 2.0, %v873
        %v878 = vsub.f32 2.0, %v874
        %v879 = vsub.f32 2.0, %v875
        %v880 = vmul.f32 %v868, %v876
        %v881 = vmul.f32 %v869, %v877
        %v882 = vmul.f32 %v870, %v878
        %v883 = vmul.f32 %v871, %v879
        %v884 = vmul.f32 %v856, %v880
        %v885 = vmul.f32 %v857, %v881
        %v886 = vmul.f32 %v858, %v882
        %v887 = vmul.f32 %v859, %v883
        %v888 = vmul.f32 %v770, 2.0
        %v889 = vmul.f32 %v771, 2.0
        %v890 = vmul.f32 %v772, 2.0
        %v891 = vmul.f32 %v773, 2.0
        %v892 = vadd.f32 %v888, 0.0001
        %v893 = vadd.f32 %v889, 0.0001
        %v894 = vadd.f32 %v890, 0.0001
        %v895 = vadd.f32 %v891, 0.0001
        %v896 = vadd.f32 %v762, %v766
        %v897 = vadd.f32 %v763, %v767
        %v898 = vadd.f32 %v764, %v768
        %v899 = vadd.f32 %v765, %v769
        %v900 = vadd.f32 %v896, 0.0001
        %v901 = vadd.f32 %v897, 0.0001
        %v902 = vadd.f32 %v898, 0.0001
        %v903 = vadd.f32 %v899, 0.0001
        %v904 = vrcp.pop %v900
        %v905 = vrcp.pop %v901
        %v906 = vrcp.pop %v902
        %v907 = vrcp.pop %v903
        %v908 = vmul.f32 %v900, %v904
        %v909 = vmul.f32 %v901, %v905
        %v910 = vmul.f32 %v902, %v906
        %v911 = vmul.f32 %v903, %v907
        %v912 = vsub.f32 2.0, %v908
        %v913 = vsub.f32 2.0, %v909
        %v914 = vsub.f32 2.0, %v910
        %v915 = vsub.f32 2.0, %v911
        %v916 = vmul.f32 %v904, %v912
        %v917 = vmul.f32 %v905, %v913
        %v918 = vmul.f32 %v906, %v914
        %v919 = vmul.f32 %v907, %v915
        %v920 = vmul.f32 %v892, %v916
        %v921 = vmul.f32 %v893, %v917
        %v922 = vmul.f32 %v894, %v918
        %v923 = vmul.f32 %v895, %v919
        %v924 = vmul.f32 %v920, %v884
        %v925 = vmul.f32 %v921, %v885
        %v926 = vmul.f32 %v922, %v886
        %v927 = vmul.f32 %v923, %v887
        %v928 = vmul.f32 %v924, %v469
        %v929 = vmul.f32 %v925, %v470
        %v930 = vmul.f32 %v926, %v471
        %v931 = vmul.f32 %v927, %v472
        %v932 = vadd.f32 %v928, %v929
        %v933 = vadd.f32 %v932, %v930
        %v934 = vadd.f32 %v933, %v931
        %935 = vadd.xlane.f32.xlu0 %v934
        %v936 = vpop.xlane.xlu0 %935
        %v937 = vrot.slane %v936, 4
        %v938 = vadd.f32 %v936, %v937
        %v939 = vrot.slane %v938, 2
        %v940 = vadd.f32 %v938, %v939
        %v941 = vrot.slane %v940, 1
        %v942 = vadd.f32 %v940, %v941
        %s943 = vtos %v942
        %v944 = vstv %s943
        %vm945 = vcmask 0
        %946 = vst.msk [vmem:[%s394] sm:$0x1] %vm945, %v944
        %v947 = vmul.f32 %v884, %v469
        %v948 = vmul.f32 %v885, %v470
        %v949 = vmul.f32 %v886, %v471
        %v950 = vmul.f32 %v887, %v472
        %v951 = vadd.f32 %v947, %v948
        %v952 = vadd.f32 %v951, %v949
        %v953 = vadd.f32 %v952, %v950
        %954 = vadd.xlane.f32.xlu0 %v953
        %v955 = vpop.xlane.xlu0 %954
        %v956 = vrot.slane %v955, 4
        %v957 = vadd.f32 %v955, %v956
        %v958 = vrot.slane %v957, 2
        %v959 = vadd.f32 %v957, %v958
        %v960 = vrot.slane %v959, 1
        %v961 = vadd.f32 %v959, %v960
        %s962 = vtos %v961
        %v963 = vstv %s962
        %964 = vst.msk [vmem:[%s426] sm:$0x1] %vm945, %v963
        %v965 = vld [vmem:[%s6] sm:$0xff]
        %v966 = vld [vmem:[%s6 + $0x8] sm:$0xff]
        %v967 = vld [vmem:[%s7] sm:$0xff]
        %v968 = vld [vmem:[%s7 + $0x8] sm:$0xff]
        %v969 = vld [vmem:[%s7 + $0x10] sm:$0xff]
        %v970 = vld [vmem:[%s7 + $0x18] sm:$0xff]
        %v971 = vld [vmem:[%s7 + $0x20] sm:$0xff]
        %v972 = vld [vmem:[%s7 + $0x28] sm:$0xff]
        %v973 = vld [vmem:[%s7 + $0x30] sm:$0xff]
        %v974 = vld [vmem:[%s7 + $0x38] sm:$0xff]
        %v975 = vld [vmem:[%s7 + $0x40] sm:$0xff]
        %v976 = vld [vmem:[%s7 + $0x48] sm:$0xff]
        %v977 = vld [vmem:[%s7 + $0x50] sm:$0xff]
        %v978 = vld [vmem:[%s7 + $0x58] sm:$0xff]
        %v979 = vld [vmem:[%s7 + $0x60] sm:$0xff]
        %v980 = vld [vmem:[%s7 + $0x68] sm:$0xff]
        %v981 = vld [vmem:[%s7 + $0x70] sm:$0xff]
        %v982 = vld [vmem:[%s7 + $0x78] sm:$0xff]
        %983 = vmatpush.msra.mxu0 %v982
        %984 = vmatpush.msra.mxu0 %v981
        %985 = vmatpush.msra.mxu0 %v980
        %986 = vmatpush.msra.mxu0 %v979
        %987 = vmatpush.msra.mxu0 %v978
        %988 = vmatpush.msra.mxu0 %v977
        %989 = vmatpush.msra.mxu0 %v976
        %990 = vmatpush.msra.mxu0 %v975
        %991 = vmatpush.msra.mxu0 %v974
        %992 = vmatpush.msra.mxu0 %v973
        %993 = vmatpush.msra.mxu0 %v972
        %994 = vmatpush.msra.mxu0 %v971
        %995 = vmatpush.msra.mxu0 %v970
        %996 = vmatpush.msra.mxu0 %v969
        %997 = vmatpush.msra.mxu0 %v968
        %998 = vmatpush.msra.mxu0 %v967
        %999 = vmatmul.f32.gmra.mxu0 %v437
        %v1000 = vpop.f32.mrf.mxu0
        %v1001 = vadd.f32 0.0, %v1000
        %1002 = vmatmul.f32.gmra.mxu0 %v438
        %v1003 = vpop.f32.mrf.mxu0
        %v1004 = vadd.f32 0.0, %v1003
        %1005 = vmatmul.f32.gmra.mxu0 %v439
        %v1006 = vpop.f32.mrf.mxu0
        %v1007 = vadd.f32 0.0, %v1006
        %1008 = vmatmul.f32.gmra.mxu0 %v440
        %v1009 = vpop.f32.mrf.mxu0
        %v1010 = vadd.f32 0.0, %v1009
        %1011 = vmatmul.f32.gmra.mxu0 %v441
        %v1012 = vpop.f32.mrf.mxu0
        %v1013 = vadd.f32 0.0, %v1012
        %1014 = vmatmul.f32.gmra.mxu0 %v442
        %v1015 = vpop.f32.mrf.mxu0
        %v1016 = vadd.f32 0.0, %v1015
        %1017 = vmatmul.f32.gmra.mxu0 %v443
        %v1018 = vpop.f32.mrf.mxu0
        %v1019 = vadd.f32 0.0, %v1018
        %1020 = vmatmul.f32.gmra.mxu0 %v444
        %v1021 = vpop.f32.mrf.mxu0
        %v1022 = vadd.f32 0.0, %v1021
        %1023 = vdwg.mxu0
        %v1025 = vsel %vm577, %v965, 0
        %v1028 = vsel %vm577, %v966, 0
        %1030 = vmatpush.msra.mxu0 0.0
        %1031 = vmatpush.msra.mxu0 0.0
        %1032 = vmatpush.msra.mxu0 0.0
        %1033 = vmatpush.msra.mxu0 0.0
        %1034 = vmatpush.msra.mxu0 0.0
        %1035 = vmatpush.msra.mxu0 0.0
        %1036 = vmatpush.msra.mxu0 0.0
        %1037 = vmatpush.msra.mxu0 0.0
        %1038 = vmatpush.msra.mxu0 0.0
        %1039 = vmatpush.msra.mxu0 0.0
        %1040 = vmatpush.msra.mxu0 0.0
        %1041 = vmatpush.msra.mxu0 0.0
        %1042 = vmatpush.msra.mxu0 %v1010
        %1043 = vmatpush.msra.mxu0 %v1007
        %1044 = vmatpush.msra.mxu0 %v1004
        %1045 = vmatpush.msra.mxu0 %v1001
        %1046 = vmatmul.f32.gmra.mxu0 %v1025
        %v1047 = vpop.f32.mrf.mxu0
        %v1048 = vadd.f32 0.0, %v1047
        %1049 = vmatmul.f32.gmra.mxu0 %v1028
        %v1050 = vpop.f32.mrf.mxu0
        %v1051 = vadd.f32 0.0, %v1050
        %1052 = vdwg.mxu0
        %1053 = vst [vmem:[%s431] sm:$0xff] %v1048
        %1054 = vst [vmem:[%s431 + $0x8] sm:$0xff] %v1051
        %1055 = vmatpush.msra.mxu0 0.0
        %1056 = vmatpush.msra.mxu0 0.0
        %1057 = vmatpush.msra.mxu0 0.0
        %1058 = vmatpush.msra.mxu0 0.0
        %1059 = vmatpush.msra.mxu0 0.0
        %1060 = vmatpush.msra.mxu0 0.0
        %1061 = vmatpush.msra.mxu0 0.0
        %1062 = vmatpush.msra.mxu0 0.0
        %1063 = vmatpush.msra.mxu0 0.0
        %1064 = vmatpush.msra.mxu0 0.0
        %1065 = vmatpush.msra.mxu0 0.0
        %1066 = vmatpush.msra.mxu0 0.0
        %1067 = vmatpush.msra.mxu0 %v1022
        %1068 = vmatpush.msra.mxu0 %v1019
        %1069 = vmatpush.msra.mxu0 %v1016
        %1070 = vmatpush.msra.mxu0 %v1013
        %1071 = vmatmul.f32.gmra.mxu0 %v1025
        %v1072 = vpop.f32.mrf.mxu0
        %v1073 = vadd.f32 0.0, %v1072
        %1074 = vmatmul.f32.gmra.mxu0 %v1028
        %v1075 = vpop.f32.mrf.mxu0
        %v1076 = vadd.f32 0.0, %v1075
        %1077 = vdwg.mxu0
        %1078 = vst [vmem:[%s436] sm:$0xff] %v1073
        %1079 = vst [vmem:[%s436 + $0x8] sm:$0xff] %v1076
        %s1080 = sand.u32 %s212, 1
        %s1081 = scalar_lea.sflag [#allocation3], %s1080
        %s1082 = sand.u32 %s212, 1
        %s1083 = scalar_lea.vmem [#allocation2], %s1082
        %p1084 = scmp.lt.s32.totalorder %s26, 5
        %s1085 = scalar_select %p1084, %s26, 5
        %s1086 = scalar_lea.vmem %s9, %s1085
        %p1087 = scmp.lt.s32.totalorder %s26, 5
        %s1088 = scalar_select %p1087, %s26, 5
        %s1089 = smul.addr %s1088, 2
        %s1090 = smul.addr %s1089, 8
        %s1091 = scalar_lea.vmem %s10, %s1090
        %p1092 = scmp.lt.s32.totalorder %s26, 5
        %s1093 = scalar_select %p1092, %s26, 5
        %s1094 = smul.addr %s1093, 2
        %s1095 = smul.addr %s1094, 8
        %s1096 = scalar_lea.vmem %s11, %s1095
        // Predicated region
        $region53: #{yuv_ms_ssim_loss.5} parent=51 // pred_check
          %p1097 = pneg %p222
        $region54: #{yuv_ms_ssim_loss.5} parent=51 // pred_check_branch
          %1099 = sbr.rel (%p1097) target = $region56
        $region55: #{yuv_ms_ssim_loss.5} parent=51 // pred_region
          %1101 = vsyncadd %s1081, 0
          %s1102 = scalar_lea.hbm %s8, %s26
          %s1104 = sshll.u32 %s1083, 4
          %s1105 = int_to_ptr.vmem [resolvable:$true] %s1104
          %s1106 = sshll.u32 %s1102, 4
          %s1107 = int_to_ptr.hbm [resolvable:$true] %s1106
          %1109 = dma.vmem_to_hbm [thread:$0]  %s1105, 16, %s1107, %s1081
        $region56: #{yuv_ms_ssim_loss.5} parent=51 // pred_fallthru
          _
        // Predicated region
        $region57: #{yuv_ms_ssim_loss.5} parent=51 // pred_check
          %p1110 = pneg %p248
        $region58: #{yuv_ms_ssim_loss.5} parent=51 // pred_check_branch
          %1112 = sbr.rel (%p1110) target = $region60
        $region59: #{yuv_ms_ssim_loss.5} parent=51 // pred_region
          _
        $region60: #{yuv_ms_ssim_loss.5} parent=51 // pred_fallthru
          _
        // Predicated region
        $region61: #{yuv_ms_ssim_loss.5} parent=51 // pred_check
          %p1113 = pneg %p274
        $region62: #{yuv_ms_ssim_loss.5} parent=51 // pred_check_branch
          %1115 = sbr.rel (%p1113) target = $region64
        $region63: #{yuv_ms_ssim_loss.5} parent=51 // pred_region
          _
        $region64: #{yuv_ms_ssim_loss.5} parent=51 // pred_fallthru
          _
        // Predicated region
        $region65: #{yuv_ms_ssim_loss.5} parent=51 // pred_check
          %p1116 = pneg %p300
        $region66: #{yuv_ms_ssim_loss.5} parent=51 // pred_check_branch
          %1118 = sbr.rel (%p1116) target = $region68
        $region67: #{yuv_ms_ssim_loss.5} parent=51 // pred_region
          _
        $region68: #{yuv_ms_ssim_loss.5} parent=51 // pred_fallthru
          _
      $region52: #{yuv_ms_ssim_loss.5} parent=5 // pred_fallthru
        _
      %p1119 = scmp.le.s32.totalorder 2, %s21
      // Predicated region
      $region69: #{yuv_ms_ssim_loss.5} parent=5 // pred_check
        %p1120 = pneg %p1119
      $region70: #{yuv_ms_ssim_loss.5} parent=5 // pred_check_branch
        %1122 = sbr.rel (%p1120) target = $region72
      $region71: #{yuv_ms_ssim_loss.5} parent=5 // pred_region
        %s1123 = ssub.s32 %s21, 2
        // Predicated region
        $region73: #{yuv_ms_ssim_loss.5} parent=71 // pred_check
          %p1124 = pneg %p228
        $region74: #{yuv_ms_ssim_loss.5} parent=71 // pred_check_branch
          %1126 = sbr.rel (%p1124) target = $region76
        $region75: #{yuv_ms_ssim_loss.5} parent=71 // pred_region
          %s1127 = sand.u32 %s213, 1
          %s1128 = scalar_lea.sflag [#allocation3], %s1127
          %s1129 = sand.u32 %s213, 1
          %s1130 = scalar_lea.vmem [#allocation2], %s1129
          %1132 = dma.done %s1128, 16
        $region76: #{yuv_ms_ssim_loss.5} parent=71 // pred_fallthru
          _
        // Predicated region
        $region77: #{yuv_ms_ssim_loss.5} parent=71 // pred_check
          %p1133 = pneg %p254
        $region78: #{yuv_ms_ssim_loss.5} parent=71 // pred_check_branch
          %1135 = sbr.rel (%p1133) target = $region80
        $region79: #{yuv_ms_ssim_loss.5} parent=71 // pred_region
          %p1136 = scmp.lt.s32.totalorder %s27, 5
          %s1137 = scalar_select %p1136, %s27, 5
          %s1138 = scalar_lea.vmem %s9, %s1137
        $region80: #{yuv_ms_ssim_loss.5} parent=71 // pred_fallthru
          _
        // Predicated region
        $region81: #{yuv_ms_ssim_loss.5} parent=71 // pred_check
          %p1139 = pneg %p280
        $region82: #{yuv_ms_ssim_loss.5} parent=71 // pred_check_branch
          %1141 = sbr.rel (%p1139) target = $region84
        $region83: #{yuv_ms_ssim_loss.5} parent=71 // pred_region
          %p1142 = scmp.lt.s32.totalorder %s27, 5
          %s1143 = scalar_select %p1142, %s27, 5
          %s1144 = smul.addr %s1143, 2
          %s1145 = smul.addr %s1144, 8
          %s1146 = scalar_lea.vmem %s10, %s1145
        $region84: #{yuv_ms_ssim_loss.5} parent=71 // pred_fallthru
          _
        // Predicated region
        $region85: #{yuv_ms_ssim_loss.5} parent=71 // pred_check
          %p1147 = pneg %p306
        $region86: #{yuv_ms_ssim_loss.5} parent=71 // pred_check_branch
          %1149 = sbr.rel (%p1147) target = $region88
        $region87: #{yuv_ms_ssim_loss.5} parent=71 // pred_region
          %p1150 = scmp.lt.s32.totalorder %s27, 5
          %s1151 = scalar_select %p1150, %s27, 5
          %s1152 = smul.addr %s1151, 2
          %s1153 = smul.addr %s1152, 8
          %s1154 = scalar_lea.vmem %s11, %s1153
        $region88: #{yuv_ms_ssim_loss.5} parent=71 // pred_fallthru
          _
      $region72: #{yuv_ms_ssim_loss.5} parent=5 // pred_fallthru
        _
    $region6: #{yuv_ms_ssim_loss.5} parent=1 // loop_footer
      %s25 = sadd.s32 1, %s21
    $region7: #{yuv_ms_ssim_loss.5} parent=1 // loop_footer_branch
      %20 = sbr.rel target = $region3
    $region8: #{yuv_ms_ssim_loss.5} parent=1 // loop_exit
      _
    %1155 = vsyncpa [#allocation3], 1
    %s1156 = scalar_lea.sflag [#allocation3], 1
    %1157 = vsyncpa %s1156, 1

// kernel: yuv_ms_ssim_loss.9
$region0: #{yuv_ms_ssim_loss.9}
  #allocation0 [shape = 'u32[]', space=smem, size = 0x4, offset = 0x4, fixed_abs, tag = 'smem constant byte address 0x4 - core index']
  #allocation1 [shape = 'u32[72,128]{1,0:T(1,128)}', space=vmem, size = 0x9000, scoped, tag = 'internal scratch']
  %s0 = inlined_call_operand.vmem [shape: f32[6,8,128], index: 0, kind: input, shape index: {}]
  %s1 = inlined_call_operand.vmem [shape: f32[6,8,128], index: 1, kind: input, shape index: {}]
  %s2 = inlined_call_operand.vmem [shape: f32[8,8], index: 2, kind: input, shape index: {}]
  %s3 = inlined_call_operand.vmem [shape: f32[128,128], index: 3, kind: input, shape index: {}]
  %s4 = inlined_call_operand.vmem [shape: f32[8,128], index: 4, kind: input, shape index: {}]
  %s5 = inlined_call_operand.vmem [shape: f32[8,128], index: 5, kind: input, shape index: {}]
  %s6 = inlined_call_operand.vmem [shape: f32[6,1,1], index: 6, kind: output, shape index: {0}]
  %s7 = inlined_call_operand.hbm [shape: f32[6,1,1], index: 7, kind: output, shape index: {1}]
  %8 = xla_tuple %s6, %s7
  %s9 = sld [smem:[#allocation0]]
  $region65: #{yuv_ms_ssim_loss.9} parent=0
    _
  %s11 = ssub.s32 1, %s9
  %s12 = scalar_select 0, %s11, %s9
  $region1: #{yuv_ms_ssim_loss.9} parent=0
    #allocation2 [shape = 'u8[1024]{0}', space=vmem, size = 0x400, scoped, tag = 'output window, operand 1']
    #allocation3 [shape = 's32[2]{0}', space=sflag, size = 0x8, scoped, tag = 'scoped memory for yuv_ms_ssim_loss.9']
    %13 = vsyncpa [#allocation3], 0
    %s14 = scalar_lea.sflag [#allocation3], 1
    %15 = vsyncpa %s14, 0
    loop: start=0, step=1, limit=8
    $region2: #{yuv_ms_ssim_loss.9} parent=1 // loop_pre_header
      _
    $region3: #{yuv_ms_ssim_loss.9} parent=1 // loop_header
      %s17 = sphi 0, %s21
      %p18 = scmp.ge.s32.totalorder %s17, 8
      %s27 = sphi 0, %s29
      %s30 = sphi 0, %s27
      %s31 = sphi 0, %s30
      %s47 = sphi 0, %s31
      %s53 = sphi 0, %s55
      %s56 = sphi 0, %s53
      %s57 = sphi 0, %s56
      %s73 = sphi 0, %s57
      %s77 = sphi 0, %s77
      %s79 = sphi 0, %s77
      %s80 = sphi 0, %s79
      %s94 = sphi 0, %s80
      %s98 = sphi 0, %s98
      %s100 = sphi 0, %s98
      %s101 = sphi 0, %s100
      %s115 = sphi 0, %s101
      %s119 = sphi 0, %s119
      %s121 = sphi 0, %s119
      %s122 = sphi 0, %s121
      %s136 = sphi 0, %s122
      %s140 = sphi 0, %s140
      %s142 = sphi 0, %s140
      %s143 = sphi 0, %s142
      %s157 = sphi 0, %s143
      %s163 = sphi 0, %s165
      %s166 = sphi 0, %s163
      %s167 = sphi 0, %s166
      %s183 = sphi 0, %s167
      %s189 = sphi 0, %s191
      %s192 = sphi 0, %s189
      %s193 = sphi 0, %s192
      %s209 = sphi 0, %s193
    $region4: #{yuv_ms_ssim_loss.9} parent=1 // loop_header_branch
      %20 = sbr.rel (%p18) target = $region8
    $region5: #{yuv_ms_ssim_loss.9} parent=1 // loop_body
      %s22 = ssub.s32 %s17, 1
      %s23 = ssub.s32 %s17, 2
      %s24 = sadd.s32 %s17, 1
      %s25 = ssub.s32 %s17, %s24
      %p26 = scmp.eq.s32.totalorder %s25, 0
      %s28 = sadd.s32 %s27, 1
      %s29 = scalar_select %p26, %s27, %s28
      %p32 = pneg %p26
      %p33 = scmp.eq.s32.totalorder %s17, 5
      %p34 = por %p32, %p33
      %p35 = scmp.ne.s32.totalorder %s27, %s30
      %p36 = scmp.eq.s32.totalorder %s17, 0
      %p37 = por %p35, %p36
      %p38 = scmp.ne.s32.totalorder %s27, %s30
      %p39 = scmp.eq.s32.totalorder %s22, 5
      %p40 = por %p38, %p39
      %p41 = scmp.ne.s32.totalorder %s30, %s31
      %p42 = scmp.eq.s32.totalorder %s22, 0
      %p43 = por %p41, %p42
      %p44 = scmp.ne.s32.totalorder %s30, %s31
      %p45 = scmp.eq.s32.totalorder %s23, 5
      %p46 = por %p44, %p45
      %p48 = scmp.ne.s32.totalorder %s31, %s47
      %p49 = scmp.eq.s32.totalorder %s23, 0
      %p50 = por %p48, %p49
      %s51 = ssub.s32 %s17, %s24
      %p52 = scmp.eq.s32.totalorder %s51, 0
      %s54 = sadd.s32 %s53, 1
      %s55 = scalar_select %p52, %s53, %s54
      %p58 = pneg %p52
      %p59 = scmp.eq.s32.totalorder %s17, 5
      %p60 = por %p58, %p59
      %p61 = scmp.ne.s32.totalorder %s53, %s56
      %p62 = scmp.eq.s32.totalorder %s17, 0
      %p63 = por %p61, %p62
      %p64 = scmp.ne.s32.totalorder %s53, %s56
      %p65 = scmp.eq.s32.totalorder %s22, 5
      %p66 = por %p64, %p65
      %p67 = scmp.ne.s32.totalorder %s56, %s57
      %p68 = scmp.eq.s32.totalorder %s22, 0
      %p69 = por %p67, %p68
      %p70 = scmp.ne.s32.totalorder %s56, %s57
      %p71 = scmp.eq.s32.totalorder %s23, 5
      %p72 = por %p70, %p71
      %p74 = scmp.ne.s32.totalorder %s57, %s73
      %p75 = scmp.eq.s32.totalorder %s23, 0
      %p76 = por %p74, %p75
      %s78 = sadd.s32 %s77, 1
      %p81 = scmp.eq.s32.totalorder %s17, 5
      %p82 = scmp.ne.s32.totalorder %s77, %s79
      %p83 = scmp.eq.s32.totalorder %s17, 0
      %p84 = por %p82, %p83
      %p85 = scmp.ne.s32.totalorder %s77, %s79
      %p86 = scmp.eq.s32.totalorder %s22, 5
      %p87 = por %p85, %p86
      %p88 = scmp.ne.s32.totalorder %s79, %s80
      %p89 = scmp.eq.s32.totalorder %s22, 0
      %p90 = por %p88, %p89
      %p91 = scmp.ne.s32.totalorder %s79, %s80
      %p92 = scmp.eq.s32.totalorder %s23, 5
      %p93 = por %p91, %p92
      %p95 = scmp.ne.s32.totalorder %s80, %s94
      %p96 = scmp.eq.s32.totalorder %s23, 0
      %p97 = por %p95, %p96
      %s99 = sadd.s32 %s98, 1
      %p102 = scmp.eq.s32.totalorder %s17, 5
      %p103 = scmp.ne.s32.totalorder %s98, %s100
      %p104 = scmp.eq.s32.totalorder %s17, 0
      %p105 = por %p103, %p104
      %p106 = scmp.ne.s32.totalorder %s98, %s100
      %p107 = scmp.eq.s32.totalorder %s22, 5
      %p108 = por %p106, %p107
      %p109 = scmp.ne.s32.totalorder %s100, %s101
      %p110 = scmp.eq.s32.totalorder %s22, 0
      %p111 = por %p109, %p110
      %p112 = scmp.ne.s32.totalorder %s100, %s101
      %p113 = scmp.eq.s32.totalorder %s23, 5
      %p114 = por %p112, %p113
      %p116 = scmp.ne.s32.totalorder %s101, %s115
      %p117 = scmp.eq.s32.totalorder %s23, 0
      %p118 = por %p116, %p117
      %s120 = sadd.s32 %s119, 1
      %p123 = scmp.eq.s32.totalorder %s17, 5
      %p124 = scmp.ne.s32.totalorder %s119, %s121
      %p125 = scmp.eq.s32.totalorder %s17, 0
      %p126 = por %p124, %p125
      %p127 = scmp.ne.s32.totalorder %s119, %s121
      %p128 = scmp.eq.s32.totalorder %s22, 5
      %p129 = por %p127, %p128
      %p130 = scmp.ne.s32.totalorder %s121, %s122
      %p131 = scmp.eq.s32.totalorder %s22, 0
      %p132 = por %p130, %p131
      %p133 = scmp.ne.s32.totalorder %s121, %s122
      %p134 = scmp.eq.s32.totalorder %s23, 5
      %p135 = por %p133, %p134
      %p137 = scmp.ne.s32.totalorder %s122, %s136
      %p138 = scmp.eq.s32.totalorder %s23, 0
      %p139 = por %p137, %p138
      %s141 = sadd.s32 %s140, 1
      %p144 = scmp.eq.s32.totalorder %s17, 5
      %p145 = scmp.ne.s32.totalorder %s140, %s142
      %p146 = scmp.eq.s32.totalorder %s17, 0
      %p147 = por %p145, %p146
      %p148 = scmp.ne.s32.totalorder %s140, %s142
      %p149 = scmp.eq.s32.totalorder %s22, 5
      %p150 = por %p148, %p149
      %p151 = scmp.ne.s32.totalorder %s142, %s143
      %p152 = scmp.eq.s32.totalorder %s22, 0
      %p153 = por %p151, %p152
      %p154 = scmp.ne.s32.totalorder %s142, %s143
      %p155 = scmp.eq.s32.totalorder %s23, 5
      %p156 = por %p154, %p155
      %p158 = scmp.ne.s32.totalorder %s143, %s157
      %p159 = scmp.eq.s32.totalorder %s23, 0
      %p160 = por %p158, %p159
      %s161 = ssub.s32 %s17, %s24
      %p162 = scmp.eq.s32.totalorder %s161, 0
      %s164 = sadd.s32 %s163, 1
      %s165 = scalar_select %p162, %s163, %s164
      %p168 = pneg %p162
      %p169 = scmp.eq.s32.totalorder %s17, 5
      %p170 = por %p168, %p169
      %p171 = scmp.ne.s32.totalorder %s163, %s166
      %p172 = scmp.eq.s32.totalorder %s17, 0
      %p173 = por %p171, %p172
      %p174 = scmp.ne.s32.totalorder %s163, %s166
      %p175 = scmp.eq.s32.totalorder %s22, 5
      %p176 = por %p174, %p175
      %p177 = scmp.ne.s32.totalorder %s166, %s167
      %p178 = scmp.eq.s32.totalorder %s22, 0
      %p179 = por %p177, %p178
      %p180 = scmp.ne.s32.totalorder %s166, %s167
      %p181 = scmp.eq.s32.totalorder %s23, 5
      %p182 = por %p180, %p181
      %p184 = scmp.ne.s32.totalorder %s167, %s183
      %p185 = scmp.eq.s32.totalorder %s23, 0
      %p186 = por %p184, %p185
      %s187 = ssub.s32 %s17, %s24
      %p188 = scmp.eq.s32.totalorder %s187, 0
      %s190 = sadd.s32 %s189, 1
      %s191 = scalar_select %p188, %s189, %s190
      %p194 = pneg %p188
      %p195 = scmp.eq.s32.totalorder %s17, 5
      %p196 = por %p194, %p195
      %p197 = scmp.ne.s32.totalorder %s189, %s192
      %p198 = scmp.eq.s32.totalorder %s17, 0
      %p199 = por %p197, %p198
      %p200 = scmp.ne.s32.totalorder %s189, %s192
      %p201 = scmp.eq.s32.totalorder %s22, 5
      %p202 = por %p200, %p201
      %p203 = scmp.ne.s32.totalorder %s192, %s193
      %p204 = scmp.eq.s32.totalorder %s22, 0
      %p205 = por %p203, %p204
      %p206 = scmp.ne.s32.totalorder %s192, %s193
      %p207 = scmp.eq.s32.totalorder %s23, 5
      %p208 = por %p206, %p207
      %p210 = scmp.ne.s32.totalorder %s193, %s209
      %p211 = scmp.eq.s32.totalorder %s23, 0
      %p212 = por %p210, %p211
      %p213 = scmp.le.s32.totalorder 1, %s17
      %p214 = scmp.lt.s32.totalorder %s17, 7
      %p215 = pnand %p213, %p214
      %p216 = pneg %p215
      // Predicated region
      $region9: #{yuv_ms_ssim_loss.9} parent=5 // pred_check
        _
      $region10: #{yuv_ms_ssim_loss.9} parent=5 // pred_check_branch
        %218 = sbr.rel (%p215) target = $region12
      $region11: #{yuv_ms_ssim_loss.9} parent=5 // pred_region
        %s219 = ssub.s32 %s17, 1
        // Predicated region
        $region13: #{yuv_ms_ssim_loss.9} parent=11 // pred_check
          %p220 = pneg %p90
        $region14: #{yuv_ms_ssim_loss.9} parent=11 // pred_check_branch
          %222 = sbr.rel (%p220) target = $region16
        $region15: #{yuv_ms_ssim_loss.9} parent=11 // pred_region
          _
        $region16: #{yuv_ms_ssim_loss.9} parent=11 // pred_fallthru
          _
        // Predicated region
        $region17: #{yuv_ms_ssim_loss.9} parent=11 // pred_check
          %p223 = pneg %p111
        $region18: #{yuv_ms_ssim_loss.9} parent=11 // pred_check_branch
          %225 = sbr.rel (%p223) target = $region20
        $region19: #{yuv_ms_ssim_loss.9} parent=11 // pred_region
          _
        $region20: #{yuv_ms_ssim_loss.9} parent=11 // pred_fallthru
          _
        // Predicated region
        $region21: #{yuv_ms_ssim_loss.9} parent=11 // pred_check
          %p226 = pneg %p132
        $region22: #{yuv_ms_ssim_loss.9} parent=11 // pred_check_branch
          %228 = sbr.rel (%p226) target = $region24
        $region23: #{yuv_ms_ssim_loss.9} parent=11 // pred_region
          _
        $region24: #{yuv_ms_ssim_loss.9} parent=11 // pred_fallthru
          _
        // Predicated region
        $region25: #{yuv_ms_ssim_loss.9} parent=11 // pred_check
          %p229 = pneg %p153
        $region26: #{yuv_ms_ssim_loss.9} parent=11 // pred_check_branch
          %231 = sbr.rel (%p229) target = $region28
        $region27: #{yuv_ms_ssim_loss.9} parent=11 // pred_region
          _
        $region28: #{yuv_ms_ssim_loss.9} parent=11 // pred_fallthru
          _
      $region12: #{yuv_ms_ssim_loss.9} parent=5 // pred_fallthru
        _
      %p232 = scmp.lt.s32.totalorder %s17, 6
      // Predicated region
      $region29: #{yuv_ms_ssim_loss.9} parent=5 // pred_check
        %p233 = pneg %p232
      $region30: #{yuv_ms_ssim_loss.9} parent=5 // pred_check_branch
        %235 = sbr.rel (%p233) target = $region32
      $region31: #{yuv_ms_ssim_loss.9} parent=5 // pred_region
        // Predicated region
        $region33: #{yuv_ms_ssim_loss.9} parent=31 // pred_check
          %p236 = pneg %p37
        $region34: #{yuv_ms_ssim_loss.9} parent=31 // pred_check_branch
          %238 = sbr.rel (%p236) target = $region36
        $region35: #{yuv_ms_ssim_loss.9} parent=31 // pred_region
          %p239 = scmp.lt.s32.totalorder %s17, 5
          %s240 = scalar_select %p239, %s17, 5
          %s241 = smul.addr %s240, 8
          %s242 = scalar_lea.vmem %s0, %s241
        $region36: #{yuv_ms_ssim_loss.9} parent=31 // pred_fallthru
          _
        // Predicated region
        $region37: #{yuv_ms_ssim_loss.9} parent=31 // pred_check
          %p243 = pneg %p63
        $region38: #{yuv_ms_ssim_loss.9} parent=31 // pred_check_branch
          %245 = sbr.rel (%p243) target = $region40
        $region39: #{yuv_ms_ssim_loss.9} parent=31 // pred_region
          %p246 = scmp.lt.s32.totalorder %s17, 5
          %s247 = scalar_select %p246, %s17, 5
          %s248 = smul.addr %s247, 8
          %s249 = scalar_lea.vmem %s1, %s248
        $region40: #{yuv_ms_ssim_loss.9} parent=31 // pred_fallthru
          _
      $region32: #{yuv_ms_ssim_loss.9} parent=5 // pred_fallthru
        _
      %p250 = scmp.le.s32.totalorder 1, %s17
      %p251 = scmp.lt.s32.totalorder %s17, 7
      %p252 = pnand %p250, %p251
      %p253 = pneg %p252
      // Predicated region
      $region41: #{yuv_ms_ssim_loss.9} parent=5 // pred_check
        _
      $region42: #{yuv_ms_ssim_loss.9} parent=5 // pred_check_branch
        %255 = sbr.rel (%p252) target = $region44
      $region43: #{yuv_ms_ssim_loss.9} parent=5 // pred_region
        %s256 = ssub.s32 %s17, 1
        %p257 = scmp.lt.s32.totalorder %s22, 5
        %s258 = scalar_select %p257, %s22, 5
        %s259 = smul.addr %s258, 8
        %s260 = scalar_lea.vmem %s0, %s259
        %p261 = pneg %p43
        %p262 = pneg %p40
        %p263 = scmp.lt.s32.totalorder %s22, 5
        %s264 = scalar_select %p263, %s22, 5
        %s265 = smul.addr %s264, 8
        %s266 = scalar_lea.vmem %s1, %s265
        %p267 = pneg %p69
        %p268 = pneg %p66
        %p269 = pneg %p90
        %p270 = pneg %p87
        %p271 = pneg %p111
        %p272 = pneg %p108
        %p273 = pneg %p132
        %p274 = pneg %p129
        %p275 = pneg %p153
        %p276 = pneg %p150
        %p277 = pneg %p179
        %p278 = pneg %p176
        %p279 = scmp.lt.s32.totalorder %s22, 5
        %s280 = scalar_select %p279, %s22, 5
        %s281 = scalar_lea.vmem %s6, %s280
        %p282 = pneg %p205
        %p283 = pneg %p202
        %s284 = sand.u32 %s192, 1
        %s285 = scalar_lea.sflag [#allocation3], %s284
        %s286 = sand.u32 %s192, 1
        %s287 = scalar_lea.vmem [#allocation2], %s286
        %p288 = scmp.lt.s32.totalorder %s22, 5
        %s289 = scalar_select %p288, %s22, 5
        %s290 = smul.addr %s289, 8
        %s291 = scalar_lea.vmem %s0, %s290
        %p292 = scmp.lt.s32.totalorder %s22, 5
        %s293 = scalar_select %p292, %s22, 5
        %s294 = smul.addr %s293, 8
        %s295 = scalar_lea.vmem %s1, %s294
        %p296 = scmp.lt.s32.totalorder %s22, 5
        %s297 = scalar_select %p296, %s22, 5
        %s298 = scalar_lea.vmem %s6, %s297
        %v299 = vld [vmem:[%s291] sm:$0xff]
        %v300 = vld [vmem:[%s295] sm:$0xff]
        %v301 = vld [vmem:[%s2] sm:$0xff]
        %v302 = vld [vmem:[%s3] sm:$0xff]
        %v303 = vld [vmem:[%s3 + $0x8] sm:$0xff]
        %v304 = vld [vmem:[%s3 + $0x10] sm:$0xff]
        %v305 = vld [vmem:[%s3 + $0x18] sm:$0xff]
        %v306 = vld [vmem:[%s3 + $0x20] sm:$0xff]
        %v307 = vld [vmem:[%s3 + $0x28] sm:$0xff]
        %v308 = vld [vmem:[%s3 + $0x30] sm:$0xff]
        %v309 = vld [vmem:[%s3 + $0x38] sm:$0xff]
        %v310 = vld [vmem:[%s3 + $0x40] sm:$0xff]
        %v311 = vld [vmem:[%s3 + $0x48] sm:$0xff]
        %v312 = vld [vmem:[%s3 + $0x50] sm:$0xff]
        %v313 = vld [vmem:[%s3 + $0x58] sm:$0xff]
        %v314 = vld [vmem:[%s3 + $0x60] sm:$0xff]
        %v315 = vld [vmem:[%s3 + $0x68] sm:$0xff]
        %v316 = vld [vmem:[%s3 + $0x70] sm:$0xff]
        %v317 = vld [vmem:[%s3 + $0x78] sm:$0xff]
        %v318 = vld [vmem:[%s4] sm:$0xff]
        %v319 = vld [vmem:[%s5] sm:$0xff]
        %p320 = scmp.lt.s32.totalorder %s22, 0
        %s321 = ssub.s32 0, %s22
        %s322 = scalar_select %p320, %s321, %s22
        %s323 = sdiv.u32.pop %s322, 3
        %s324 = srem.u32.pop %s322, 3
        %s325 = ssub.s32 0, %s324
        %s326 = scalar_select %p320, %s325, %s324
        %p327 = scmp.ne.s32.totalorder %s326, 0
        %p328 = scmp.lt.s32.totalorder %s326, 0
        %p329 = pnand %p328, %p327
        %p330 = pneg %p329
        %s331 = sadd.s32 %s326, 3
        %s332 = scalar_select %p330, %s331, %s326
        %p333 = scmp.eq.s32.totalorder %s332, 0
        %s334 = scalar_select %p333, 0.0, 128.0
        %v335 = vmul.f32 %v299, %v299
        %v336 = vmul.f32 %v300, %v300
        %v337 = vmul.f32 %v299, %v300
        %338 = vmatpush.msra.mxu0 %v317
        %339 = vmatpush.msra.mxu0 %v316
        %340 = vmatpush.msra.mxu0 %v315
        %341 = vmatpush.msra.mxu0 %v314
        %342 = vmatpush.msra.mxu0 %v313
        %343 = vmatpush.msra.mxu0 %v312
        %344 = vmatpush.msra.mxu0 %v311
        %345 = vmatpush.msra.mxu0 %v310
        %346 = vmatpush.msra.mxu0 %v309
        %347 = vmatpush.msra.mxu0 %v308
        %348 = vmatpush.msra.mxu0 %v307
        %349 = vmatpush.msra.mxu0 %v306
        %350 = vmatpush.msra.mxu0 %v305
        %351 = vmatpush.msra.mxu0 %v304
        %352 = vmatpush.msra.mxu0 %v303
        %353 = vmatpush.msra.mxu0 %v302
        %354 = vmatmul.f32.gmra.mxu0 %v299
        %v355 = vpop.f32.mrf.mxu0
        %v356 = vadd.f32 0.0, %v355
        %357 = vmatmul.f32.gmra.mxu0 %v300
        %v358 = vpop.f32.mrf.mxu0
        %v359 = vadd.f32 0.0, %v358
        %360 = vmatmul.f32.gmra.mxu0 %v335
        %v361 = vpop.f32.mrf.mxu0
        %v362 = vadd.f32 0.0, %v361
        %363 = vmatmul.f32.gmra.mxu0 %v336
        %v364 = vpop.f32.mrf.mxu0
        %v365 = vadd.f32 0.0, %v364
        %366 = vmatmul.f32.gmra.mxu0 %v337
        %v367 = vpop.f32.mrf.mxu0
        %v368 = vadd.f32 0.0, %v367
        %369 = vdwg.mxu0
        %vm370 = vcmask 64512
        %v372 = vsel %vm370, %v301, 0
        %374 = vmatpush.msra.mxu0 0.0
        %375 = vmatpush.msra.mxu0 0.0
        %376 = vmatpush.msra.mxu0 0.0
        %377 = vmatpush.msra.mxu0 0.0
        %378 = vmatpush.msra.mxu0 0.0
        %379 = vmatpush.msra.mxu0 0.0
        %380 = vmatpush.msra.mxu0 0.0
        %381 = vmatpush.msra.mxu0 0.0
        %382 = vmatpush.msra.mxu0 0.0
        %383 = vmatpush.msra.mxu0 0.0
        %384 = vmatpush.msra.mxu0 0.0
        %385 = vmatpush.msra.mxu0 0.0
        %386 = vmatpush.msra.mxu0 0.0
        %387 = vmatpush.msra.mxu0 0.0
        %388 = vmatpush.msra.mxu0 0.0
        %389 = vmatpush.msra.mxu0 %v356
        %390 = vmatmul.f32.gmra.mxu0 %v372
        %v391 = vpop.f32.mrf.mxu0
        %v392 = vadd.f32 0.0, %v391
        %393 = vdwg.mxu0
        %394 = vmatpush.msra.mxu0 0.0
        %395 = vmatpush.msra.mxu0 0.0
        %396 = vmatpush.msra.mxu0 0.0
        %397 = vmatpush.msra.mxu0 0.0
        %398 = vmatpush.msra.mxu0 0.0
        %399 = vmatpush.msra.mxu0 0.0
        %400 = vmatpush.msra.mxu0 0.0
        %401 = vmatpush.msra.mxu0 0.0
        %402 = vmatpush.msra.mxu0 0.0
        %403 = vmatpush.msra.mxu0 0.0
        %404 = vmatpush.msra.mxu0 0.0
        %405 = vmatpush.msra.mxu0 0.0
        %406 = vmatpush.msra.mxu0 0.0
        %407 = vmatpush.msra.mxu0 0.0
        %408 = vmatpush.msra.mxu0 0.0
        %409 = vmatpush.msra.mxu0 %v359
        %410 = vmatmul.f32.gmra.mxu0 %v372
        %v411 = vpop.f32.mrf.mxu0
        %v412 = vadd.f32 0.0, %v411
        %413 = vdwg.mxu0
        %414 = vmatpush.msra.mxu0 0.0
        %415 = vmatpush.msra.mxu0 0.0
        %416 = vmatpush.msra.mxu0 0.0
        %417 = vmatpush.msra.mxu0 0.0
        %418 = vmatpush.msra.mxu0 0.0
        %419 = vmatpush.msra.mxu0 0.0
        %420 = vmatpush.msra.mxu0 0.0
        %421 = vmatpush.msra.mxu0 0.0
        %422 = vmatpush.msra.mxu0 0.0
        %423 = vmatpush.msra.mxu0 0.0
        %424 = vmatpush.msra.mxu0 0.0
        %425 = vmatpush.msra.mxu0 0.0
        %426 = vmatpush.msra.mxu0 0.0
        %427 = vmatpush.msra.mxu0 0.0
        %428 = vmatpush.msra.mxu0 0.0
        %429 = vmatpush.msra.mxu0 %v362
        %430 = vmatmul.f32.gmra.mxu0 %v372
        %v431 = vpop.f32.mrf.mxu0
        %v432 = vadd.f32 0.0, %v431
        %433 = vdwg.mxu0
        %434 = vmatpush.msra.mxu0 0.0
        %435 = vmatpush.msra.mxu0 0.0
        %436 = vmatpush.msra.mxu0 0.0
        %437 = vmatpush.msra.mxu0 0.0
        %438 = vmatpush.msra.mxu0 0.0
        %439 = vmatpush.msra.mxu0 0.0
        %440 = vmatpush.msra.mxu0 0.0
        %441 = vmatpush.msra.mxu0 0.0
        %442 = vmatpush.msra.mxu0 0.0
        %443 = vmatpush.msra.mxu0 0.0
        %444 = vmatpush.msra.mxu0 0.0
        %445 = vmatpush.msra.mxu0 0.0
        %446 = vmatpush.msra.mxu0 0.0
        %447 = vmatpush.msra.mxu0 0.0
        %448 = vmatpush.msra.mxu0 0.0
        %449 = vmatpush.msra.mxu0 %v365
        %450 = vmatmul.f32.gmra.mxu0 %v372
        %v451 = vpop.f32.mrf.mxu0
        %v452 = vadd.f32 0.0, %v451
        %453 = vdwg.mxu0
        %454 = vmatpush.msra.mxu0 0.0
        %455 = vmatpush.msra.mxu0 0.0
        %456 = vmatpush.msra.mxu0 0.0
        %457 = vmatpush.msra.mxu0 0.0
        %458 = vmatpush.msra.mxu0 0.0
        %459 = vmatpush.msra.mxu0 0.0
        %460 = vmatpush.msra.mxu0 0.0
        %461 = vmatpush.msra.mxu0 0.0
        %462 = vmatpush.msra.mxu0 0.0
        %463 = vmatpush.msra.mxu0 0.0
        %464 = vmatpush.msra.mxu0 0.0
        %465 = vmatpush.msra.mxu0 0.0
        %466 = vmatpush.msra.mxu0 0.0
        %467 = vmatpush.msra.mxu0 0.0
        %468 = vmatpush.msra.mxu0 0.0
        %469 = vmatpush.msra.mxu0 %v368
        %470 = vmatmul.f32.gmra.mxu0 %v372
        %v471 = vpop.f32.mrf.mxu0
        %v472 = vadd.f32 0.0, %v471
        %473 = vdwg.mxu0
        %v474 = vsub.f32 1.0, %v318
        %s475 = smul.f32 %s334, %s334
        %v476 = vstv %s475
        %v477 = vmul.f32 %v476, %v318
        %v478 = vmul.f32 %v477, %v474
        %v479 = vstv %s334
        %v480 = vmul.f32 %v479, %v318
        %v481 = vadd.f32 %v392, %v480
        %v482 = vadd.f32 %v412, %v480
        %v483 = vmul.f32 %v481, %v481
        %v484 = vmul.f32 %v482, %v482
        %v485 = vmul.f32 %v481, %v482
        %v486 = vmul.f32 %v392, %v392
        %v487 = vsub.f32 %v432, %v486
        %s488 = smul.f32 %s334, 2.0
        %v489 = vstv %s488
        %v490 = vmul.f32 %v489, %v392
        %v491 = vmul.f32 %v490, %v474
        %v492 = vadd.f32 %v487, %v491
        %v493 = vadd.f32 %v492, %v478
        %v494 = vmul.f32 %v412, %v412
        %v495 = vsub.f32 %v452, %v494
        %v496 = vmul.f32 %v489, %v412
        %v497 = vmul.f32 %v496, %v474
        %v498 = vadd.f32 %v495, %v497
        %v499 = vadd.f32 %v498, %v478
        %v500 = vmul.f32 %v392, %v412
        %v501 = vsub.f32 %v472, %v500
        %v502 = vadd.f32 %v392, %v412
        %v503 = vmul.f32 %v479, %v502
        %v504 = vmul.f32 %v503, %v474
        %v505 = vadd.f32 %v501, %v504
        %v506 = vadd.f32 %v505, %v478
        %v507 = vmul.f32 %v506, 2.0
        %v508 = vadd.f32 %v507, 0.0009
        %v509 = vadd.f32 %v493, %v499
        %v510 = vadd.f32 %v509, 0.0009
        %v511 = vrcp.pop %v510
        %v512 = vmul.f32 %v510, %v511
        %v513 = vsub.f32 2.0, %v512
        %v514 = vmul.f32 %v511, %v513
        %v515 = vmul.f32 %v508, %v514
        %v516 = vmul.f32 %v485, 2.0
        %v517 = vadd.f32 %v516, 0.0001
        %v518 = vadd.f32 %v483, %v484
        %v519 = vadd.f32 %v518, 0.0001
        %v520 = vrcp.pop %v519
        %v521 = vmul.f32 %v519, %v520
        %v522 = vsub.f32 2.0, %v521
        %v523 = vmul.f32 %v520, %v522
        %v524 = vmul.f32 %v517, %v523
        %v525 = vmul.f32 %v524, %v515
        %v526 = vmul.f32 %v525, %v319
        %527 = vadd.xlane.f32.xlu0 %v526
        %v528 = vpop.xlane.xlu0 %527
        %v529 = vrot.slane %v528, 4
        %v530 = vadd.f32 %v528, %v529
        %v531 = vrot.slane %v530, 2
        %v532 = vadd.f32 %v530, %v531
        %v533 = vrot.slane %v532, 1
        %v534 = vadd.f32 %v532, %v533
        %s535 = vtos %v534
        %v536 = vstv %s535
        %vm537 = vcmask 0
        %538 = vst.msk [vmem:[%s298] sm:$0x1] %vm537, %v536
        %v539 = vmul.f32 %v515, %v319
        %540 = vadd.xlane.f32.xlu0 %v539
        %v541 = vpop.xlane.xlu0 %540
        %v542 = vrot.slane %v541, 4
        %v543 = vadd.f32 %v541, %v542
        %v544 = vrot.slane %v543, 2
        %v545 = vadd.f32 %v543, %v544
        %v546 = vrot.slane %v545, 1
        %v547 = vadd.f32 %v545, %v546
        %s548 = vtos %v547
        %v549 = vstv %s548
        %550 = vst.msk [vmem:[%s287] sm:$0x1] %vm537, %v549
        %p551 = scmp.lt.s32.totalorder %s22, 5
        %s552 = scalar_select %p551, %s22, 5
        %s553 = scalar_lea.vmem %s6, %s552
        %s554 = sand.u32 %s192, 1
        %s555 = scalar_lea.sflag [#allocation3], %s554
        %s556 = sand.u32 %s192, 1
        %s557 = scalar_lea.vmem [#allocation2], %s556
        // Predicated region
        $region45: #{yuv_ms_ssim_loss.9} parent=43 // pred_check
          %p558 = pneg %p176
        $region46: #{yuv_ms_ssim_loss.9} parent=43 // pred_check_branch
          %560 = sbr.rel (%p558) target = $region48
        $region47: #{yuv_ms_ssim_loss.9} parent=43 // pred_region
          _
        $region48: #{yuv_ms_ssim_loss.9} parent=43 // pred_fallthru
          _
        // Predicated region
        $region49: #{yuv_ms_ssim_loss.9} parent=43 // pred_check
          %p561 = pneg %p202
        $region50: #{yuv_ms_ssim_loss.9} parent=43 // pred_check_branch
          %563 = sbr.rel (%p561) target = $region52
        $region51: #{yuv_ms_ssim_loss.9} parent=43 // pred_region
          %565 = vsyncadd %s555, 0
          %s566 = scalar_lea.hbm %s7, %s22
          %s568 = sshll.u32 %s557, 4
          %s569 = int_to_ptr.vmem [resolvable:$true] %s568
          %s570 = sshll.u32 %s566, 4
          %s571 = int_to_ptr.hbm [resolvable:$true] %s570
          %573 = dma.vmem_to_hbm [thread:$0]  %s569, 16, %s571, %s555
        $region52: #{yuv_ms_ssim_loss.9} parent=43 // pred_fallthru
          _
      $region44: #{yuv_ms_ssim_loss.9} parent=5 // pred_fallthru
        _
      %p574 = scmp.le.s32.totalorder 2, %s17
      // Predicated region
      $region53: #{yuv_ms_ssim_loss.9} parent=5 // pred_check
        %p575 = pneg %p574
      $region54: #{yuv_ms_ssim_loss.9} parent=5 // pred_check_branch
        %577 = sbr.rel (%p575) target = $region56
      $region55: #{yuv_ms_ssim_loss.9} parent=5 // pred_region
        %s578 = ssub.s32 %s17, 2
        // Predicated region
        $region57: #{yuv_ms_ssim_loss.9} parent=55 // pred_check
          %p579 = pneg %p182
        $region58: #{yuv_ms_ssim_loss.9} parent=55 // pred_check_branch
          %581 = sbr.rel (%p579) target = $region60
        $region59: #{yuv_ms_ssim_loss.9} parent=55 // pred_region
          %p582 = scmp.lt.s32.totalorder %s23, 5
          %s583 = scalar_select %p582, %s23, 5
          %s584 = scalar_lea.vmem %s6, %s583
        $region60: #{yuv_ms_ssim_loss.9} parent=55 // pred_fallthru
          _
        // Predicated region
        $region61: #{yuv_ms_ssim_loss.9} parent=55 // pred_check
          %p585 = pneg %p208
        $region62: #{yuv_ms_ssim_loss.9} parent=55 // pred_check_branch
          %587 = sbr.rel (%p585) target = $region64
        $region63: #{yuv_ms_ssim_loss.9} parent=55 // pred_region
          %s588 = sand.u32 %s193, 1
          %s589 = scalar_lea.sflag [#allocation3], %s588
          %s590 = sand.u32 %s193, 1
          %s591 = scalar_lea.vmem [#allocation2], %s590
          %593 = dma.done %s589, 16
        $region64: #{yuv_ms_ssim_loss.9} parent=55 // pred_fallthru
          _
      $region56: #{yuv_ms_ssim_loss.9} parent=5 // pred_fallthru
        _
    $region6: #{yuv_ms_ssim_loss.9} parent=1 // loop_footer
      %s21 = sadd.s32 1, %s17
    $region7: #{yuv_ms_ssim_loss.9} parent=1 // loop_footer_branch
      %16 = sbr.rel target = $region3
    $region8: #{yuv_ms_ssim_loss.9} parent=1 // loop_exit
      _
    %594 = vsyncpa [#allocation3], 1
    %s595 = scalar_lea.sflag [#allocation3], 1
    %596 = vsyncpa %s595, 1

</llo_original>
